<compile_context>
chip_gen: v6e
topology: v6e:2x2x1
jax: 0.10.0
libtpu: 0.0.40
codegen_flags: <defaults>
</compile_context>

<pallas_src>
import jax
import jax.numpy as jnp
from jax.experimental import pallas as pl
from jax.experimental.pallas import tpu as pltpu

MNIST_IMAGE_SIZE = 28
LATENT_DIM = 32                                    # small synthetic latent size
OUT_FEATURES = MNIST_IMAGE_SIZE * MNIST_IMAGE_SIZE  # 784
OUT_PADDED = 896                                    # 7 * 128 -> lane-dense output slab

LAYER_DIMS = [LATENT_DIM, 128, 256, 512, 1024, OUT_FEATURES]
# activation after each linear layer: relu, sigmoid, relu, relu, sigmoid


def _generator_kernel(x_ref,
                      w1_ref, b1_ref,
                      w2_ref, b2_ref,
                      w3_ref, b3_ref,
                      w4_ref, b4_ref,
                      w5_ref, b5_ref,
                      o_ref):
    """Fused 5-layer MLP. Weights are bf16, activations f32, MXU accumulates f32."""

    def linear(h, w_ref, b_ref):
        # bf16 x bf16 on the MXU with f32 accumulation; bias add in f32 on the VPU.
        return jnp.dot(h.astype(jnp.bfloat16), w_ref[...],
                       preferred_element_type=jnp.float32) + b_ref[...]

    h = x_ref[...].astype(jnp.float32)

    h = jnp.maximum(linear(h, w1_ref, b1_ref), 0.0)   # Linear(latent, 128) + ReLU
    h = jax.nn.sigmoid(linear(h, w2_ref, b2_ref))     # Linear(128, 256)   + Sigmoid
    h = jnp.maximum(linear(h, w3_ref, b3_ref), 0.0)   # Linear(256, 512)   + ReLU
    h = jnp.maximum(linear(h, w4_ref, b4_ref), 0.0)   # Linear(512, 1024)  + ReLU
    # Linear(1024, 896-padded) + Sigmoid -> lane-dense store.
    o_ref[...] = jax.nn.sigmoid(linear(h, w5_ref, b5_ref))


def init_params(key):
    """Deterministic f32 'master' params (same shapes as the PyTorch module).

    Weights are stored transposed relative to nn.Linear, i.e. (in, out)."""
    params = []
    for i in range(len(LAYER_DIMS) - 1):
        fan_in, fan_out = LAYER_DIMS[i], LAYER_DIMS[i + 1]
        key, wk, bk = jax.random.split(key, 3)
        bound = 1.0 / float(fan_in) ** 0.5
        w = jax.random.uniform(wk, (fan_in, fan_out), jnp.float32, -bound, bound)
        b = jax.random.uniform(bk, (1, fan_out), jnp.float32, -bound, bound)
        params.append((w, b))
    return params


def pack_params(params):
    """Cast weights to bf16 (halves the HBM weight stream) and pad the final
    layer to OUT_PADDED columns so the kernel's output is lane-dense."""
    packed = []
    last = len(params) - 1
    for i, (w, b) in enumerate(params):
        if i == last:
            pad = OUT_PADDED - w.shape[1]
            w = jnp.pad(w, ((0, 0), (0, pad)))
            b = jnp.pad(b, ((0, 0), (0, pad)))
        packed.append((w.astype(jnp.bfloat16), b.astype(jnp.float32)))
    return packed


@jax.jit
def generator_zero_forward(x, packed_params):
    """x: (1, LATENT_DIM) float32 -> (1, 28, 28) float32."""
    flat_params = []
    for w, b in packed_params:
        flat_params.extend([w, b])

    out_padded = pl.pallas_call(
        _generator_kernel,
        out_shape=jax.ShapeDtypeStruct((1, OUT_PADDED), jnp.float32),
        # No grid: the whole bf16 weight set (~3 MB) lives fully in VMEM.
        in_specs=[pl.BlockSpec(memory_space=pltpu.MemorySpace.VMEM)]
                 * (1 + len(flat_params)),
        out_specs=pl.BlockSpec(memory_space=pltpu.MemorySpace.VMEM),
    )(x, *flat_params)

    # Glue: drop lane padding, reshape to the module's (1, 28, 28) output.
    return out_padded[:, :OUT_FEATURES].reshape(1, MNIST_IMAGE_SIZE, MNIST_IMAGE_SIZE)


def _reference_forward(x, packed_params):
    """Plain-JAX reference using the same bf16 weights / f32 accumulation."""
    acts = ["relu", "sigmoid", "relu", "relu", "sigmoid"]
    h = x.astype(jnp.float32)
    for (w, b), a in zip(packed_params, acts):
        h = jnp.dot(h.astype(jnp.bfloat16), w,
                    preferred_element_type=jnp.float32) + b
        h = jnp.maximum(h, 0.0) if a == "relu" else jax.nn.sigmoid(h)
    return h[:, :OUT_FEATURES].reshape(1, MNIST_IMAGE_SIZE, MNIST_IMAGE_SIZE)


if __name__ == "__main__":
    key = jax.random.PRNGKey(0)
    pkey, xkey = jax.random.split(key)

    params = init_params(pkey)
    packed = pack_params(params)
    x = jax.random.normal(xkey, (1, LATENT_DIM), jnp.float32)

    out = generator_zero_forward(x, packed)
    out = jax.block_until_ready(out)

    assert out.shape == (1, 28, 28), out.shape
    assert out.dtype == jnp.float32, out.dtype

    ref = _reference_forward(x, packed)
    assert jnp.allclose(out, ref, atol=2e-3, rtol=2e-3), "mismatch vs reference"

    print("KERNEL_OK")
</pallas_src>

<mosaic_0001>
module attributes {stable_mosaic.version = 11 : i64} {
  func.func @_generator_kernel(%arg0: memref<1x32xf32, #tpu.memory_space<vmem>>, %arg1: memref<32x128xbf16, #tpu.memory_space<vmem>>, %arg2: memref<1x128xf32, #tpu.memory_space<vmem>>, %arg3: memref<128x256xbf16, #tpu.memory_space<vmem>>, %arg4: memref<1x256xf32, #tpu.memory_space<vmem>>, %arg5: memref<256x512xbf16, #tpu.memory_space<vmem>>, %arg6: memref<1x512xf32, #tpu.memory_space<vmem>>, %arg7: memref<512x1024xbf16, #tpu.memory_space<vmem>>, %arg8: memref<1x1024xf32, #tpu.memory_space<vmem>>, %arg9: memref<1024x896xbf16, #tpu.memory_space<vmem>>, %arg10: memref<1x896xf32, #tpu.memory_space<vmem>>, %arg11: memref<1x896xf32, #tpu.memory_space<vmem>>) attributes {dimension_semantics = [], scalar_prefetch = 0 : i64, scratch_operands = 0 : i64, tpu.core_type = #tpu.core_type<tc>} {
    %c0 = arith.constant 0 : index
    %c0_0 = arith.constant 0 : index
    %0 = vector.load %arg0[%c0, %c0_0] : memref<1x32xf32, #tpu.memory_space<vmem>>, vector<1x32xf32>
    %1 = arith.truncf %0 : vector<1x32xf32> to vector<1x32xbf16>
    %c0_1 = arith.constant 0 : index
    %c0_2 = arith.constant 0 : index
    %2 = vector.load %arg1[%c0_1, %c0_2] : memref<32x128xbf16, #tpu.memory_space<vmem>>, vector<32x128xbf16>
    %cst = arith.constant dense<0.000000e+00> : vector<1x128xf32>
    %3 = tpu.matmul %1, %2, %cst {dimension_numbers = #tpu.dot_dimension_numbers<[1], [0], [0], [1], [0, 0, 1, 1], [], []>} : vector<1x32xbf16>, vector<32x128xbf16>, vector<1x128xf32> -> vector<1x128xf32>
    %c0_3 = arith.constant 0 : index
    %c0_4 = arith.constant 0 : index
    %4 = vector.load %arg2[%c0_3, %c0_4] : memref<1x128xf32, #tpu.memory_space<vmem>>, vector<1x128xf32>
    %5 = arith.addf %3, %4 : vector<1x128xf32>
    %cst_5 = arith.constant 0.000000e+00 : f32
    %6 = vector.broadcast %cst_5 : f32 to vector<1x128xf32>
    %7 = arith.maximumf %5, %6 : vector<1x128xf32>
    %8 = arith.truncf %7 : vector<1x128xf32> to vector<1x128xbf16>
    %c0_6 = arith.constant 0 : index
    %c0_7 = arith.constant 0 : index
    %9 = vector.load %arg3[%c0_6, %c0_7] : memref<128x256xbf16, #tpu.memory_space<vmem>>, vector<128x256xbf16>
    %cst_8 = arith.constant dense<0.000000e+00> : vector<1x256xf32>
    %10 = tpu.matmul %8, %9, %cst_8 {dimension_numbers = #tpu.dot_dimension_numbers<[1], [0], [0], [1], [0, 0, 1, 1], [], []>} : vector<1x128xbf16>, vector<128x256xbf16>, vector<1x256xf32> -> vector<1x256xf32>
    %c0_9 = arith.constant 0 : index
    %c0_10 = arith.constant 0 : index
    %11 = vector.load %arg4[%c0_9, %c0_10] : memref<1x256xf32, #tpu.memory_space<vmem>>, vector<1x256xf32>
    %12 = arith.addf %10, %11 : vector<1x256xf32>
    %13 = arith.negf %12 : vector<1x256xf32>
    %14 = math.exp %13 : vector<1x256xf32>
    %cst_11 = arith.constant 1.000000e+00 : f32
    %15 = vector.broadcast %cst_11 : f32 to vector<1x256xf32>
    %16 = arith.addf %15, %14 : vector<1x256xf32>
    %17 = arith.divf %15, %16 : vector<1x256xf32>
    %18 = arith.truncf %17 : vector<1x256xf32> to vector<1x256xbf16>
    %c0_12 = arith.constant 0 : index
    %c0_13 = arith.constant 0 : index
    %19 = vector.load %arg5[%c0_12, %c0_13] : memref<256x512xbf16, #tpu.memory_space<vmem>>, vector<256x512xbf16>
    %cst_14 = arith.constant dense<0.000000e+00> : vector<1x512xf32>
    %20 = tpu.matmul %18, %19, %cst_14 {dimension_numbers = #tpu.dot_dimension_numbers<[1], [0], [0], [1], [0, 0, 1, 1], [], []>} : vector<1x256xbf16>, vector<256x512xbf16>, vector<1x512xf32> -> vector<1x512xf32>
    %c0_15 = arith.constant 0 : index
    %c0_16 = arith.constant 0 : index
    %21 = vector.load %arg6[%c0_15, %c0_16] : memref<1x512xf32, #tpu.memory_space<vmem>>, vector<1x512xf32>
    %22 = arith.addf %20, %21 : vector<1x512xf32>
    %cst_17 = arith.constant 0.000000e+00 : f32
    %23 = vector.broadcast %cst_17 : f32 to vector<1x512xf32>
    %24 = arith.maximumf %22, %23 : vector<1x512xf32>
    %25 = arith.truncf %24 : vector<1x512xf32> to vector<1x512xbf16>
    %c0_18 = arith.constant 0 : index
    %c0_19 = arith.constant 0 : index
    %26 = vector.load %arg7[%c0_18, %c0_19] : memref<512x1024xbf16, #tpu.memory_space<vmem>>, vector<512x1024xbf16>
    %cst_20 = arith.constant dense<0.000000e+00> : vector<1x1024xf32>
    %27 = tpu.matmul %25, %26, %cst_20 {dimension_numbers = #tpu.dot_dimension_numbers<[1], [0], [0], [1], [0, 0, 1, 1], [], []>} : vector<1x512xbf16>, vector<512x1024xbf16>, vector<1x1024xf32> -> vector<1x1024xf32>
    %c0_21 = arith.constant 0 : index
    %c0_22 = arith.constant 0 : index
    %28 = vector.load %arg8[%c0_21, %c0_22] : memref<1x1024xf32, #tpu.memory_space<vmem>>, vector<1x1024xf32>
    %29 = arith.addf %27, %28 : vector<1x1024xf32>
    %cst_23 = arith.constant 0.000000e+00 : f32
    %30 = vector.broadcast %cst_23 : f32 to vector<1x1024xf32>
    %31 = arith.maximumf %29, %30 : vector<1x1024xf32>
    %32 = arith.truncf %31 : vector<1x1024xf32> to vector<1x1024xbf16>
    %c0_24 = arith.constant 0 : index
    %c0_25 = arith.constant 0 : index
    %33 = vector.load %arg9[%c0_24, %c0_25] : memref<1024x896xbf16, #tpu.memory_space<vmem>>, vector<1024x896xbf16>
    %cst_26 = arith.constant dense<0.000000e+00> : vector<1x896xf32>
    %34 = tpu.matmul %32, %33, %cst_26 {dimension_numbers = #tpu.dot_dimension_numbers<[1], [0], [0], [1], [0, 0, 1, 1], [], []>} : vector<1x1024xbf16>, vector<1024x896xbf16>, vector<1x896xf32> -> vector<1x896xf32>
    %c0_27 = arith.constant 0 : index
    %c0_28 = arith.constant 0 : index
    %35 = vector.load %arg10[%c0_27, %c0_28] : memref<1x896xf32, #tpu.memory_space<vmem>>, vector<1x896xf32>
    %36 = arith.addf %34, %35 : vector<1x896xf32>
    %37 = arith.negf %36 : vector<1x896xf32>
    %38 = math.exp %37 : vector<1x896xf32>
    %cst_29 = arith.constant 1.000000e+00 : f32
    %39 = vector.broadcast %cst_29 : f32 to vector<1x896xf32>
    %40 = arith.addf %39, %38 : vector<1x896xf32>
    %41 = arith.divf %39, %40 : vector<1x896xf32>
    %c0_30 = arith.constant 0 : index
    %c0_31 = arith.constant 0 : index
    %42 = vector.load %arg11[%c0_30, %c0_31] : memref<1x896xf32, #tpu.memory_space<vmem>>, vector<1x896xf32>
    tpu.vector_store %arg11[%c0_30, %c0_31], %41 {strides = array<i32>} : memref<1x896xf32, #tpu.memory_space<vmem>>, vector<1x896xf32>,
    return
  }
}

</mosaic_0001>

<llo_original>
// kernel: generator_zero_forward.1
$region0: #{generator_zero_forward.1}
  #allocation0 [shape = 'u32[]', space=smem, size = 0x4, offset = 0x4, fixed_abs, tag = 'smem constant byte address 0x4 - core index']
  #allocation1 [shape = 'u32[144,128]{1,0:T(1,128)}', space=vmem, size = 0x12000, scoped, tag = 'internal scratch']
  %s0 = inlined_call_operand.hbm [shape: f32[1,32], index: 0, kind: input, shape index: {}]
  %s1 = inlined_call_operand.hbm [shape: bf16[32,128], index: 1, kind: input, shape index: {}]
  %s2 = inlined_call_operand.hbm [shape: f32[1,128], index: 2, kind: input, shape index: {}]
  %s3 = inlined_call_operand.hbm [shape: bf16[128,256], index: 3, kind: input, shape index: {}]
  %s4 = inlined_call_operand.hbm [shape: f32[1,256], index: 4, kind: input, shape index: {}]
  %s5 = inlined_call_operand.hbm [shape: bf16[256,512], index: 5, kind: input, shape index: {}]
  %s6 = inlined_call_operand.hbm [shape: f32[1,512], index: 6, kind: input, shape index: {}]
  %s7 = inlined_call_operand.hbm [shape: bf16[512,1024], index: 7, kind: input, shape index: {}]
  %s8 = inlined_call_operand.hbm [shape: f32[1,1024], index: 8, kind: input, shape index: {}]
  %s9 = inlined_call_operand.hbm [shape: bf16[1024,896], index: 9, kind: input, shape index: {}]
  %s10 = inlined_call_operand.hbm [shape: f32[1,896], index: 10, kind: input, shape index: {}]
  %s11 = inlined_call_operand.vmem [shape: f32[1,896], index: 11, kind: output, shape index: {}]
  %s12 = sld [smem:[#allocation0]]
  $region98: #{generator_zero_forward.1} parent=0
    _
  %s14 = ssub.s32 1, %s12
  %s15 = scalar_select 0, %s14, %s12
  $region1: #{generator_zero_forward.1} parent=0
    #allocation2 [shape = 'u8[512]{0}', space=vmem, size = 0x400, scoped, tag = 'input window, operand 0, single buffered']
    #allocation3 [shape = 's32[1]{0}', space=sflag, size = 0x4, scoped, tag = 'scoped memory for generator_zero_forward.1']
    #allocation4 [shape = 'u8[8192]{0}', space=vmem, size = 0x2000, scoped, tag = 'input window, operand 1, single buffered']
    #allocation5 [shape = 's32[1]{0}', space=sflag, size = 0x4, scoped, tag = 'scoped memory for generator_zero_forward.1']
    #allocation6 [shape = 'u8[512]{0}', space=vmem, size = 0x400, scoped, tag = 'input window, operand 2, single buffered']
    #allocation7 [shape = 'u8[65536]{0}', space=vmem, size = 0x10000, scoped, tag = 'input window, operand 3, single buffered']
    #allocation8 [shape = 's32[1]{0}', space=sflag, size = 0x4, scoped, tag = 'scoped memory for generator_zero_forward.1']
    #allocation9 [shape = 'u8[1024]{0}', space=vmem, size = 0x400, scoped, tag = 'input window, operand 4, single buffered']
    #allocation10 [shape = 'u8[262144]{0}', space=vmem, size = 0x40000, scoped, tag = 'input window, operand 5, single buffered']
    #allocation11 [shape = 's32[1]{0}', space=sflag, size = 0x4, scoped, tag = 'scoped memory for generator_zero_forward.1']
    #allocation12 [shape = 'u8[2048]{0}', space=vmem, size = 0x800, scoped, tag = 'input window, operand 6, single buffered']
    #allocation13 [shape = 'u8[1048576]{0}', space=vmem, size = 0x100000, scoped, tag = 'input window, operand 7, single buffered']
    #allocation14 [shape = 's32[1]{0}', space=sflag, size = 0x4, scoped, tag = 'scoped memory for generator_zero_forward.1']
    #allocation15 [shape = 'u8[4096]{0}', space=vmem, size = 0x1000, scoped, tag = 'input window, operand 8, single buffered']
    #allocation16 [shape = 'u8[1835008]{0}', space=vmem, size = 0x1c0000, scoped, tag = 'input window, operand 9, single buffered']
    #allocation17 [shape = 's32[1]{0}', space=sflag, size = 0x4, scoped, tag = 'scoped memory for generator_zero_forward.1']
    #allocation18 [shape = 'u8[3584]{0}', space=vmem, size = 0x1000, scoped, tag = 'input window, operand 10, single buffered']
    %16 = vsyncpa [#allocation3], 0
    %17 = vsyncpa [#allocation5], 0
    %18 = vsyncpa [#allocation8], 0
    %19 = vsyncpa [#allocation11], 0
    %20 = vsyncpa [#allocation14], 0
    %21 = vsyncpa [#allocation17], 0
    // Predicated region
    $region2: #{generator_zero_forward.1} parent=1 // pred_check
      _
    $region3: #{generator_zero_forward.1} parent=1 // pred_check_branch
      %23 = sbr.rel (0) target = $region5
    $region4: #{generator_zero_forward.1} parent=1 // pred_region
      %s25 = ssub.s32 16, 16
      %26 = vsyncadd [#allocation3], %s25
      %s28 = sshll.u32 [#allocation2], 4
      %s29 = int_to_ptr.vmem [resolvable:$true] %s28
      %31 = dma.hbm_to_vmem [thread:$0]  %s0, 16, %s29, [#allocation3]
    $region5: #{generator_zero_forward.1} parent=1 // pred_fallthru
      _
    // Predicated region
    $region6: #{generator_zero_forward.1} parent=1 // pred_check
      _
    $region7: #{generator_zero_forward.1} parent=1 // pred_check_branch
      %33 = sbr.rel (0) target = $region9
    $region8: #{generator_zero_forward.1} parent=1 // pred_region
      %s35 = ssub.s32 256, 256
      %36 = vsyncadd [#allocation5], %s35
      %s37 = sshll.u32 [#allocation4], 4
      %s38 = int_to_ptr.vmem [resolvable:$true] %s37
      %43 = dma.hbm_to_vmem [thread:$0]  %s1, 256, %s38, [#allocation5], 64, 64, 4
    $region9: #{generator_zero_forward.1} parent=1 // pred_fallthru
      _
    // Predicated region
    $region10: #{generator_zero_forward.1} parent=1 // pred_check
      _
    $region11: #{generator_zero_forward.1} parent=1 // pred_check_branch
      %45 = sbr.rel (0) target = $region13
    $region12: #{generator_zero_forward.1} parent=1 // pred_region
      %s47 = ssub.s32 16, 16
      %48 = vsyncadd [#allocation5], %s47
      %s50 = sshll.u32 [#allocation6], 4
      %s51 = int_to_ptr.vmem [resolvable:$true] %s50
      %53 = dma.hbm_to_vmem [thread:$0]  %s2, 16, %s51, [#allocation5]
    $region13: #{generator_zero_forward.1} parent=1 // pred_fallthru
      _
    // Predicated region
    $region14: #{generator_zero_forward.1} parent=1 // pred_check
      _
    $region15: #{generator_zero_forward.1} parent=1 // pred_check_branch
      %55 = sbr.rel (0) target = $region17
    $region16: #{generator_zero_forward.1} parent=1 // pred_region
      %s57 = ssub.s32 2048, 2048
      %58 = vsyncadd [#allocation8], %s57
      %s59 = sshll.u32 [#allocation7], 4
      %s60 = int_to_ptr.vmem [resolvable:$true] %s59
      %65 = dma.hbm_to_vmem [thread:$0]  %s3, 2048, %s60, [#allocation8], 128, 128, 8
    $region17: #{generator_zero_forward.1} parent=1 // pred_fallthru
      _
    // Predicated region
    $region18: #{generator_zero_forward.1} parent=1 // pred_check
      _
    $region19: #{generator_zero_forward.1} parent=1 // pred_check_branch
      %67 = sbr.rel (0) target = $region21
    $region20: #{generator_zero_forward.1} parent=1 // pred_region
      %s69 = ssub.s32 32, 32
      %70 = vsyncadd [#allocation8], %s69
      %s72 = sshll.u32 [#allocation9], 4
      %s73 = int_to_ptr.vmem [resolvable:$true] %s72
      %75 = dma.hbm_to_vmem [thread:$0]  %s4, 32, %s73, [#allocation8]
    $region21: #{generator_zero_forward.1} parent=1 // pred_fallthru
      _
    // Predicated region
    $region22: #{generator_zero_forward.1} parent=1 // pred_check
      _
    $region23: #{generator_zero_forward.1} parent=1 // pred_check_branch
      %77 = sbr.rel (0) target = $region25
    $region24: #{generator_zero_forward.1} parent=1 // pred_region
      %s79 = ssub.s32 8192, 8192
      %80 = vsyncadd [#allocation11], %s79
      %s81 = sshll.u32 [#allocation10], 4
      %s82 = int_to_ptr.vmem [resolvable:$true] %s81
      %87 = dma.hbm_to_vmem [thread:$0]  %s5, 8192, %s82, [#allocation11], 256, 256, 16
    $region25: #{generator_zero_forward.1} parent=1 // pred_fallthru
      _
    // Predicated region
    $region26: #{generator_zero_forward.1} parent=1 // pred_check
      _
    $region27: #{generator_zero_forward.1} parent=1 // pred_check_branch
      %89 = sbr.rel (0) target = $region29
    $region28: #{generator_zero_forward.1} parent=1 // pred_region
      %s91 = ssub.s32 64, 64
      %92 = vsyncadd [#allocation11], %s91
      %s94 = sshll.u32 [#allocation12], 4
      %s95 = int_to_ptr.vmem [resolvable:$true] %s94
      %97 = dma.hbm_to_vmem [thread:$0]  %s6, 64, %s95, [#allocation11]
    $region29: #{generator_zero_forward.1} parent=1 // pred_fallthru
      _
    // Predicated region
    $region30: #{generator_zero_forward.1} parent=1 // pred_check
      _
    $region31: #{generator_zero_forward.1} parent=1 // pred_check_branch
      %99 = sbr.rel (0) target = $region33
    $region32: #{generator_zero_forward.1} parent=1 // pred_region
      %s101 = ssub.s32 32768, 32768
      %102 = vsyncadd [#allocation14], %s101
      %s103 = sshll.u32 [#allocation13], 4
      %s104 = int_to_ptr.vmem [resolvable:$true] %s103
      %109 = dma.hbm_to_vmem [thread:$0]  %s7, 32768, %s104, [#allocation14], 512, 512, 32
    $region33: #{generator_zero_forward.1} parent=1 // pred_fallthru
      _
    // Predicated region
    $region34: #{generator_zero_forward.1} parent=1 // pred_check
      _
    $region35: #{generator_zero_forward.1} parent=1 // pred_check_branch
      %111 = sbr.rel (0) target = $region37
    $region36: #{generator_zero_forward.1} parent=1 // pred_region
      %s113 = ssub.s32 128, 128
      %114 = vsyncadd [#allocation14], %s113
      %s116 = sshll.u32 [#allocation15], 4
      %s117 = int_to_ptr.vmem [resolvable:$true] %s116
      %119 = dma.hbm_to_vmem [thread:$0]  %s8, 128, %s117, [#allocation14]
    $region37: #{generator_zero_forward.1} parent=1 // pred_fallthru
      _
    // Predicated region
    $region38: #{generator_zero_forward.1} parent=1 // pred_check
      _
    $region39: #{generator_zero_forward.1} parent=1 // pred_check_branch
      %121 = sbr.rel (0) target = $region41
    $region40: #{generator_zero_forward.1} parent=1 // pred_region
      %s123 = ssub.s32 57344, 57344
      %124 = vsyncadd [#allocation17], %s123
      %s125 = sshll.u32 [#allocation16], 4
      %s126 = int_to_ptr.vmem [resolvable:$true] %s125
      %131 = dma.hbm_to_vmem [thread:$0]  %s9, 57344, %s126, [#allocation17], 448, 448, 28
    $region41: #{generator_zero_forward.1} parent=1 // pred_fallthru
      _
    // Predicated region
    $region42: #{generator_zero_forward.1} parent=1 // pred_check
      _
    $region43: #{generator_zero_forward.1} parent=1 // pred_check_branch
      %133 = sbr.rel (0) target = $region45
    $region44: #{generator_zero_forward.1} parent=1 // pred_region
      %s135 = ssub.s32 112, 112
      %136 = vsyncadd [#allocation17], %s135
      %s138 = sshll.u32 [#allocation18], 4
      %s139 = int_to_ptr.vmem [resolvable:$true] %s138
      %141 = dma.hbm_to_vmem [thread:$0]  %s10, 112, %s139, [#allocation17]
    $region45: #{generator_zero_forward.1} parent=1 // pred_fallthru
      _
    // Predicated region
    $region46: #{generator_zero_forward.1} parent=1 // pred_check
      _
    $region47: #{generator_zero_forward.1} parent=1 // pred_check_branch
      %143 = sbr.rel (0) target = $region49
    $region48: #{generator_zero_forward.1} parent=1 // pred_region
      %144 = dma.done [#allocation3], 16
    $region49: #{generator_zero_forward.1} parent=1 // pred_fallthru
      _
    // Predicated region
    $region50: #{generator_zero_forward.1} parent=1 // pred_check
      _
    $region51: #{generator_zero_forward.1} parent=1 // pred_check_branch
      %146 = sbr.rel (0) target = $region53
    $region52: #{generator_zero_forward.1} parent=1 // pred_region
      %147 = dma.done [#allocation5], 256
    $region53: #{generator_zero_forward.1} parent=1 // pred_fallthru
      _
    // Predicated region
    $region54: #{generator_zero_forward.1} parent=1 // pred_check
      _
    $region55: #{generator_zero_forward.1} parent=1 // pred_check_branch
      %149 = sbr.rel (0) target = $region57
    $region56: #{generator_zero_forward.1} parent=1 // pred_region
      %150 = dma.done [#allocation5], 16
    $region57: #{generator_zero_forward.1} parent=1 // pred_fallthru
      _
    // Predicated region
    $region58: #{generator_zero_forward.1} parent=1 // pred_check
      _
    $region59: #{generator_zero_forward.1} parent=1 // pred_check_branch
      %152 = sbr.rel (0) target = $region61
    $region60: #{generator_zero_forward.1} parent=1 // pred_region
      %153 = dma.done [#allocation8], 2048
    $region61: #{generator_zero_forward.1} parent=1 // pred_fallthru
      _
    // Predicated region
    $region62: #{generator_zero_forward.1} parent=1 // pred_check
      _
    $region63: #{generator_zero_forward.1} parent=1 // pred_check_branch
      %155 = sbr.rel (0) target = $region65
    $region64: #{generator_zero_forward.1} parent=1 // pred_region
      %156 = dma.done [#allocation8], 32
    $region65: #{generator_zero_forward.1} parent=1 // pred_fallthru
      _
    // Predicated region
    $region66: #{generator_zero_forward.1} parent=1 // pred_check
      _
    $region67: #{generator_zero_forward.1} parent=1 // pred_check_branch
      %158 = sbr.rel (0) target = $region69
    $region68: #{generator_zero_forward.1} parent=1 // pred_region
      %159 = dma.done [#allocation11], 8192
    $region69: #{generator_zero_forward.1} parent=1 // pred_fallthru
      _
    // Predicated region
    $region70: #{generator_zero_forward.1} parent=1 // pred_check
      _
    $region71: #{generator_zero_forward.1} parent=1 // pred_check_branch
      %161 = sbr.rel (0) target = $region73
    $region72: #{generator_zero_forward.1} parent=1 // pred_region
      %162 = dma.done [#allocation11], 64
    $region73: #{generator_zero_forward.1} parent=1 // pred_fallthru
      _
    // Predicated region
    $region74: #{generator_zero_forward.1} parent=1 // pred_check
      _
    $region75: #{generator_zero_forward.1} parent=1 // pred_check_branch
      %164 = sbr.rel (0) target = $region77
    $region76: #{generator_zero_forward.1} parent=1 // pred_region
      %165 = dma.done [#allocation14], 32768
    $region77: #{generator_zero_forward.1} parent=1 // pred_fallthru
      _
    // Predicated region
    $region78: #{generator_zero_forward.1} parent=1 // pred_check
      _
    $region79: #{generator_zero_forward.1} parent=1 // pred_check_branch
      %167 = sbr.rel (0) target = $region81
    $region80: #{generator_zero_forward.1} parent=1 // pred_region
      %168 = dma.done [#allocation14], 128
    $region81: #{generator_zero_forward.1} parent=1 // pred_fallthru
      _
    // Predicated region
    $region82: #{generator_zero_forward.1} parent=1 // pred_check
      _
    $region83: #{generator_zero_forward.1} parent=1 // pred_check_branch
      %170 = sbr.rel (0) target = $region85
    $region84: #{generator_zero_forward.1} parent=1 // pred_region
      %171 = dma.done [#allocation17], 57344
    $region85: #{generator_zero_forward.1} parent=1 // pred_fallthru
      _
    // Predicated region
    $region86: #{generator_zero_forward.1} parent=1 // pred_check
      _
    $region87: #{generator_zero_forward.1} parent=1 // pred_check_branch
      %173 = sbr.rel (0) target = $region89
    $region88: #{generator_zero_forward.1} parent=1 // pred_region
      %174 = dma.done [#allocation17], 112
    $region89: #{generator_zero_forward.1} parent=1 // pred_fallthru
      _
    %v176 = vld [vmem:[#allocation2] sm:$0x1]
    %v177 = vpack.c.bf16 %v176, %v176
    %v178 = vld [vmem:[#allocation4] sm:$0xf]
    %v179 = vld [vmem:[#allocation4 + $0x4] sm:$0xf]
    %v180 = vld [vmem:[#allocation4 + $0x8] sm:$0xf]
    %v181 = vld [vmem:[#allocation4 + $0xc] sm:$0xf]
    %v182 = vld [vmem:[#allocation6] sm:$0x1]
    %v187 = vunpack.c.l.b16 %v178
    %v188 = vunpack.c.l.b16 %v179
    %v189 = vunpack.c.l.b16 %v180
    %v190 = vunpack.c.l.b16 %v181
    %v191 = vpack.c.b16 %v188, %v187
    %v192 = vpack.c.b16 %v190, %v189
    %vm195 = vcmask 261120
    %v197 = vsel %vm195, %v177, 0
    %199 = vmatprep.subr.bf16.mxu0 0
    %200 = vmatpush1.bf16.msra.mxu0 0
    %201 = vmatprep.subr.bf16.mxu0 0
    %202 = vmatpush1.bf16.msra.mxu0 0
    %203 = vmatprep.subr.bf16.mxu0 0
    %204 = vmatpush1.bf16.msra.mxu0 0
    %205 = vmatprep.subr.bf16.mxu0 0
    %206 = vmatpush1.bf16.msra.mxu0 0
    %207 = vmatprep.subr.bf16.mxu0 0
    %208 = vmatpush1.bf16.msra.mxu0 0
    %209 = vmatprep.subr.bf16.mxu0 0
    %210 = vmatpush1.bf16.msra.mxu0 0
    %211 = vmatprep.subr.bf16.mxu0 0
    %212 = vmatpush1.bf16.msra.mxu0 %v192
    %213 = vmatprep.subr.bf16.mxu0 0
    %214 = vmatpush1.bf16.msra.mxu0 %v191
    %215 = vmatprep.subr.bf16.mxu0 0
    %216 = vmatpush2.bf16.msra.mxu0 0
    %217 = vmatprep.subr.bf16.mxu0 0
    %218 = vmatpush2.bf16.msra.mxu0 0
    %219 = vmatprep.subr.bf16.mxu0 0
    %220 = vmatpush2.bf16.msra.mxu0 0
    %221 = vmatprep.subr.bf16.mxu0 0
    %222 = vmatpush2.bf16.msra.mxu0 0
    %223 = vmatprep.subr.bf16.mxu0 0
    %224 = vmatpush2.bf16.msra.mxu0 0
    %225 = vmatprep.subr.bf16.mxu0 0
    %226 = vmatpush2.bf16.msra.mxu0 0
    %227 = vmatprep.subr.bf16.mxu0 0
    %228 = vmatpush2.bf16.msra.mxu0 0
    %229 = vmatprep.subr.bf16.mxu0 0
    %230 = vmatpush2.bf16.msra.mxu0 0
    %231 = vmatprep.mubr.bf16.mxu0 0
    %232 = vmatmul.mubr.bf16.gmra.mxu0 %v197
    %v233 = vpop.f32.mrf.mxu0
    %v234 = vadd.f32 %v182, %v233
    %v235 = vpop.f32.mrf.mxu0
    %v236 = vpop.f32.mrf.mxu0
    %v237 = vpop.f32.mrf.mxu0
    %238 = vdwg.mxu0
    %v239 = vmax.f32 %v234, 0.0
    %v240 = vpack.c.bf16 %v239, %v239
    %v241 = vld [vmem:[#allocation7] sm:$0xff]
    %v242 = vld [vmem:[#allocation7 + $0x8] sm:$0xff]
    %v243 = vld [vmem:[#allocation7 + $0x10] sm:$0xff]
    %v244 = vld [vmem:[#allocation7 + $0x18] sm:$0xff]
    %v245 = vld [vmem:[#allocation7 + $0x20] sm:$0xff]
    %v246 = vld [vmem:[#allocation7 + $0x28] sm:$0xff]
    %v247 = vld [vmem:[#allocation7 + $0x30] sm:$0xff]
    %v248 = vld [vmem:[#allocation7 + $0x38] sm:$0xff]
    %v249 = vld [vmem:[#allocation7 + $0x40] sm:$0xff]
    %v250 = vld [vmem:[#allocation7 + $0x48] sm:$0xff]
    %v251 = vld [vmem:[#allocation7 + $0x50] sm:$0xff]
    %v252 = vld [vmem:[#allocation7 + $0x58] sm:$0xff]
    %v253 = vld [vmem:[#allocation7 + $0x60] sm:$0xff]
    %v254 = vld [vmem:[#allocation7 + $0x68] sm:$0xff]
    %v255 = vld [vmem:[#allocation7 + $0x70] sm:$0xff]
    %v256 = vld [vmem:[#allocation7 + $0x78] sm:$0xff]
    %v257 = vld [vmem:[#allocation9] sm:$0x3]
    %v274 = vunpack.c.l.b16 %v241
    %v275 = vunpack.c.h.b16 %v241
    %v276 = vunpack.c.l.b16 %v242
    %v277 = vunpack.c.h.b16 %v242
    %v278 = vunpack.c.l.b16 %v243
    %v279 = vunpack.c.h.b16 %v243
    %v280 = vunpack.c.l.b16 %v244
    %v281 = vunpack.c.h.b16 %v244
    %v282 = vunpack.c.l.b16 %v245
    %v283 = vunpack.c.h.b16 %v245
    %v284 = vunpack.c.l.b16 %v246
    %v285 = vunpack.c.h.b16 %v246
    %v286 = vunpack.c.l.b16 %v247
    %v287 = vunpack.c.h.b16 %v247
    %v288 = vunpack.c.l.b16 %v248
    %v289 = vunpack.c.h.b16 %v248
    %v290 = vunpack.c.l.b16 %v249
    %v291 = vunpack.c.h.b16 %v249
    %v292 = vunpack.c.l.b16 %v250
    %v293 = vunpack.c.h.b16 %v250
    %v294 = vunpack.c.l.b16 %v251
    %v295 = vunpack.c.h.b16 %v251
    %v296 = vunpack.c.l.b16 %v252
    %v297 = vunpack.c.h.b16 %v252
    %v298 = vunpack.c.l.b16 %v253
    %v299 = vunpack.c.h.b16 %v253
    %v300 = vunpack.c.l.b16 %v254
    %v301 = vunpack.c.h.b16 %v254
    %v302 = vunpack.c.l.b16 %v255
    %v303 = vunpack.c.h.b16 %v255
    %v304 = vunpack.c.l.b16 %v256
    %v305 = vunpack.c.h.b16 %v256
    %v306 = vpack.c.b16 %v276, %v274
    %v307 = vpack.c.b16 %v277, %v275
    %v308 = vpack.c.b16 %v280, %v278
    %v309 = vpack.c.b16 %v281, %v279
    %v310 = vpack.c.b16 %v284, %v282
    %v311 = vpack.c.b16 %v285, %v283
    %v312 = vpack.c.b16 %v288, %v286
    %v313 = vpack.c.b16 %v289, %v287
    %v314 = vpack.c.b16 %v292, %v290
    %v315 = vpack.c.b16 %v293, %v291
    %v316 = vpack.c.b16 %v296, %v294
    %v317 = vpack.c.b16 %v297, %v295
    %v318 = vpack.c.b16 %v300, %v298
    %v319 = vpack.c.b16 %v301, %v299
    %v320 = vpack.c.b16 %v304, %v302
    %v321 = vpack.c.b16 %v305, %v303
    %v339 = vlaneseq
    %v340 = vshrl.u32 %v339, 7
    %v341 = vsub.s32 0, %v340
    %v342 = vrot.slane %v257, %v341
    %v343 = vlaneseq
    %v344 = vshrl.u32 %v343, 7
    %v345 = vsub.s32 1, %v344
    %v346 = vrot.slane %v257, %v345
    %349 = vmatprep.subr.bf16.mxu0 %v321
    %350 = vmatpush1.bf16.msra.mxu0 %v320
    %351 = vmatprep.subr.bf16.mxu0 %v319
    %352 = vmatpush1.bf16.msra.mxu0 %v318
    %353 = vmatprep.subr.bf16.mxu0 %v317
    %354 = vmatpush1.bf16.msra.mxu0 %v316
    %355 = vmatprep.subr.bf16.mxu0 %v315
    %356 = vmatpush1.bf16.msra.mxu0 %v314
    %357 = vmatprep.subr.bf16.mxu0 %v313
    %358 = vmatpush1.bf16.msra.mxu0 %v312
    %359 = vmatprep.subr.bf16.mxu0 %v311
    %360 = vmatpush1.bf16.msra.mxu0 %v310
    %361 = vmatprep.subr.bf16.mxu0 %v309
    %362 = vmatpush1.bf16.msra.mxu0 %v308
    %363 = vmatprep.subr.bf16.mxu0 %v307
    %364 = vmatpush1.bf16.msra.mxu0 %v306
    %365 = vmatprep.subr.bf16.mxu0 0
    %366 = vmatpush2.bf16.msra.mxu0 0
    %367 = vmatprep.subr.bf16.mxu0 0
    %368 = vmatpush2.bf16.msra.mxu0 0
    %369 = vmatprep.subr.bf16.mxu0 0
    %370 = vmatpush2.bf16.msra.mxu0 0
    %371 = vmatprep.subr.bf16.mxu0 0
    %372 = vmatpush2.bf16.msra.mxu0 0
    %373 = vmatprep.subr.bf16.mxu0 0
    %374 = vmatpush2.bf16.msra.mxu0 0
    %375 = vmatprep.subr.bf16.mxu0 0
    %376 = vmatpush2.bf16.msra.mxu0 0
    %377 = vmatprep.subr.bf16.mxu0 0
    %378 = vmatpush2.bf16.msra.mxu0 0
    %379 = vmatprep.subr.bf16.mxu0 0
    %380 = vmatpush2.bf16.msra.mxu0 0
    %381 = vmatprep.mubr.bf16.mxu0 0
    %382 = vmatmul.mubr.bf16.gmra.mxu0 %v240
    %v383 = vpop.f32.mrf.mxu0
    %v384 = vadd.f32 %v342, %v383
    %v385 = vpop.f32.mrf.mxu0
    %v386 = vadd.f32 %v346, %v385
    %v387 = vpop.f32.mrf.mxu0
    %v388 = vpop.f32.mrf.mxu0
    %389 = vdwg.mxu0
    %v390 = vxor.u32 %v384, 2147483648
    %v391 = vxor.u32 %v386, 2147483648
    %v392 = vmul.f32 %v390, 1.442695
    %v393 = vpow.pop %v392
    %v394 = vmul.f32 %v391, 1.442695
    %v395 = vpow.pop %v394
    %v396 = vadd.f32 %v393, 1.0
    %v397 = vadd.f32 %v395, 1.0
    %v398 = vrcp.pop %v396
    %v399 = vmul.f32 1.0, %v398
    %v400 = vrcp.pop %v397
    %v401 = vmul.f32 1.0, %v400
    %v402 = vpack.c.bf16 %v399, %v399
    %v403 = vpack.c.bf16 %v401, %v401
    %v404 = vld [vmem:[#allocation10] sm:$0xff]
    %v405 = vld [vmem:[#allocation10 + $0x8] sm:$0xff]
    %v406 = vld [vmem:[#allocation10 + $0x10] sm:$0xff]
    %v407 = vld [vmem:[#allocation10 + $0x18] sm:$0xff]
    %v408 = vld [vmem:[#allocation10 + $0x20] sm:$0xff]
    %v409 = vld [vmem:[#allocation10 + $0x28] sm:$0xff]
    %v410 = vld [vmem:[#allocation10 + $0x30] sm:$0xff]
    %v411 = vld [vmem:[#allocation10 + $0x38] sm:$0xff]
    %v412 = vld [vmem:[#allocation10 + $0x40] sm:$0xff]
    %v413 = vld [vmem:[#allocation10 + $0x48] sm:$0xff]
    %v414 = vld [vmem:[#allocation10 + $0x50] sm:$0xff]
    %v415 = vld [vmem:[#allocation10 + $0x58] sm:$0xff]
    %v416 = vld [vmem:[#allocation10 + $0x60] sm:$0xff]
    %v417 = vld [vmem:[#allocation10 + $0x68] sm:$0xff]
    %v418 = vld [vmem:[#allocation10 + $0x70] sm:$0xff]
    %v419 = vld [vmem:[#allocation10 + $0x78] sm:$0xff]
    %v420 = vld [vmem:[#allocation10 + $0x80] sm:$0xff]
    %v421 = vld [vmem:[#allocation10 + $0x88] sm:$0xff]
    %v422 = vld [vmem:[#allocation10 + $0x90] sm:$0xff]
    %v423 = vld [vmem:[#allocation10 + $0x98] sm:$0xff]
    %v424 = vld [vmem:[#allocation10 + $0xa0] sm:$0xff]
    %v425 = vld [vmem:[#allocation10 + $0xa8] sm:$0xff]
    %v426 = vld [vmem:[#allocation10 + $0xb0] sm:$0xff]
    %v427 = vld [vmem:[#allocation10 + $0xb8] sm:$0xff]
    %v428 = vld [vmem:[#allocation10 + $0xc0] sm:$0xff]
    %v429 = vld [vmem:[#allocation10 + $0xc8] sm:$0xff]
    %v430 = vld [vmem:[#allocation10 + $0xd0] sm:$0xff]
    %v431 = vld [vmem:[#allocation10 + $0xd8] sm:$0xff]
    %v432 = vld [vmem:[#allocation10 + $0xe0] sm:$0xff]
    %v433 = vld [vmem:[#allocation10 + $0xe8] sm:$0xff]
    %v434 = vld [vmem:[#allocation10 + $0xf0] sm:$0xff]
    %v435 = vld [vmem:[#allocation10 + $0xf8] sm:$0xff]
    %v436 = vld [vmem:[#allocation10 + $0x100] sm:$0xff]
    %v437 = vld [vmem:[#allocation10 + $0x108] sm:$0xff]
    %v438 = vld [vmem:[#allocation10 + $0x110] sm:$0xff]
    %v439 = vld [vmem:[#allocation10 + $0x118] sm:$0xff]
    %v440 = vld [vmem:[#allocation10 + $0x120] sm:$0xff]
    %v441 = vld [vmem:[#allocation10 + $0x128] sm:$0xff]
    %v442 = vld [vmem:[#allocation10 + $0x130] sm:$0xff]
    %v443 = vld [vmem:[#allocation10 + $0x138] sm:$0xff]
    %v444 = vld [vmem:[#allocation10 + $0x140] sm:$0xff]
    %v445 = vld [vmem:[#allocation10 + $0x148] sm:$0xff]
    %v446 = vld [vmem:[#allocation10 + $0x150] sm:$0xff]
    %v447 = vld [vmem:[#allocation10 + $0x158] sm:$0xff]
    %v448 = vld [vmem:[#allocation10 + $0x160] sm:$0xff]
    %v449 = vld [vmem:[#allocation10 + $0x168] sm:$0xff]
    %v450 = vld [vmem:[#allocation10 + $0x170] sm:$0xff]
    %v451 = vld [vmem:[#allocation10 + $0x178] sm:$0xff]
    %v452 = vld [vmem:[#allocation10 + $0x180] sm:$0xff]
    %v453 = vld [vmem:[#allocation10 + $0x188] sm:$0xff]
    %v454 = vld [vmem:[#allocation10 + $0x190] sm:$0xff]
    %v455 = vld [vmem:[#allocation10 + $0x198] sm:$0xff]
    %v456 = vld [vmem:[#allocation10 + $0x1a0] sm:$0xff]
    %v457 = vld [vmem:[#allocation10 + $0x1a8] sm:$0xff]
    %v458 = vld [vmem:[#allocation10 + $0x1b0] sm:$0xff]
    %v459 = vld [vmem:[#allocation10 + $0x1b8] sm:$0xff]
    %v460 = vld [vmem:[#allocation10 + $0x1c0] sm:$0xff]
    %v461 = vld [vmem:[#allocation10 + $0x1c8] sm:$0xff]
    %v462 = vld [vmem:[#allocation10 + $0x1d0] sm:$0xff]
    %v463 = vld [vmem:[#allocation10 + $0x1d8] sm:$0xff]
    %v464 = vld [vmem:[#allocation10 + $0x1e0] sm:$0xff]
    %v465 = vld [vmem:[#allocation10 + $0x1e8] sm:$0xff]
    %v466 = vld [vmem:[#allocation10 + $0x1f0] sm:$0xff]
    %v467 = vld [vmem:[#allocation10 + $0x1f8] sm:$0xff]
    %v468 = vld [vmem:[#allocation12] sm:$0xf]
    %v533 = vunpack.c.l.b16 %v404
    %v534 = vunpack.c.h.b16 %v404
    %v535 = vunpack.c.l.b16 %v405
    %v536 = vunpack.c.h.b16 %v405
    %v537 = vunpack.c.l.b16 %v406
    %v538 = vunpack.c.h.b16 %v406
    %v539 = vunpack.c.l.b16 %v407
    %v540 = vunpack.c.h.b16 %v407
    %v541 = vunpack.c.l.b16 %v408
    %v542 = vunpack.c.h.b16 %v408
    %v543 = vunpack.c.l.b16 %v409
    %v544 = vunpack.c.h.b16 %v409
    %v545 = vunpack.c.l.b16 %v410
    %v546 = vunpack.c.h.b16 %v410
    %v547 = vunpack.c.l.b16 %v411
    %v548 = vunpack.c.h.b16 %v411
    %v549 = vunpack.c.l.b16 %v412
    %v550 = vunpack.c.h.b16 %v412
    %v551 = vunpack.c.l.b16 %v413
    %v552 = vunpack.c.h.b16 %v413
    %v553 = vunpack.c.l.b16 %v414
    %v554 = vunpack.c.h.b16 %v414
    %v555 = vunpack.c.l.b16 %v415
    %v556 = vunpack.c.h.b16 %v415
    %v557 = vunpack.c.l.b16 %v416
    %v558 = vunpack.c.h.b16 %v416
    %v559 = vunpack.c.l.b16 %v417
    %v560 = vunpack.c.h.b16 %v417
    %v561 = vunpack.c.l.b16 %v418
    %v562 = vunpack.c.h.b16 %v418
    %v563 = vunpack.c.l.b16 %v419
    %v564 = vunpack.c.h.b16 %v419
    %v565 = vunpack.c.l.b16 %v420
    %v566 = vunpack.c.h.b16 %v420
    %v567 = vunpack.c.l.b16 %v421
    %v568 = vunpack.c.h.b16 %v421
    %v569 = vunpack.c.l.b16 %v422
    %v570 = vunpack.c.h.b16 %v422
    %v571 = vunpack.c.l.b16 %v423
    %v572 = vunpack.c.h.b16 %v423
    %v573 = vunpack.c.l.b16 %v424
    %v574 = vunpack.c.h.b16 %v424
    %v575 = vunpack.c.l.b16 %v425
    %v576 = vunpack.c.h.b16 %v425
    %v577 = vunpack.c.l.b16 %v426
    %v578 = vunpack.c.h.b16 %v426
    %v579 = vunpack.c.l.b16 %v427
    %v580 = vunpack.c.h.b16 %v427
    %v581 = vunpack.c.l.b16 %v428
    %v582 = vunpack.c.h.b16 %v428
    %v583 = vunpack.c.l.b16 %v429
    %v584 = vunpack.c.h.b16 %v429
    %v585 = vunpack.c.l.b16 %v430
    %v586 = vunpack.c.h.b16 %v430
    %v587 = vunpack.c.l.b16 %v431
    %v588 = vunpack.c.h.b16 %v431
    %v589 = vunpack.c.l.b16 %v432
    %v590 = vunpack.c.h.b16 %v432
    %v591 = vunpack.c.l.b16 %v433
    %v592 = vunpack.c.h.b16 %v433
    %v593 = vunpack.c.l.b16 %v434
    %v594 = vunpack.c.h.b16 %v434
    %v595 = vunpack.c.l.b16 %v435
    %v596 = vunpack.c.h.b16 %v435
    %v597 = vunpack.c.l.b16 %v436
    %v598 = vunpack.c.h.b16 %v436
    %v599 = vunpack.c.l.b16 %v437
    %v600 = vunpack.c.h.b16 %v437
    %v601 = vunpack.c.l.b16 %v438
    %v602 = vunpack.c.h.b16 %v438
    %v603 = vunpack.c.l.b16 %v439
    %v604 = vunpack.c.h.b16 %v439
    %v605 = vunpack.c.l.b16 %v440
    %v606 = vunpack.c.h.b16 %v440
    %v607 = vunpack.c.l.b16 %v441
    %v608 = vunpack.c.h.b16 %v441
    %v609 = vunpack.c.l.b16 %v442
    %v610 = vunpack.c.h.b16 %v442
    %v611 = vunpack.c.l.b16 %v443
    %v612 = vunpack.c.h.b16 %v443
    %v613 = vunpack.c.l.b16 %v444
    %v614 = vunpack.c.h.b16 %v444
    %v615 = vunpack.c.l.b16 %v445
    %v616 = vunpack.c.h.b16 %v445
    %v617 = vunpack.c.l.b16 %v446
    %v618 = vunpack.c.h.b16 %v446
    %v619 = vunpack.c.l.b16 %v447
    %v620 = vunpack.c.h.b16 %v447
    %v621 = vunpack.c.l.b16 %v448
    %v622 = vunpack.c.h.b16 %v448
    %v623 = vunpack.c.l.b16 %v449
    %v624 = vunpack.c.h.b16 %v449
    %v625 = vunpack.c.l.b16 %v450
    %v626 = vunpack.c.h.b16 %v450
    %v627 = vunpack.c.l.b16 %v451
    %v628 = vunpack.c.h.b16 %v451
    %v629 = vunpack.c.l.b16 %v452
    %v630 = vunpack.c.h.b16 %v452
    %v631 = vunpack.c.l.b16 %v453
    %v632 = vunpack.c.h.b16 %v453
    %v633 = vunpack.c.l.b16 %v454
    %v634 = vunpack.c.h.b16 %v454
    %v635 = vunpack.c.l.b16 %v455
    %v636 = vunpack.c.h.b16 %v455
    %v637 = vunpack.c.l.b16 %v456
    %v638 = vunpack.c.h.b16 %v456
    %v639 = vunpack.c.l.b16 %v457
    %v640 = vunpack.c.h.b16 %v457
    %v641 = vunpack.c.l.b16 %v458
    %v642 = vunpack.c.h.b16 %v458
    %v643 = vunpack.c.l.b16 %v459
    %v644 = vunpack.c.h.b16 %v459
    %v645 = vunpack.c.l.b16 %v460
    %v646 = vunpack.c.h.b16 %v460
    %v647 = vunpack.c.l.b16 %v461
    %v648 = vunpack.c.h.b16 %v461
    %v649 = vunpack.c.l.b16 %v462
    %v650 = vunpack.c.h.b16 %v462
    %v651 = vunpack.c.l.b16 %v463
    %v652 = vunpack.c.h.b16 %v463
    %v653 = vunpack.c.l.b16 %v464
    %v654 = vunpack.c.h.b16 %v464
    %v655 = vunpack.c.l.b16 %v465
    %v656 = vunpack.c.h.b16 %v465
    %v657 = vunpack.c.l.b16 %v466
    %v658 = vunpack.c.h.b16 %v466
    %v659 = vunpack.c.l.b16 %v467
    %v660 = vunpack.c.h.b16 %v467
    %v661 = vpack.c.b16 %v537, %v533
    %v662 = vpack.c.b16 %v538, %v534
    %v663 = vpack.c.b16 %v539, %v535
    %v664 = vpack.c.b16 %v540, %v536
    %v665 = vpack.c.b16 %v545, %v541
    %v666 = vpack.c.b16 %v546, %v542
    %v667 = vpack.c.b16 %v547, %v543
    %v668 = vpack.c.b16 %v548, %v544
    %v669 = vpack.c.b16 %v553, %v549
    %v670 = vpack.c.b16 %v554, %v550
    %v671 = vpack.c.b16 %v555, %v551
    %v672 = vpack.c.b16 %v556, %v552
    %v673 = vpack.c.b16 %v561, %v557
    %v674 = vpack.c.b16 %v562, %v558
    %v675 = vpack.c.b16 %v563, %v559
    %v676 = vpack.c.b16 %v564, %v560
    %v677 = vpack.c.b16 %v569, %v565
    %v678 = vpack.c.b16 %v570, %v566
    %v679 = vpack.c.b16 %v571, %v567
    %v680 = vpack.c.b16 %v572, %v568
    %v681 = vpack.c.b16 %v577, %v573
    %v682 = vpack.c.b16 %v578, %v574
    %v683 = vpack.c.b16 %v579, %v575
    %v684 = vpack.c.b16 %v580, %v576
    %v685 = vpack.c.b16 %v585, %v581
    %v686 = vpack.c.b16 %v586, %v582
    %v687 = vpack.c.b16 %v587, %v583
    %v688 = vpack.c.b16 %v588, %v584
    %v689 = vpack.c.b16 %v593, %v589
    %v690 = vpack.c.b16 %v594, %v590
    %v691 = vpack.c.b16 %v595, %v591
    %v692 = vpack.c.b16 %v596, %v592
    %v693 = vpack.c.b16 %v601, %v597
    %v694 = vpack.c.b16 %v602, %v598
    %v695 = vpack.c.b16 %v603, %v599
    %v696 = vpack.c.b16 %v604, %v600
    %v697 = vpack.c.b16 %v609, %v605
    %v698 = vpack.c.b16 %v610, %v606
    %v699 = vpack.c.b16 %v611, %v607
    %v700 = vpack.c.b16 %v612, %v608
    %v701 = vpack.c.b16 %v617, %v613
    %v702 = vpack.c.b16 %v618, %v614
    %v703 = vpack.c.b16 %v619, %v615
    %v704 = vpack.c.b16 %v620, %v616
    %v705 = vpack.c.b16 %v625, %v621
    %v706 = vpack.c.b16 %v626, %v622
    %v707 = vpack.c.b16 %v627, %v623
    %v708 = vpack.c.b16 %v628, %v624
    %v709 = vpack.c.b16 %v633, %v629
    %v710 = vpack.c.b16 %v634, %v630
    %v711 = vpack.c.b16 %v635, %v631
    %v712 = vpack.c.b16 %v636, %v632
    %v713 = vpack.c.b16 %v641, %v637
    %v714 = vpack.c.b16 %v642, %v638
    %v715 = vpack.c.b16 %v643, %v639
    %v716 = vpack.c.b16 %v644, %v640
    %v717 = vpack.c.b16 %v649, %v645
    %v718 = vpack.c.b16 %v650, %v646
    %v719 = vpack.c.b16 %v651, %v647
    %v720 = vpack.c.b16 %v652, %v648
    %v721 = vpack.c.b16 %v657, %v653
    %v722 = vpack.c.b16 %v658, %v654
    %v723 = vpack.c.b16 %v659, %v655
    %v724 = vpack.c.b16 %v660, %v656
    %v790 = vlaneseq
    %v791 = vshrl.u32 %v790, 7
    %v792 = vsub.s32 0, %v791
    %v793 = vrot.slane %v468, %v792
    %v794 = vlaneseq
    %v795 = vshrl.u32 %v794, 7
    %v796 = vsub.s32 1, %v795
    %v797 = vrot.slane %v468, %v796
    %v798 = vlaneseq
    %v799 = vshrl.u32 %v798, 7
    %v800 = vsub.s32 2, %v799
    %v801 = vrot.slane %v468, %v800
    %v802 = vlaneseq
    %v803 = vshrl.u32 %v802, 7
    %v804 = vsub.s32 3, %v803
    %v805 = vrot.slane %v468, %v804
    %810 = vmatprep.subr.bf16.mxu0 %v690
    %811 = vmatpush1.bf16.msra.mxu0 %v689
    %812 = vmatprep.subr.bf16.mxu0 %v686
    %813 = vmatpush1.bf16.msra.mxu0 %v685
    %814 = vmatprep.subr.bf16.mxu0 %v682
    %815 = vmatpush1.bf16.msra.mxu0 %v681
    %816 = vmatprep.subr.bf16.mxu0 %v678
    %817 = vmatpush1.bf16.msra.mxu0 %v677
    %818 = vmatprep.subr.bf16.mxu0 %v674
    %819 = vmatpush1.bf16.msra.mxu0 %v673
    %820 = vmatprep.subr.bf16.mxu0 %v670
    %821 = vmatpush1.bf16.msra.mxu0 %v669
    %822 = vmatprep.subr.bf16.mxu0 %v666
    %823 = vmatpush1.bf16.msra.mxu0 %v665
    %824 = vmatprep.subr.bf16.mxu0 %v662
    %825 = vmatpush1.bf16.msra.mxu0 %v661
    %826 = vmatprep.subr.bf16.mxu0 %v722
    %827 = vmatpush2.bf16.msra.mxu0 %v721
    %828 = vmatprep.subr.bf16.mxu0 %v718
    %829 = vmatpush2.bf16.msra.mxu0 %v717
    %830 = vmatprep.subr.bf16.mxu0 %v714
    %831 = vmatpush2.bf16.msra.mxu0 %v713
    %832 = vmatprep.subr.bf16.mxu0 %v710
    %833 = vmatpush2.bf16.msra.mxu0 %v709
    %834 = vmatprep.subr.bf16.mxu0 %v706
    %835 = vmatpush2.bf16.msra.mxu0 %v705
    %836 = vmatprep.subr.bf16.mxu0 %v702
    %837 = vmatpush2.bf16.msra.mxu0 %v701
    %838 = vmatprep.subr.bf16.mxu0 %v698
    %839 = vmatpush2.bf16.msra.mxu0 %v697
    %840 = vmatprep.subr.bf16.mxu0 %v694
    %841 = vmatpush2.bf16.msra.mxu0 %v693
    %842 = vmatprep.mubr.bf16.mxu0 %v403
    %843 = vmatmul.mubr.bf16.gmra.mxu0 %v402
    %v844 = vpop.f32.mrf.mxu0
    %v845 = vadd.f32 %v793, %v844
    %v846 = vpop.f32.mrf.mxu0
    %v847 = vadd.f32 %v797, %v846
    %v848 = vpop.f32.mrf.mxu0
    %v849 = vpop.f32.mrf.mxu0
    %850 = vdwg.mxu0
    %851 = vmatprep.subr.bf16.mxu0 %v692
    %852 = vmatpush1.bf16.msra.mxu0 %v691
    %853 = vmatprep.subr.bf16.mxu0 %v688
    %854 = vmatpush1.bf16.msra.mxu0 %v687
    %855 = vmatprep.subr.bf16.mxu0 %v684
    %856 = vmatpush1.bf16.msra.mxu0 %v683
    %857 = vmatprep.subr.bf16.mxu0 %v680
    %858 = vmatpush1.bf16.msra.mxu0 %v679
    %859 = vmatprep.subr.bf16.mxu0 %v676
    %860 = vmatpush1.bf16.msra.mxu0 %v675
    %861 = vmatprep.subr.bf16.mxu0 %v672
    %862 = vmatpush1.bf16.msra.mxu0 %v671
    %863 = vmatprep.subr.bf16.mxu0 %v668
    %864 = vmatpush1.bf16.msra.mxu0 %v667
    %865 = vmatprep.subr.bf16.mxu0 %v664
    %866 = vmatpush1.bf16.msra.mxu0 %v663
    %867 = vmatprep.subr.bf16.mxu0 %v724
    %868 = vmatpush2.bf16.msra.mxu0 %v723
    %869 = vmatprep.subr.bf16.mxu0 %v720
    %870 = vmatpush2.bf16.msra.mxu0 %v719
    %871 = vmatprep.subr.bf16.mxu0 %v716
    %872 = vmatpush2.bf16.msra.mxu0 %v715
    %873 = vmatprep.subr.bf16.mxu0 %v712
    %874 = vmatpush2.bf16.msra.mxu0 %v711
    %875 = vmatprep.subr.bf16.mxu0 %v708
    %876 = vmatpush2.bf16.msra.mxu0 %v707
    %877 = vmatprep.subr.bf16.mxu0 %v704
    %878 = vmatpush2.bf16.msra.mxu0 %v703
    %879 = vmatprep.subr.bf16.mxu0 %v700
    %880 = vmatpush2.bf16.msra.mxu0 %v699
    %881 = vmatprep.subr.bf16.mxu0 %v696
    %882 = vmatpush2.bf16.msra.mxu0 %v695
    %883 = vmatprep.mubr.bf16.mxu0 %v403
    %884 = vmatmul.mubr.bf16.gmra.mxu0 %v402
    %v885 = vpop.f32.mrf.mxu0
    %v886 = vadd.f32 %v801, %v885
    %v887 = vpop.f32.mrf.mxu0
    %v888 = vadd.f32 %v805, %v887
    %v889 = vpop.f32.mrf.mxu0
    %v890 = vpop.f32.mrf.mxu0
    %891 = vdwg.mxu0
    %v892 = vmax.f32 %v845, 0.0
    %v893 = vmax.f32 %v847, 0.0
    %v894 = vmax.f32 %v886, 0.0
    %v895 = vmax.f32 %v888, 0.0
    %v896 = vpack.c.bf16 %v892, %v892
    %v897 = vpack.c.bf16 %v893, %v893
    %v898 = vpack.c.bf16 %v894, %v894
    %v899 = vpack.c.bf16 %v895, %v895
    %v900 = vld [vmem:[#allocation13] sm:$0xff]
    %v901 = vld [vmem:[#allocation13 + $0x8] sm:$0xff]
    %v902 = vld [vmem:[#allocation13 + $0x10] sm:$0xff]
    %v903 = vld [vmem:[#allocation13 + $0x18] sm:$0xff]
    %v904 = vld [vmem:[#allocation13 + $0x20] sm:$0xff]
    %v905 = vld [vmem:[#allocation13 + $0x28] sm:$0xff]
    %v906 = vld [vmem:[#allocation13 + $0x30] sm:$0xff]
    %v907 = vld [vmem:[#allocation13 + $0x38] sm:$0xff]
    %v908 = vld [vmem:[#allocation13 + $0x40] sm:$0xff]
    %v909 = vld [vmem:[#allocation13 + $0x48] sm:$0xff]
    %v910 = vld [vmem:[#allocation13 + $0x50] sm:$0xff]
    %v911 = vld [vmem:[#allocation13 + $0x58] sm:$0xff]
    %v912 = vld [vmem:[#allocation13 + $0x60] sm:$0xff]
    %v913 = vld [vmem:[#allocation13 + $0x68] sm:$0xff]
    %v914 = vld [vmem:[#allocation13 + $0x70] sm:$0xff]
    %v915 = vld [vmem:[#allocation13 + $0x78] sm:$0xff]
    %v916 = vld [vmem:[#allocation13 + $0x80] sm:$0xff]
    %v917 = vld [vmem:[#allocation13 + $0x88] sm:$0xff]
    %v918 = vld [vmem:[#allocation13 + $0x90] sm:$0xff]
    %v919 = vld [vmem:[#allocation13 + $0x98] sm:$0xff]
    %v920 = vld [vmem:[#allocation13 + $0xa0] sm:$0xff]
    %v921 = vld [vmem:[#allocation13 + $0xa8] sm:$0xff]
    %v922 = vld [vmem:[#allocation13 + $0xb0] sm:$0xff]
    %v923 = vld [vmem:[#allocation13 + $0xb8] sm:$0xff]
    %v924 = vld [vmem:[#allocation13 + $0xc0] sm:$0xff]
    %v925 = vld [vmem:[#allocation13 + $0xc8] sm:$0xff]
    %v926 = vld [vmem:[#allocation13 + $0xd0] sm:$0xff]
    %v927 = vld [vmem:[#allocation13 + $0xd8] sm:$0xff]
    %v928 = vld [vmem:[#allocation13 + $0xe0] sm:$0xff]
    %v929 = vld [vmem:[#allocation13 + $0xe8] sm:$0xff]
    %v930 = vld [vmem:[#allocation13 + $0xf0] sm:$0xff]
    %v931 = vld [vmem:[#allocation13 + $0xf8] sm:$0xff]
    %v932 = vld [vmem:[#allocation13 + $0x100] sm:$0xff]
    %v933 = vld [vmem:[#allocation13 + $0x108] sm:$0xff]
    %v934 = vld [vmem:[#allocation13 + $0x110] sm:$0xff]
    %v935 = vld [vmem:[#allocation13 + $0x118] sm:$0xff]
    %v936 = vld [vmem:[#allocation13 + $0x120] sm:$0xff]
    %v937 = vld [vmem:[#allocation13 + $0x128] sm:$0xff]
    %v938 = vld [vmem:[#allocation13 + $0x130] sm:$0xff]
    %v939 = vld [vmem:[#allocation13 + $0x138] sm:$0xff]
    %v940 = vld [vmem:[#allocation13 + $0x140] sm:$0xff]
    %v941 = vld [vmem:[#allocation13 + $0x148] sm:$0xff]
    %v942 = vld [vmem:[#allocation13 + $0x150] sm:$0xff]
    %v943 = vld [vmem:[#allocation13 + $0x158] sm:$0xff]
    %v944 = vld [vmem:[#allocation13 + $0x160] sm:$0xff]
    %v945 = vld [vmem:[#allocation13 + $0x168] sm:$0xff]
    %v946 = vld [vmem:[#allocation13 + $0x170] sm:$0xff]
    %v947 = vld [vmem:[#allocation13 + $0x178] sm:$0xff]
    %v948 = vld [vmem:[#allocation13 + $0x180] sm:$0xff]
    %v949 = vld [vmem:[#allocation13 + $0x188] sm:$0xff]
    %v950 = vld [vmem:[#allocation13 + $0x190] sm:$0xff]
    %v951 = vld [vmem:[#allocation13 + $0x198] sm:$0xff]
    %v952 = vld [vmem:[#allocation13 + $0x1a0] sm:$0xff]
    %v953 = vld [vmem:[#allocation13 + $0x1a8] sm:$0xff]
    %v954 = vld [vmem:[#allocation13 + $0x1b0] sm:$0xff]
    %v955 = vld [vmem:[#allocation13 + $0x1b8] sm:$0xff]
    %v956 = vld [vmem:[#allocation13 + $0x1c0] sm:$0xff]
    %v957 = vld [vmem:[#allocation13 + $0x1c8] sm:$0xff]
    %v958 = vld [vmem:[#allocation13 + $0x1d0] sm:$0xff]
    %v959 = vld [vmem:[#allocation13 + $0x1d8] sm:$0xff]
    %v960 = vld [vmem:[#allocation13 + $0x1e0] sm:$0xff]
    %v961 = vld [vmem:[#allocation13 + $0x1e8] sm:$0xff]
    %v962 = vld [vmem:[#allocation13 + $0x1f0] sm:$0xff]
    %v963 = vld [vmem:[#allocation13 + $0x1f8] sm:$0xff]
    %v964 = vld [vmem:[#allocation13 + $0x200] sm:$0xff]
    %v965 = vld [vmem:[#allocation13 + $0x208] sm:$0xff]
    %v966 = vld [vmem:[#allocation13 + $0x210] sm:$0xff]
    %v967 = vld [vmem:[#allocation13 + $0x218] sm:$0xff]
    %v968 = vld [vmem:[#allocation13 + $0x220] sm:$0xff]
    %v969 = vld [vmem:[#allocation13 + $0x228] sm:$0xff]
    %v970 = vld [vmem:[#allocation13 + $0x230] sm:$0xff]
    %v971 = vld [vmem:[#allocation13 + $0x238] sm:$0xff]
    %v972 = vld [vmem:[#allocation13 + $0x240] sm:$0xff]
    %v973 = vld [vmem:[#allocation13 + $0x248] sm:$0xff]
    %v974 = vld [vmem:[#allocation13 + $0x250] sm:$0xff]
    %v975 = vld [vmem:[#allocation13 + $0x258] sm:$0xff]
    %v976 = vld [vmem:[#allocation13 + $0x260] sm:$0xff]
    %v977 = vld [vmem:[#allocation13 + $0x268] sm:$0xff]
    %v978 = vld [vmem:[#allocation13 + $0x270] sm:$0xff]
    %v979 = vld [vmem:[#allocation13 + $0x278] sm:$0xff]
    %v980 = vld [vmem:[#allocation13 + $0x280] sm:$0xff]
    %v981 = vld [vmem:[#allocation13 + $0x288] sm:$0xff]
    %v982 = vld [vmem:[#allocation13 + $0x290] sm:$0xff]
    %v983 = vld [vmem:[#allocation13 + $0x298] sm:$0xff]
    %v984 = vld [vmem:[#allocation13 + $0x2a0] sm:$0xff]
    %v985 = vld [vmem:[#allocation13 + $0x2a8] sm:$0xff]
    %v986 = vld [vmem:[#allocation13 + $0x2b0] sm:$0xff]
    %v987 = vld [vmem:[#allocation13 + $0x2b8] sm:$0xff]
    %v988 = vld [vmem:[#allocation13 + $0x2c0] sm:$0xff]
    %v989 = vld [vmem:[#allocation13 + $0x2c8] sm:$0xff]
    %v990 = vld [vmem:[#allocation13 + $0x2d0] sm:$0xff]
    %v991 = vld [vmem:[#allocation13 + $0x2d8] sm:$0xff]
    %v992 = vld [vmem:[#allocation13 + $0x2e0] sm:$0xff]
    %v993 = vld [vmem:[#allocation13 + $0x2e8] sm:$0xff]
    %v994 = vld [vmem:[#allocation13 + $0x2f0] sm:$0xff]
    %v995 = vld [vmem:[#allocation13 + $0x2f8] sm:$0xff]
    %v996 = vld [vmem:[#allocation13 + $0x300] sm:$0xff]
    %v997 = vld [vmem:[#allocation13 + $0x308] sm:$0xff]
    %v998 = vld [vmem:[#allocation13 + $0x310] sm:$0xff]
    %v999 = vld [vmem:[#allocation13 + $0x318] sm:$0xff]
    %v1000 = vld [vmem:[#allocation13 + $0x320] sm:$0xff]
    %v1001 = vld [vmem:[#allocation13 + $0x328] sm:$0xff]
    %v1002 = vld [vmem:[#allocation13 + $0x330] sm:$0xff]
    %v1003 = vld [vmem:[#allocation13 + $0x338] sm:$0xff]
    %v1004 = vld [vmem:[#allocation13 + $0x340] sm:$0xff]
    %v1005 = vld [vmem:[#allocation13 + $0x348] sm:$0xff]
    %v1006 = vld [vmem:[#allocation13 + $0x350] sm:$0xff]
    %v1007 = vld [vmem:[#allocation13 + $0x358] sm:$0xff]
    %v1008 = vld [vmem:[#allocation13 + $0x360] sm:$0xff]
    %v1009 = vld [vmem:[#allocation13 + $0x368] sm:$0xff]
    %v1010 = vld [vmem:[#allocation13 + $0x370] sm:$0xff]
    %v1011 = vld [vmem:[#allocation13 + $0x378] sm:$0xff]
    %v1012 = vld [vmem:[#allocation13 + $0x380] sm:$0xff]
    %v1013 = vld [vmem:[#allocation13 + $0x388] sm:$0xff]
    %v1014 = vld [vmem:[#allocation13 + $0x390] sm:$0xff]
    %v1015 = vld [vmem:[#allocation13 + $0x398] sm:$0xff]
    %v1016 = vld [vmem:[#allocation13 + $0x3a0] sm:$0xff]
    %v1017 = vld [vmem:[#allocation13 + $0x3a8] sm:$0xff]
    %v1018 = vld [vmem:[#allocation13 + $0x3b0] sm:$0xff]
    %v1019 = vld [vmem:[#allocation13 + $0x3b8] sm:$0xff]
    %v1020 = vld [vmem:[#allocation13 + $0x3c0] sm:$0xff]
    %v1021 = vld [vmem:[#allocation13 + $0x3c8] sm:$0xff]
    %v1022 = vld [vmem:[#allocation13 + $0x3d0] sm:$0xff]
    %v1023 = vld [vmem:[#allocation13 + $0x3d8] sm:$0xff]
    %v1024 = vld [vmem:[#allocation13 + $0x3e0] sm:$0xff]
    %v1025 = vld [vmem:[#allocation13 + $0x3e8] sm:$0xff]
    %v1026 = vld [vmem:[#allocation13 + $0x3f0] sm:$0xff]
    %v1027 = vld [vmem:[#allocation13 + $0x3f8] sm:$0xff]
    %v1028 = vld [vmem:[#allocation13 + $0x400] sm:$0xff]
    %v1029 = vld [vmem:[#allocation13 + $0x408] sm:$0xff]
    %v1030 = vld [vmem:[#allocation13 + $0x410] sm:$0xff]
    %v1031 = vld [vmem:[#allocation13 + $0x418] sm:$0xff]
    %v1032 = vld [vmem:[#allocation13 + $0x420] sm:$0xff]
    %v1033 = vld [vmem:[#allocation13 + $0x428] sm:$0xff]
    %v1034 = vld [vmem:[#allocation13 + $0x430] sm:$0xff]
    %v1035 = vld [vmem:[#allocation13 + $0x438] sm:$0xff]
    %v1036 = vld [vmem:[#allocation13 + $0x440] sm:$0xff]
    %v1037 = vld [vmem:[#allocation13 + $0x448] sm:$0xff]
    %v1038 = vld [vmem:[#allocation13 + $0x450] sm:$0xff]
    %v1039 = vld [vmem:[#allocation13 + $0x458] sm:$0xff]
    %v1040 = vld [vmem:[#allocation13 + $0x460] sm:$0xff]
    %v1041 = vld [vmem:[#allocation13 + $0x468] sm:$0xff]
    %v1042 = vld [vmem:[#allocation13 + $0x470] sm:$0xff]
    %v1043 = vld [vmem:[#allocation13 + $0x478] sm:$0xff]
    %v1044 = vld [vmem:[#allocation13 + $0x480] sm:$0xff]
    %v1045 = vld [vmem:[#allocation13 + $0x488] sm:$0xff]
    %v1046 = vld [vmem:[#allocation13 + $0x490] sm:$0xff]
    %v1047 = vld [vmem:[#allocation13 + $0x498] sm:$0xff]
    %v1048 = vld [vmem:[#allocation13 + $0x4a0] sm:$0xff]
    %v1049 = vld [vmem:[#allocation13 + $0x4a8] sm:$0xff]
    %v1050 = vld [vmem:[#allocation13 + $0x4b0] sm:$0xff]
    %v1051 = vld [vmem:[#allocation13 + $0x4b8] sm:$0xff]
    %v1052 = vld [vmem:[#allocation13 + $0x4c0] sm:$0xff]
    %v1053 = vld [vmem:[#allocation13 + $0x4c8] sm:$0xff]
    %v1054 = vld [vmem:[#allocation13 + $0x4d0] sm:$0xff]
    %v1055 = vld [vmem:[#allocation13 + $0x4d8] sm:$0xff]
    %v1056 = vld [vmem:[#allocation13 + $0x4e0] sm:$0xff]
    %v1057 = vld [vmem:[#allocation13 + $0x4e8] sm:$0xff]
    %v1058 = vld [vmem:[#allocation13 + $0x4f0] sm:$0xff]
    %v1059 = vld [vmem:[#allocation13 + $0x4f8] sm:$0xff]
    %v1060 = vld [vmem:[#allocation13 + $0x500] sm:$0xff]
    %v1061 = vld [vmem:[#allocation13 + $0x508] sm:$0xff]
    %v1062 = vld [vmem:[#allocation13 + $0x510] sm:$0xff]
    %v1063 = vld [vmem:[#allocation13 + $0x518] sm:$0xff]
    %v1064 = vld [vmem:[#allocation13 + $0x520] sm:$0xff]
    %v1065 = vld [vmem:[#allocation13 + $0x528] sm:$0xff]
    %v1066 = vld [vmem:[#allocation13 + $0x530] sm:$0xff]
    %v1067 = vld [vmem:[#allocation13 + $0x538] sm:$0xff]
    %v1068 = vld [vmem:[#allocation13 + $0x540] sm:$0xff]
    %v1069 = vld [vmem:[#allocation13 + $0x548] sm:$0xff]
    %v1070 = vld [vmem:[#allocation13 + $0x550] sm:$0xff]
    %v1071 = vld [vmem:[#allocation13 + $0x558] sm:$0xff]
    %v1072 = vld [vmem:[#allocation13 + $0x560] sm:$0xff]
    %v1073 = vld [vmem:[#allocation13 + $0x568] sm:$0xff]
    %v1074 = vld [vmem:[#allocation13 + $0x570] sm:$0xff]
    %v1075 = vld [vmem:[#allocation13 + $0x578] sm:$0xff]
    %v1076 = vld [vmem:[#allocation13 + $0x580] sm:$0xff]
    %v1077 = vld [vmem:[#allocation13 + $0x588] sm:$0xff]
    %v1078 = vld [vmem:[#allocation13 + $0x590] sm:$0xff]
    %v1079 = vld [vmem:[#allocation13 + $0x598] sm:$0xff]
    %v1080 = vld [vmem:[#allocation13 + $0x5a0] sm:$0xff]
    %v1081 = vld [vmem:[#allocation13 + $0x5a8] sm:$0xff]
    %v1082 = vld [vmem:[#allocation13 + $0x5b0] sm:$0xff]
    %v1083 = vld [vmem:[#allocation13 + $0x5b8] sm:$0xff]
    %v1084 = vld [vmem:[#allocation13 + $0x5c0] sm:$0xff]
    %v1085 = vld [vmem:[#allocation13 + $0x5c8] sm:$0xff]
    %v1086 = vld [vmem:[#allocation13 + $0x5d0] sm:$0xff]
    %v1087 = vld [vmem:[#allocation13 + $0x5d8] sm:$0xff]
    %v1088 = vld [vmem:[#allocation13 + $0x5e0] sm:$0xff]
    %v1089 = vld [vmem:[#allocation13 + $0x5e8] sm:$0xff]
    %v1090 = vld [vmem:[#allocation13 + $0x5f0] sm:$0xff]
    %v1091 = vld [vmem:[#allocation13 + $0x5f8] sm:$0xff]
    %v1092 = vld [vmem:[#allocation13 + $0x600] sm:$0xff]
    %v1093 = vld [vmem:[#allocation13 + $0x608] sm:$0xff]
    %v1094 = vld [vmem:[#allocation13 + $0x610] sm:$0xff]
    %v1095 = vld [vmem:[#allocation13 + $0x618] sm:$0xff]
    %v1096 = vld [vmem:[#allocation13 + $0x620] sm:$0xff]
    %v1097 = vld [vmem:[#allocation13 + $0x628] sm:$0xff]
    %v1098 = vld [vmem:[#allocation13 + $0x630] sm:$0xff]
    %v1099 = vld [vmem:[#allocation13 + $0x638] sm:$0xff]
    %v1100 = vld [vmem:[#allocation13 + $0x640] sm:$0xff]
    %v1101 = vld [vmem:[#allocation13 + $0x648] sm:$0xff]
    %v1102 = vld [vmem:[#allocation13 + $0x650] sm:$0xff]
    %v1103 = vld [vmem:[#allocation13 + $0x658] sm:$0xff]
    %v1104 = vld [vmem:[#allocation13 + $0x660] sm:$0xff]
    %v1105 = vld [vmem:[#allocation13 + $0x668] sm:$0xff]
    %v1106 = vld [vmem:[#allocation13 + $0x670] sm:$0xff]
    %v1107 = vld [vmem:[#allocation13 + $0x678] sm:$0xff]
    %v1108 = vld [vmem:[#allocation13 + $0x680] sm:$0xff]
    %v1109 = vld [vmem:[#allocation13 + $0x688] sm:$0xff]
    %v1110 = vld [vmem:[#allocation13 + $0x690] sm:$0xff]
    %v1111 = vld [vmem:[#allocation13 + $0x698] sm:$0xff]
    %v1112 = vld [vmem:[#allocation13 + $0x6a0] sm:$0xff]
    %v1113 = vld [vmem:[#allocation13 + $0x6a8] sm:$0xff]
    %v1114 = vld [vmem:[#allocation13 + $0x6b0] sm:$0xff]
    %v1115 = vld [vmem:[#allocation13 + $0x6b8] sm:$0xff]
    %v1116 = vld [vmem:[#allocation13 + $0x6c0] sm:$0xff]
    %v1117 = vld [vmem:[#allocation13 + $0x6c8] sm:$0xff]
    %v1118 = vld [vmem:[#allocation13 + $0x6d0] sm:$0xff]
    %v1119 = vld [vmem:[#allocation13 + $0x6d8] sm:$0xff]
    %v1120 = vld [vmem:[#allocation13 + $0x6e0] sm:$0xff]
    %v1121 = vld [vmem:[#allocation13 + $0x6e8] sm:$0xff]
    %v1122 = vld [vmem:[#allocation13 + $0x6f0] sm:$0xff]
    %v1123 = vld [vmem:[#allocation13 + $0x6f8] sm:$0xff]
    %v1124 = vld [vmem:[#allocation13 + $0x700] sm:$0xff]
    %v1125 = vld [vmem:[#allocation13 + $0x708] sm:$0xff]
    %v1126 = vld [vmem:[#allocation13 + $0x710] sm:$0xff]
    %v1127 = vld [vmem:[#allocation13 + $0x718] sm:$0xff]
    %v1128 = vld [vmem:[#allocation13 + $0x720] sm:$0xff]
    %v1129 = vld [vmem:[#allocation13 + $0x728] sm:$0xff]
    %v1130 = vld [vmem:[#allocation13 + $0x730] sm:$0xff]
    %v1131 = vld [vmem:[#allocation13 + $0x738] sm:$0xff]
    %v1132 = vld [vmem:[#allocation13 + $0x740] sm:$0xff]
    %v1133 = vld [vmem:[#allocation13 + $0x748] sm:$0xff]
    %v1134 = vld [vmem:[#allocation13 + $0x750] sm:$0xff]
    %v1135 = vld [vmem:[#allocation13 + $0x758] sm:$0xff]
    %v1136 = vld [vmem:[#allocation13 + $0x760] sm:$0xff]
    %v1137 = vld [vmem:[#allocation13 + $0x768] sm:$0xff]
    %v1138 = vld [vmem:[#allocation13 + $0x770] sm:$0xff]
    %v1139 = vld [vmem:[#allocation13 + $0x778] sm:$0xff]
    %v1140 = vld [vmem:[#allocation13 + $0x780] sm:$0xff]
    %v1141 = vld [vmem:[#allocation13 + $0x788] sm:$0xff]
    %v1142 = vld [vmem:[#allocation13 + $0x790] sm:$0xff]
    %v1143 = vld [vmem:[#allocation13 + $0x798] sm:$0xff]
    %v1144 = vld [vmem:[#allocation13 + $0x7a0] sm:$0xff]
    %v1145 = vld [vmem:[#allocation13 + $0x7a8] sm:$0xff]
    %v1146 = vld [vmem:[#allocation13 + $0x7b0] sm:$0xff]
    %v1147 = vld [vmem:[#allocation13 + $0x7b8] sm:$0xff]
    %v1148 = vld [vmem:[#allocation13 + $0x7c0] sm:$0xff]
    %v1149 = vld [vmem:[#allocation13 + $0x7c8] sm:$0xff]
    %v1150 = vld [vmem:[#allocation13 + $0x7d0] sm:$0xff]
    %v1151 = vld [vmem:[#allocation13 + $0x7d8] sm:$0xff]
    %v1152 = vld [vmem:[#allocation13 + $0x7e0] sm:$0xff]
    %v1153 = vld [vmem:[#allocation13 + $0x7e8] sm:$0xff]
    %v1154 = vld [vmem:[#allocation13 + $0x7f0] sm:$0xff]
    %v1155 = vld [vmem:[#allocation13 + $0x7f8] sm:$0xff]
    %v1156 = vld [vmem:[#allocation15] sm:$0xff]
    %v1413 = vunpack.c.l.b16 %v900
    %v1414 = vunpack.c.h.b16 %v900
    %v1415 = vunpack.c.l.b16 %v901
    %v1416 = vunpack.c.h.b16 %v901
    %v1417 = vunpack.c.l.b16 %v902
    %v1418 = vunpack.c.h.b16 %v902
    %v1419 = vunpack.c.l.b16 %v903
    %v1420 = vunpack.c.h.b16 %v903
    %v1421 = vunpack.c.l.b16 %v904
    %v1422 = vunpack.c.h.b16 %v904
    %v1423 = vunpack.c.l.b16 %v905
    %v1424 = vunpack.c.h.b16 %v905
    %v1425 = vunpack.c.l.b16 %v906
    %v1426 = vunpack.c.h.b16 %v906
    %v1427 = vunpack.c.l.b16 %v907
    %v1428 = vunpack.c.h.b16 %v907
    %v1429 = vunpack.c.l.b16 %v908
    %v1430 = vunpack.c.h.b16 %v908
    %v1431 = vunpack.c.l.b16 %v909
    %v1432 = vunpack.c.h.b16 %v909
    %v1433 = vunpack.c.l.b16 %v910
    %v1434 = vunpack.c.h.b16 %v910
    %v1435 = vunpack.c.l.b16 %v911
    %v1436 = vunpack.c.h.b16 %v911
    %v1437 = vunpack.c.l.b16 %v912
    %v1438 = vunpack.c.h.b16 %v912
    %v1439 = vunpack.c.l.b16 %v913
    %v1440 = vunpack.c.h.b16 %v913
    %v1441 = vunpack.c.l.b16 %v914
    %v1442 = vunpack.c.h.b16 %v914
    %v1443 = vunpack.c.l.b16 %v915
    %v1444 = vunpack.c.h.b16 %v915
    %v1445 = vunpack.c.l.b16 %v916
    %v1446 = vunpack.c.h.b16 %v916
    %v1447 = vunpack.c.l.b16 %v917
    %v1448 = vunpack.c.h.b16 %v917
    %v1449 = vunpack.c.l.b16 %v918
    %v1450 = vunpack.c.h.b16 %v918
    %v1451 = vunpack.c.l.b16 %v919
    %v1452 = vunpack.c.h.b16 %v919
    %v1453 = vunpack.c.l.b16 %v920
    %v1454 = vunpack.c.h.b16 %v920
    %v1455 = vunpack.c.l.b16 %v921
    %v1456 = vunpack.c.h.b16 %v921
    %v1457 = vunpack.c.l.b16 %v922
    %v1458 = vunpack.c.h.b16 %v922
    %v1459 = vunpack.c.l.b16 %v923
    %v1460 = vunpack.c.h.b16 %v923
    %v1461 = vunpack.c.l.b16 %v924
    %v1462 = vunpack.c.h.b16 %v924
    %v1463 = vunpack.c.l.b16 %v925
    %v1464 = vunpack.c.h.b16 %v925
    %v1465 = vunpack.c.l.b16 %v926
    %v1466 = vunpack.c.h.b16 %v926
    %v1467 = vunpack.c.l.b16 %v927
    %v1468 = vunpack.c.h.b16 %v927
    %v1469 = vunpack.c.l.b16 %v928
    %v1470 = vunpack.c.h.b16 %v928
    %v1471 = vunpack.c.l.b16 %v929
    %v1472 = vunpack.c.h.b16 %v929
    %v1473 = vunpack.c.l.b16 %v930
    %v1474 = vunpack.c.h.b16 %v930
    %v1475 = vunpack.c.l.b16 %v931
    %v1476 = vunpack.c.h.b16 %v931
    %v1477 = vunpack.c.l.b16 %v932
    %v1478 = vunpack.c.h.b16 %v932
    %v1479 = vunpack.c.l.b16 %v933
    %v1480 = vunpack.c.h.b16 %v933
    %v1481 = vunpack.c.l.b16 %v934
    %v1482 = vunpack.c.h.b16 %v934
    %v1483 = vunpack.c.l.b16 %v935
    %v1484 = vunpack.c.h.b16 %v935
    %v1485 = vunpack.c.l.b16 %v936
    %v1486 = vunpack.c.h.b16 %v936
    %v1487 = vunpack.c.l.b16 %v937
    %v1488 = vunpack.c.h.b16 %v937
    %v1489 = vunpack.c.l.b16 %v938
    %v1490 = vunpack.c.h.b16 %v938
    %v1491 = vunpack.c.l.b16 %v939
    %v1492 = vunpack.c.h.b16 %v939
    %v1493 = vunpack.c.l.b16 %v940
    %v1494 = vunpack.c.h.b16 %v940
    %v1495 = vunpack.c.l.b16 %v941
    %v1496 = vunpack.c.h.b16 %v941
    %v1497 = vunpack.c.l.b16 %v942
    %v1498 = vunpack.c.h.b16 %v942
    %v1499 = vunpack.c.l.b16 %v943
    %v1500 = vunpack.c.h.b16 %v943
    %v1501 = vunpack.c.l.b16 %v944
    %v1502 = vunpack.c.h.b16 %v944
    %v1503 = vunpack.c.l.b16 %v945
    %v1504 = vunpack.c.h.b16 %v945
    %v1505 = vunpack.c.l.b16 %v946
    %v1506 = vunpack.c.h.b16 %v946
    %v1507 = vunpack.c.l.b16 %v947
    %v1508 = vunpack.c.h.b16 %v947
    %v1509 = vunpack.c.l.b16 %v948
    %v1510 = vunpack.c.h.b16 %v948
    %v1511 = vunpack.c.l.b16 %v949
    %v1512 = vunpack.c.h.b16 %v949
    %v1513 = vunpack.c.l.b16 %v950
    %v1514 = vunpack.c.h.b16 %v950
    %v1515 = vunpack.c.l.b16 %v951
    %v1516 = vunpack.c.h.b16 %v951
    %v1517 = vunpack.c.l.b16 %v952
    %v1518 = vunpack.c.h.b16 %v952
    %v1519 = vunpack.c.l.b16 %v953
    %v1520 = vunpack.c.h.b16 %v953
    %v1521 = vunpack.c.l.b16 %v954
    %v1522 = vunpack.c.h.b16 %v954
    %v1523 = vunpack.c.l.b16 %v955
    %v1524 = vunpack.c.h.b16 %v955
    %v1525 = vunpack.c.l.b16 %v956
    %v1526 = vunpack.c.h.b16 %v956
    %v1527 = vunpack.c.l.b16 %v957
    %v1528 = vunpack.c.h.b16 %v957
    %v1529 = vunpack.c.l.b16 %v958
    %v1530 = vunpack.c.h.b16 %v958
    %v1531 = vunpack.c.l.b16 %v959
    %v1532 = vunpack.c.h.b16 %v959
    %v1533 = vunpack.c.l.b16 %v960
    %v1534 = vunpack.c.h.b16 %v960
    %v1535 = vunpack.c.l.b16 %v961
    %v1536 = vunpack.c.h.b16 %v961
    %v1537 = vunpack.c.l.b16 %v962
    %v1538 = vunpack.c.h.b16 %v962
    %v1539 = vunpack.c.l.b16 %v963
    %v1540 = vunpack.c.h.b16 %v963
    %v1541 = vunpack.c.l.b16 %v964
    %v1542 = vunpack.c.h.b16 %v964
    %v1543 = vunpack.c.l.b16 %v965
    %v1544 = vunpack.c.h.b16 %v965
    %v1545 = vunpack.c.l.b16 %v966
    %v1546 = vunpack.c.h.b16 %v966
    %v1547 = vunpack.c.l.b16 %v967
    %v1548 = vunpack.c.h.b16 %v967
    %v1549 = vunpack.c.l.b16 %v968
    %v1550 = vunpack.c.h.b16 %v968
    %v1551 = vunpack.c.l.b16 %v969
    %v1552 = vunpack.c.h.b16 %v969
    %v1553 = vunpack.c.l.b16 %v970
    %v1554 = vunpack.c.h.b16 %v970
    %v1555 = vunpack.c.l.b16 %v971
    %v1556 = vunpack.c.h.b16 %v971
    %v1557 = vunpack.c.l.b16 %v972
    %v1558 = vunpack.c.h.b16 %v972
    %v1559 = vunpack.c.l.b16 %v973
    %v1560 = vunpack.c.h.b16 %v973
    %v1561 = vunpack.c.l.b16 %v974
    %v1562 = vunpack.c.h.b16 %v974
    %v1563 = vunpack.c.l.b16 %v975
    %v1564 = vunpack.c.h.b16 %v975
    %v1565 = vunpack.c.l.b16 %v976
    %v1566 = vunpack.c.h.b16 %v976
    %v1567 = vunpack.c.l.b16 %v977
    %v1568 = vunpack.c.h.b16 %v977
    %v1569 = vunpack.c.l.b16 %v978
    %v1570 = vunpack.c.h.b16 %v978
    %v1571 = vunpack.c.l.b16 %v979
    %v1572 = vunpack.c.h.b16 %v979
    %v1573 = vunpack.c.l.b16 %v980
    %v1574 = vunpack.c.h.b16 %v980
    %v1575 = vunpack.c.l.b16 %v981
    %v1576 = vunpack.c.h.b16 %v981
    %v1577 = vunpack.c.l.b16 %v982
    %v1578 = vunpack.c.h.b16 %v982
    %v1579 = vunpack.c.l.b16 %v983
    %v1580 = vunpack.c.h.b16 %v983
    %v1581 = vunpack.c.l.b16 %v984
    %v1582 = vunpack.c.h.b16 %v984
    %v1583 = vunpack.c.l.b16 %v985
    %v1584 = vunpack.c.h.b16 %v985
    %v1585 = vunpack.c.l.b16 %v986
    %v1586 = vunpack.c.h.b16 %v986
    %v1587 = vunpack.c.l.b16 %v987
    %v1588 = vunpack.c.h.b16 %v987
    %v1589 = vunpack.c.l.b16 %v988
    %v1590 = vunpack.c.h.b16 %v988
    %v1591 = vunpack.c.l.b16 %v989
    %v1592 = vunpack.c.h.b16 %v989
    %v1593 = vunpack.c.l.b16 %v990
    %v1594 = vunpack.c.h.b16 %v990
    %v1595 = vunpack.c.l.b16 %v991
    %v1596 = vunpack.c.h.b16 %v991
    %v1597 = vunpack.c.l.b16 %v992
    %v1598 = vunpack.c.h.b16 %v992
    %v1599 = vunpack.c.l.b16 %v993
    %v1600 = vunpack.c.h.b16 %v993
    %v1601 = vunpack.c.l.b16 %v994
    %v1602 = vunpack.c.h.b16 %v994
    %v1603 = vunpack.c.l.b16 %v995
    %v1604 = vunpack.c.h.b16 %v995
    %v1605 = vunpack.c.l.b16 %v996
    %v1606 = vunpack.c.h.b16 %v996
    %v1607 = vunpack.c.l.b16 %v997
    %v1608 = vunpack.c.h.b16 %v997
    %v1609 = vunpack.c.l.b16 %v998
    %v1610 = vunpack.c.h.b16 %v998
    %v1611 = vunpack.c.l.b16 %v999
    %v1612 = vunpack.c.h.b16 %v999
    %v1613 = vunpack.c.l.b16 %v1000
    %v1614 = vunpack.c.h.b16 %v1000
    %v1615 = vunpack.c.l.b16 %v1001
    %v1616 = vunpack.c.h.b16 %v1001
    %v1617 = vunpack.c.l.b16 %v1002
    %v1618 = vunpack.c.h.b16 %v1002
    %v1619 = vunpack.c.l.b16 %v1003
    %v1620 = vunpack.c.h.b16 %v1003
    %v1621 = vunpack.c.l.b16 %v1004
    %v1622 = vunpack.c.h.b16 %v1004
    %v1623 = vunpack.c.l.b16 %v1005
    %v1624 = vunpack.c.h.b16 %v1005
    %v1625 = vunpack.c.l.b16 %v1006
    %v1626 = vunpack.c.h.b16 %v1006
    %v1627 = vunpack.c.l.b16 %v1007
    %v1628 = vunpack.c.h.b16 %v1007
    %v1629 = vunpack.c.l.b16 %v1008
    %v1630 = vunpack.c.h.b16 %v1008
    %v1631 = vunpack.c.l.b16 %v1009
    %v1632 = vunpack.c.h.b16 %v1009
    %v1633 = vunpack.c.l.b16 %v1010
    %v1634 = vunpack.c.h.b16 %v1010
    %v1635 = vunpack.c.l.b16 %v1011
    %v1636 = vunpack.c.h.b16 %v1011
    %v1637 = vunpack.c.l.b16 %v1012
    %v1638 = vunpack.c.h.b16 %v1012
    %v1639 = vunpack.c.l.b16 %v1013
    %v1640 = vunpack.c.h.b16 %v1013
    %v1641 = vunpack.c.l.b16 %v1014
    %v1642 = vunpack.c.h.b16 %v1014
    %v1643 = vunpack.c.l.b16 %v1015
    %v1644 = vunpack.c.h.b16 %v1015
    %v1645 = vunpack.c.l.b16 %v1016
    %v1646 = vunpack.c.h.b16 %v1016
    %v1647 = vunpack.c.l.b16 %v1017
    %v1648 = vunpack.c.h.b16 %v1017
    %v1649 = vunpack.c.l.b16 %v1018
    %v1650 = vunpack.c.h.b16 %v1018
    %v1651 = vunpack.c.l.b16 %v1019
    %v1652 = vunpack.c.h.b16 %v1019
    %v1653 = vunpack.c.l.b16 %v1020
    %v1654 = vunpack.c.h.b16 %v1020
    %v1655 = vunpack.c.l.b16 %v1021
    %v1656 = vunpack.c.h.b16 %v1021
    %v1657 = vunpack.c.l.b16 %v1022
    %v1658 = vunpack.c.h.b16 %v1022
    %v1659 = vunpack.c.l.b16 %v1023
    %v1660 = vunpack.c.h.b16 %v1023
    %v1661 = vunpack.c.l.b16 %v1024
    %v1662 = vunpack.c.h.b16 %v1024
    %v1663 = vunpack.c.l.b16 %v1025
    %v1664 = vunpack.c.h.b16 %v1025
    %v1665 = vunpack.c.l.b16 %v1026
    %v1666 = vunpack.c.h.b16 %v1026
    %v1667 = vunpack.c.l.b16 %v1027
    %v1668 = vunpack.c.h.b16 %v1027
    %v1669 = vunpack.c.l.b16 %v1028
    %v1670 = vunpack.c.h.b16 %v1028
    %v1671 = vunpack.c.l.b16 %v1029
    %v1672 = vunpack.c.h.b16 %v1029
    %v1673 = vunpack.c.l.b16 %v1030
    %v1674 = vunpack.c.h.b16 %v1030
    %v1675 = vunpack.c.l.b16 %v1031
    %v1676 = vunpack.c.h.b16 %v1031
    %v1677 = vunpack.c.l.b16 %v1032
    %v1678 = vunpack.c.h.b16 %v1032
    %v1679 = vunpack.c.l.b16 %v1033
    %v1680 = vunpack.c.h.b16 %v1033
    %v1681 = vunpack.c.l.b16 %v1034
    %v1682 = vunpack.c.h.b16 %v1034
    %v1683 = vunpack.c.l.b16 %v1035
    %v1684 = vunpack.c.h.b16 %v1035
    %v1685 = vunpack.c.l.b16 %v1036
    %v1686 = vunpack.c.h.b16 %v1036
    %v1687 = vunpack.c.l.b16 %v1037
    %v1688 = vunpack.c.h.b16 %v1037
    %v1689 = vunpack.c.l.b16 %v1038
    %v1690 = vunpack.c.h.b16 %v1038
    %v1691 = vunpack.c.l.b16 %v1039
    %v1692 = vunpack.c.h.b16 %v1039
    %v1693 = vunpack.c.l.b16 %v1040
    %v1694 = vunpack.c.h.b16 %v1040
    %v1695 = vunpack.c.l.b16 %v1041
    %v1696 = vunpack.c.h.b16 %v1041
    %v1697 = vunpack.c.l.b16 %v1042
    %v1698 = vunpack.c.h.b16 %v1042
    %v1699 = vunpack.c.l.b16 %v1043
    %v1700 = vunpack.c.h.b16 %v1043
    %v1701 = vunpack.c.l.b16 %v1044
    %v1702 = vunpack.c.h.b16 %v1044
    %v1703 = vunpack.c.l.b16 %v1045
    %v1704 = vunpack.c.h.b16 %v1045
    %v1705 = vunpack.c.l.b16 %v1046
    %v1706 = vunpack.c.h.b16 %v1046
    %v1707 = vunpack.c.l.b16 %v1047
    %v1708 = vunpack.c.h.b16 %v1047
    %v1709 = vunpack.c.l.b16 %v1048
    %v1710 = vunpack.c.h.b16 %v1048
    %v1711 = vunpack.c.l.b16 %v1049
    %v1712 = vunpack.c.h.b16 %v1049
    %v1713 = vunpack.c.l.b16 %v1050
    %v1714 = vunpack.c.h.b16 %v1050
    %v1715 = vunpack.c.l.b16 %v1051
    %v1716 = vunpack.c.h.b16 %v1051
    %v1717 = vunpack.c.l.b16 %v1052
    %v1718 = vunpack.c.h.b16 %v1052
    %v1719 = vunpack.c.l.b16 %v1053
    %v1720 = vunpack.c.h.b16 %v1053
    %v1721 = vunpack.c.l.b16 %v1054
    %v1722 = vunpack.c.h.b16 %v1054
    %v1723 = vunpack.c.l.b16 %v1055
    %v1724 = vunpack.c.h.b16 %v1055
    %v1725 = vunpack.c.l.b16 %v1056
    %v1726 = vunpack.c.h.b16 %v1056
    %v1727 = vunpack.c.l.b16 %v1057
    %v1728 = vunpack.c.h.b16 %v1057
    %v1729 = vunpack.c.l.b16 %v1058
    %v1730 = vunpack.c.h.b16 %v1058
    %v1731 = vunpack.c.l.b16 %v1059
    %v1732 = vunpack.c.h.b16 %v1059
    %v1733 = vunpack.c.l.b16 %v1060
    %v1734 = vunpack.c.h.b16 %v1060
    %v1735 = vunpack.c.l.b16 %v1061
    %v1736 = vunpack.c.h.b16 %v1061
    %v1737 = vunpack.c.l.b16 %v1062
    %v1738 = vunpack.c.h.b16 %v1062
    %v1739 = vunpack.c.l.b16 %v1063
    %v1740 = vunpack.c.h.b16 %v1063
    %v1741 = vunpack.c.l.b16 %v1064
    %v1742 = vunpack.c.h.b16 %v1064
    %v1743 = vunpack.c.l.b16 %v1065
    %v1744 = vunpack.c.h.b16 %v1065
    %v1745 = vunpack.c.l.b16 %v1066
    %v1746 = vunpack.c.h.b16 %v1066
    %v1747 = vunpack.c.l.b16 %v1067
    %v1748 = vunpack.c.h.b16 %v1067
    %v1749 = vunpack.c.l.b16 %v1068
    %v1750 = vunpack.c.h.b16 %v1068
    %v1751 = vunpack.c.l.b16 %v1069
    %v1752 = vunpack.c.h.b16 %v1069
    %v1753 = vunpack.c.l.b16 %v1070
    %v1754 = vunpack.c.h.b16 %v1070
    %v1755 = vunpack.c.l.b16 %v1071
    %v1756 = vunpack.c.h.b16 %v1071
    %v1757 = vunpack.c.l.b16 %v1072
    %v1758 = vunpack.c.h.b16 %v1072
    %v1759 = vunpack.c.l.b16 %v1073
    %v1760 = vunpack.c.h.b16 %v1073
    %v1761 = vunpack.c.l.b16 %v1074
    %v1762 = vunpack.c.h.b16 %v1074
    %v1763 = vunpack.c.l.b16 %v1075
    %v1764 = vunpack.c.h.b16 %v1075
    %v1765 = vunpack.c.l.b16 %v1076
    %v1766 = vunpack.c.h.b16 %v1076
    %v1767 = vunpack.c.l.b16 %v1077
    %v1768 = vunpack.c.h.b16 %v1077
    %v1769 = vunpack.c.l.b16 %v1078
    %v1770 = vunpack.c.h.b16 %v1078
    %v1771 = vunpack.c.l.b16 %v1079
    %v1772 = vunpack.c.h.b16 %v1079
    %v1773 = vunpack.c.l.b16 %v1080
    %v1774 = vunpack.c.h.b16 %v1080
    %v1775 = vunpack.c.l.b16 %v1081
    %v1776 = vunpack.c.h.b16 %v1081
    %v1777 = vunpack.c.l.b16 %v1082
    %v1778 = vunpack.c.h.b16 %v1082
    %v1779 = vunpack.c.l.b16 %v1083
    %v1780 = vunpack.c.h.b16 %v1083
    %v1781 = vunpack.c.l.b16 %v1084
    %v1782 = vunpack.c.h.b16 %v1084
    %v1783 = vunpack.c.l.b16 %v1085
    %v1784 = vunpack.c.h.b16 %v1085
    %v1785 = vunpack.c.l.b16 %v1086
    %v1786 = vunpack.c.h.b16 %v1086
    %v1787 = vunpack.c.l.b16 %v1087
    %v1788 = vunpack.c.h.b16 %v1087
    %v1789 = vunpack.c.l.b16 %v1088
    %v1790 = vunpack.c.h.b16 %v1088
    %v1791 = vunpack.c.l.b16 %v1089
    %v1792 = vunpack.c.h.b16 %v1089
    %v1793 = vunpack.c.l.b16 %v1090
    %v1794 = vunpack.c.h.b16 %v1090
    %v1795 = vunpack.c.l.b16 %v1091
    %v1796 = vunpack.c.h.b16 %v1091
    %v1797 = vunpack.c.l.b16 %v1092
    %v1798 = vunpack.c.h.b16 %v1092
    %v1799 = vunpack.c.l.b16 %v1093
    %v1800 = vunpack.c.h.b16 %v1093
    %v1801 = vunpack.c.l.b16 %v1094
    %v1802 = vunpack.c.h.b16 %v1094
    %v1803 = vunpack.c.l.b16 %v1095
    %v1804 = vunpack.c.h.b16 %v1095
    %v1805 = vunpack.c.l.b16 %v1096
    %v1806 = vunpack.c.h.b16 %v1096
    %v1807 = vunpack.c.l.b16 %v1097
    %v1808 = vunpack.c.h.b16 %v1097
    %v1809 = vunpack.c.l.b16 %v1098
    %v1810 = vunpack.c.h.b16 %v1098
    %v1811 = vunpack.c.l.b16 %v1099
    %v1812 = vunpack.c.h.b16 %v1099
    %v1813 = vunpack.c.l.b16 %v1100
    %v1814 = vunpack.c.h.b16 %v1100
    %v1815 = vunpack.c.l.b16 %v1101
    %v1816 = vunpack.c.h.b16 %v1101
    %v1817 = vunpack.c.l.b16 %v1102
    %v1818 = vunpack.c.h.b16 %v1102
    %v1819 = vunpack.c.l.b16 %v1103
    %v1820 = vunpack.c.h.b16 %v1103
    %v1821 = vunpack.c.l.b16 %v1104
    %v1822 = vunpack.c.h.b16 %v1104
    %v1823 = vunpack.c.l.b16 %v1105
    %v1824 = vunpack.c.h.b16 %v1105
    %v1825 = vunpack.c.l.b16 %v1106
    %v1826 = vunpack.c.h.b16 %v1106
    %v1827 = vunpack.c.l.b16 %v1107
    %v1828 = vunpack.c.h.b16 %v1107
    %v1829 = vunpack.c.l.b16 %v1108
    %v1830 = vunpack.c.h.b16 %v1108
    %v1831 = vunpack.c.l.b16 %v1109
    %v1832 = vunpack.c.h.b16 %v1109
    %v1833 = vunpack.c.l.b16 %v1110
    %v1834 = vunpack.c.h.b16 %v1110
    %v1835 = vunpack.c.l.b16 %v1111
    %v1836 = vunpack.c.h.b16 %v1111
    %v1837 = vunpack.c.l.b16 %v1112
    %v1838 = vunpack.c.h.b16 %v1112
    %v1839 = vunpack.c.l.b16 %v1113
    %v1840 = vunpack.c.h.b16 %v1113
    %v1841 = vunpack.c.l.b16 %v1114
    %v1842 = vunpack.c.h.b16 %v1114
    %v1843 = vunpack.c.l.b16 %v1115
    %v1844 = vunpack.c.h.b16 %v1115
    %v1845 = vunpack.c.l.b16 %v1116
    %v1846 = vunpack.c.h.b16 %v1116
    %v1847 = vunpack.c.l.b16 %v1117
    %v1848 = vunpack.c.h.b16 %v1117
    %v1849 = vunpack.c.l.b16 %v1118
    %v1850 = vunpack.c.h.b16 %v1118
    %v1851 = vunpack.c.l.b16 %v1119
    %v1852 = vunpack.c.h.b16 %v1119
    %v1853 = vunpack.c.l.b16 %v1120
    %v1854 = vunpack.c.h.b16 %v1120
    %v1855 = vunpack.c.l.b16 %v1121
    %v1856 = vunpack.c.h.b16 %v1121
    %v1857 = vunpack.c.l.b16 %v1122
    %v1858 = vunpack.c.h.b16 %v1122
    %v1859 = vunpack.c.l.b16 %v1123
    %v1860 = vunpack.c.h.b16 %v1123
    %v1861 = vunpack.c.l.b16 %v1124
    %v1862 = vunpack.c.h.b16 %v1124
    %v1863 = vunpack.c.l.b16 %v1125
    %v1864 = vunpack.c.h.b16 %v1125
    %v1865 = vunpack.c.l.b16 %v1126
    %v1866 = vunpack.c.h.b16 %v1126
    %v1867 = vunpack.c.l.b16 %v1127
    %v1868 = vunpack.c.h.b16 %v1127
    %v1869 = vunpack.c.l.b16 %v1128
    %v1870 = vunpack.c.h.b16 %v1128
    %v1871 = vunpack.c.l.b16 %v1129
    %v1872 = vunpack.c.h.b16 %v1129
    %v1873 = vunpack.c.l.b16 %v1130
    %v1874 = vunpack.c.h.b16 %v1130
    %v1875 = vunpack.c.l.b16 %v1131
    %v1876 = vunpack.c.h.b16 %v1131
    %v1877 = vunpack.c.l.b16 %v1132
    %v1878 = vunpack.c.h.b16 %v1132
    %v1879 = vunpack.c.l.b16 %v1133
    %v1880 = vunpack.c.h.b16 %v1133
    %v1881 = vunpack.c.l.b16 %v1134
    %v1882 = vunpack.c.h.b16 %v1134
    %v1883 = vunpack.c.l.b16 %v1135
    %v1884 = vunpack.c.h.b16 %v1135
    %v1885 = vunpack.c.l.b16 %v1136
    %v1886 = vunpack.c.h.b16 %v1136
    %v1887 = vunpack.c.l.b16 %v1137
    %v1888 = vunpack.c.h.b16 %v1137
    %v1889 = vunpack.c.l.b16 %v1138
    %v1890 = vunpack.c.h.b16 %v1138
    %v1891 = vunpack.c.l.b16 %v1139
    %v1892 = vunpack.c.h.b16 %v1139
    %v1893 = vunpack.c.l.b16 %v1140
    %v1894 = vunpack.c.h.b16 %v1140
    %v1895 = vunpack.c.l.b16 %v1141
    %v1896 = vunpack.c.h.b16 %v1141
    %v1897 = vunpack.c.l.b16 %v1142
    %v1898 = vunpack.c.h.b16 %v1142
    %v1899 = vunpack.c.l.b16 %v1143
    %v1900 = vunpack.c.h.b16 %v1143
    %v1901 = vunpack.c.l.b16 %v1144
    %v1902 = vunpack.c.h.b16 %v1144
    %v1903 = vunpack.c.l.b16 %v1145
    %v1904 = vunpack.c.h.b16 %v1145
    %v1905 = vunpack.c.l.b16 %v1146
    %v1906 = vunpack.c.h.b16 %v1146
    %v1907 = vunpack.c.l.b16 %v1147
    %v1908 = vunpack.c.h.b16 %v1147
    %v1909 = vunpack.c.l.b16 %v1148
    %v1910 = vunpack.c.h.b16 %v1148
    %v1911 = vunpack.c.l.b16 %v1149
    %v1912 = vunpack.c.h.b16 %v1149
    %v1913 = vunpack.c.l.b16 %v1150
    %v1914 = vunpack.c.h.b16 %v1150
    %v1915 = vunpack.c.l.b16 %v1151
    %v1916 = vunpack.c.h.b16 %v1151
    %v1917 = vunpack.c.l.b16 %v1152
    %v1918 = vunpack.c.h.b16 %v1152
    %v1919 = vunpack.c.l.b16 %v1153
    %v1920 = vunpack.c.h.b16 %v1153
    %v1921 = vunpack.c.l.b16 %v1154
    %v1922 = vunpack.c.h.b16 %v1154
    %v1923 = vunpack.c.l.b16 %v1155
    %v1924 = vunpack.c.h.b16 %v1155
    %v1925 = vpack.c.b16 %v1421, %v1413
    %v1926 = vpack.c.b16 %v1422, %v1414
    %v1927 = vpack.c.b16 %v1423, %v1415
    %v1928 = vpack.c.b16 %v1424, %v1416
    %v1929 = vpack.c.b16 %v1425, %v1417
    %v1930 = vpack.c.b16 %v1426, %v1418
    %v1931 = vpack.c.b16 %v1427, %v1419
    %v1932 = vpack.c.b16 %v1428, %v1420
    %v1933 = vpack.c.b16 %v1437, %v1429
    %v1934 = vpack.c.b16 %v1438, %v1430
    %v1935 = vpack.c.b16 %v1439, %v1431
    %v1936 = vpack.c.b16 %v1440, %v1432
    %v1937 = vpack.c.b16 %v1441, %v1433
    %v1938 = vpack.c.b16 %v1442, %v1434
    %v1939 = vpack.c.b16 %v1443, %v1435
    %v1940 = vpack.c.b16 %v1444, %v1436
    %v1941 = vpack.c.b16 %v1453, %v1445
    %v1942 = vpack.c.b16 %v1454, %v1446
    %v1943 = vpack.c.b16 %v1455, %v1447
    %v1944 = vpack.c.b16 %v1456, %v1448
    %v1945 = vpack.c.b16 %v1457, %v1449
    %v1946 = vpack.c.b16 %v1458, %v1450
    %v1947 = vpack.c.b16 %v1459, %v1451
    %v1948 = vpack.c.b16 %v1460, %v1452
    %v1949 = vpack.c.b16 %v1469, %v1461
    %v1950 = vpack.c.b16 %v1470, %v1462
    %v1951 = vpack.c.b16 %v1471, %v1463
    %v1952 = vpack.c.b16 %v1472, %v1464
    %v1953 = vpack.c.b16 %v1473, %v1465
    %v1954 = vpack.c.b16 %v1474, %v1466
    %v1955 = vpack.c.b16 %v1475, %v1467
    %v1956 = vpack.c.b16 %v1476, %v1468
    %v1957 = vpack.c.b16 %v1485, %v1477
    %v1958 = vpack.c.b16 %v1486, %v1478
    %v1959 = vpack.c.b16 %v1487, %v1479
    %v1960 = vpack.c.b16 %v1488, %v1480
    %v1961 = vpack.c.b16 %v1489, %v1481
    %v1962 = vpack.c.b16 %v1490, %v1482
    %v1963 = vpack.c.b16 %v1491, %v1483
    %v1964 = vpack.c.b16 %v1492, %v1484
    %v1965 = vpack.c.b16 %v1501, %v1493
    %v1966 = vpack.c.b16 %v1502, %v1494
    %v1967 = vpack.c.b16 %v1503, %v1495
    %v1968 = vpack.c.b16 %v1504, %v1496
    %v1969 = vpack.c.b16 %v1505, %v1497
    %v1970 = vpack.c.b16 %v1506, %v1498
    %v1971 = vpack.c.b16 %v1507, %v1499
    %v1972 = vpack.c.b16 %v1508, %v1500
    %v1973 = vpack.c.b16 %v1517, %v1509
    %v1974 = vpack.c.b16 %v1518, %v1510
    %v1975 = vpack.c.b16 %v1519, %v1511
    %v1976 = vpack.c.b16 %v1520, %v1512
    %v1977 = vpack.c.b16 %v1521, %v1513
    %v1978 = vpack.c.b16 %v1522, %v1514
    %v1979 = vpack.c.b16 %v1523, %v1515
    %v1980 = vpack.c.b16 %v1524, %v1516
    %v1981 = vpack.c.b16 %v1533, %v1525
    %v1982 = vpack.c.b16 %v1534, %v1526
    %v1983 = vpack.c.b16 %v1535, %v1527
    %v1984 = vpack.c.b16 %v1536, %v1528
    %v1985 = vpack.c.b16 %v1537, %v1529
    %v1986 = vpack.c.b16 %v1538, %v1530
    %v1987 = vpack.c.b16 %v1539, %v1531
    %v1988 = vpack.c.b16 %v1540, %v1532
    %v1989 = vpack.c.b16 %v1549, %v1541
    %v1990 = vpack.c.b16 %v1550, %v1542
    %v1991 = vpack.c.b16 %v1551, %v1543
    %v1992 = vpack.c.b16 %v1552, %v1544
    %v1993 = vpack.c.b16 %v1553, %v1545
    %v1994 = vpack.c.b16 %v1554, %v1546
    %v1995 = vpack.c.b16 %v1555, %v1547
    %v1996 = vpack.c.b16 %v1556, %v1548
    %v1997 = vpack.c.b16 %v1565, %v1557
    %v1998 = vpack.c.b16 %v1566, %v1558
    %v1999 = vpack.c.b16 %v1567, %v1559
    %v2000 = vpack.c.b16 %v1568, %v1560
    %v2001 = vpack.c.b16 %v1569, %v1561
    %v2002 = vpack.c.b16 %v1570, %v1562
    %v2003 = vpack.c.b16 %v1571, %v1563
    %v2004 = vpack.c.b16 %v1572, %v1564
    %v2005 = vpack.c.b16 %v1581, %v1573
    %v2006 = vpack.c.b16 %v1582, %v1574
    %v2007 = vpack.c.b16 %v1583, %v1575
    %v2008 = vpack.c.b16 %v1584, %v1576
    %v2009 = vpack.c.b16 %v1585, %v1577
    %v2010 = vpack.c.b16 %v1586, %v1578
    %v2011 = vpack.c.b16 %v1587, %v1579
    %v2012 = vpack.c.b16 %v1588, %v1580
    %v2013 = vpack.c.b16 %v1597, %v1589
    %v2014 = vpack.c.b16 %v1598, %v1590
    %v2015 = vpack.c.b16 %v1599, %v1591
    %v2016 = vpack.c.b16 %v1600, %v1592
    %v2017 = vpack.c.b16 %v1601, %v1593
    %v2018 = vpack.c.b16 %v1602, %v1594
    %v2019 = vpack.c.b16 %v1603, %v1595
    %v2020 = vpack.c.b16 %v1604, %v1596
    %v2021 = vpack.c.b16 %v1613, %v1605
    %v2022 = vpack.c.b16 %v1614, %v1606
    %v2023 = vpack.c.b16 %v1615, %v1607
    %v2024 = vpack.c.b16 %v1616, %v1608
    %v2025 = vpack.c.b16 %v1617, %v1609
    %v2026 = vpack.c.b16 %v1618, %v1610
    %v2027 = vpack.c.b16 %v1619, %v1611
    %v2028 = vpack.c.b16 %v1620, %v1612
    %v2029 = vpack.c.b16 %v1629, %v1621
    %v2030 = vpack.c.b16 %v1630, %v1622
    %v2031 = vpack.c.b16 %v1631, %v1623
    %v2032 = vpack.c.b16 %v1632, %v1624
    %v2033 = vpack.c.b16 %v1633, %v1625
    %v2034 = vpack.c.b16 %v1634, %v1626
    %v2035 = vpack.c.b16 %v1635, %v1627
    %v2036 = vpack.c.b16 %v1636, %v1628
    %v2037 = vpack.c.b16 %v1645, %v1637
    %v2038 = vpack.c.b16 %v1646, %v1638
    %v2039 = vpack.c.b16 %v1647, %v1639
    %v2040 = vpack.c.b16 %v1648, %v1640
    %v2041 = vpack.c.b16 %v1649, %v1641
    %v2042 = vpack.c.b16 %v1650, %v1642
    %v2043 = vpack.c.b16 %v1651, %v1643
    %v2044 = vpack.c.b16 %v1652, %v1644
    %v2045 = vpack.c.b16 %v1661, %v1653
    %v2046 = vpack.c.b16 %v1662, %v1654
    %v2047 = vpack.c.b16 %v1663, %v1655
    %v2048 = vpack.c.b16 %v1664, %v1656
    %v2049 = vpack.c.b16 %v1665, %v1657
    %v2050 = vpack.c.b16 %v1666, %v1658
    %v2051 = vpack.c.b16 %v1667, %v1659
    %v2052 = vpack.c.b16 %v1668, %v1660
    %v2053 = vpack.c.b16 %v1677, %v1669
    %v2054 = vpack.c.b16 %v1678, %v1670
    %v2055 = vpack.c.b16 %v1679, %v1671
    %v2056 = vpack.c.b16 %v1680, %v1672
    %v2057 = vpack.c.b16 %v1681, %v1673
    %v2058 = vpack.c.b16 %v1682, %v1674
    %v2059 = vpack.c.b16 %v1683, %v1675
    %v2060 = vpack.c.b16 %v1684, %v1676
    %v2061 = vpack.c.b16 %v1693, %v1685
    %v2062 = vpack.c.b16 %v1694, %v1686
    %v2063 = vpack.c.b16 %v1695, %v1687
    %v2064 = vpack.c.b16 %v1696, %v1688
    %v2065 = vpack.c.b16 %v1697, %v1689
    %v2066 = vpack.c.b16 %v1698, %v1690
    %v2067 = vpack.c.b16 %v1699, %v1691
    %v2068 = vpack.c.b16 %v1700, %v1692
    %v2069 = vpack.c.b16 %v1709, %v1701
    %v2070 = vpack.c.b16 %v1710, %v1702
    %v2071 = vpack.c.b16 %v1711, %v1703
    %v2072 = vpack.c.b16 %v1712, %v1704
    %v2073 = vpack.c.b16 %v1713, %v1705
    %v2074 = vpack.c.b16 %v1714, %v1706
    %v2075 = vpack.c.b16 %v1715, %v1707
    %v2076 = vpack.c.b16 %v1716, %v1708
    %v2077 = vpack.c.b16 %v1725, %v1717
    %v2078 = vpack.c.b16 %v1726, %v1718
    %v2079 = vpack.c.b16 %v1727, %v1719
    %v2080 = vpack.c.b16 %v1728, %v1720
    %v2081 = vpack.c.b16 %v1729, %v1721
    %v2082 = vpack.c.b16 %v1730, %v1722
    %v2083 = vpack.c.b16 %v1731, %v1723
    %v2084 = vpack.c.b16 %v1732, %v1724
    %v2085 = vpack.c.b16 %v1741, %v1733
    %v2086 = vpack.c.b16 %v1742, %v1734
    %v2087 = vpack.c.b16 %v1743, %v1735
    %v2088 = vpack.c.b16 %v1744, %v1736
    %v2089 = vpack.c.b16 %v1745, %v1737
    %v2090 = vpack.c.b16 %v1746, %v1738
    %v2091 = vpack.c.b16 %v1747, %v1739
    %v2092 = vpack.c.b16 %v1748, %v1740
    %v2093 = vpack.c.b16 %v1757, %v1749
    %v2094 = vpack.c.b16 %v1758, %v1750
    %v2095 = vpack.c.b16 %v1759, %v1751
    %v2096 = vpack.c.b16 %v1760, %v1752
    %v2097 = vpack.c.b16 %v1761, %v1753
    %v2098 = vpack.c.b16 %v1762, %v1754
    %v2099 = vpack.c.b16 %v1763, %v1755
    %v2100 = vpack.c.b16 %v1764, %v1756
    %v2101 = vpack.c.b16 %v1773, %v1765
    %v2102 = vpack.c.b16 %v1774, %v1766
    %v2103 = vpack.c.b16 %v1775, %v1767
    %v2104 = vpack.c.b16 %v1776, %v1768
    %v2105 = vpack.c.b16 %v1777, %v1769
    %v2106 = vpack.c.b16 %v1778, %v1770
    %v2107 = vpack.c.b16 %v1779, %v1771
    %v2108 = vpack.c.b16 %v1780, %v1772
    %v2109 = vpack.c.b16 %v1789, %v1781
    %v2110 = vpack.c.b16 %v1790, %v1782
    %v2111 = vpack.c.b16 %v1791, %v1783
    %v2112 = vpack.c.b16 %v1792, %v1784
    %v2113 = vpack.c.b16 %v1793, %v1785
    %v2114 = vpack.c.b16 %v1794, %v1786
    %v2115 = vpack.c.b16 %v1795, %v1787
    %v2116 = vpack.c.b16 %v1796, %v1788
    %v2117 = vpack.c.b16 %v1805, %v1797
    %v2118 = vpack.c.b16 %v1806, %v1798
    %v2119 = vpack.c.b16 %v1807, %v1799
    %v2120 = vpack.c.b16 %v1808, %v1800
    %v2121 = vpack.c.b16 %v1809, %v1801
    %v2122 = vpack.c.b16 %v1810, %v1802
    %v2123 = vpack.c.b16 %v1811, %v1803
    %v2124 = vpack.c.b16 %v1812, %v1804
    %v2125 = vpack.c.b16 %v1821, %v1813
    %v2126 = vpack.c.b16 %v1822, %v1814
    %v2127 = vpack.c.b16 %v1823, %v1815
    %v2128 = vpack.c.b16 %v1824, %v1816
    %v2129 = vpack.c.b16 %v1825, %v1817
    %v2130 = vpack.c.b16 %v1826, %v1818
    %v2131 = vpack.c.b16 %v1827, %v1819
    %v2132 = vpack.c.b16 %v1828, %v1820
    %v2133 = vpack.c.b16 %v1837, %v1829
    %v2134 = vpack.c.b16 %v1838, %v1830
    %v2135 = vpack.c.b16 %v1839, %v1831
    %v2136 = vpack.c.b16 %v1840, %v1832
    %v2137 = vpack.c.b16 %v1841, %v1833
    %v2138 = vpack.c.b16 %v1842, %v1834
    %v2139 = vpack.c.b16 %v1843, %v1835
    %v2140 = vpack.c.b16 %v1844, %v1836
    %v2141 = vpack.c.b16 %v1853, %v1845
    %v2142 = vpack.c.b16 %v1854, %v1846
    %v2143 = vpack.c.b16 %v1855, %v1847
    %v2144 = vpack.c.b16 %v1856, %v1848
    %v2145 = vpack.c.b16 %v1857, %v1849
    %v2146 = vpack.c.b16 %v1858, %v1850
    %v2147 = vpack.c.b16 %v1859, %v1851
    %v2148 = vpack.c.b16 %v1860, %v1852
    %v2149 = vpack.c.b16 %v1869, %v1861
    %v2150 = vpack.c.b16 %v1870, %v1862
    %v2151 = vpack.c.b16 %v1871, %v1863
    %v2152 = vpack.c.b16 %v1872, %v1864
    %v2153 = vpack.c.b16 %v1873, %v1865
    %v2154 = vpack.c.b16 %v1874, %v1866
    %v2155 = vpack.c.b16 %v1875, %v1867
    %v2156 = vpack.c.b16 %v1876, %v1868
    %v2157 = vpack.c.b16 %v1885, %v1877
    %v2158 = vpack.c.b16 %v1886, %v1878
    %v2159 = vpack.c.b16 %v1887, %v1879
    %v2160 = vpack.c.b16 %v1888, %v1880
    %v2161 = vpack.c.b16 %v1889, %v1881
    %v2162 = vpack.c.b16 %v1890, %v1882
    %v2163 = vpack.c.b16 %v1891, %v1883
    %v2164 = vpack.c.b16 %v1892, %v1884
    %v2165 = vpack.c.b16 %v1901, %v1893
    %v2166 = vpack.c.b16 %v1902, %v1894
    %v2167 = vpack.c.b16 %v1903, %v1895
    %v2168 = vpack.c.b16 %v1904, %v1896
    %v2169 = vpack.c.b16 %v1905, %v1897
    %v2170 = vpack.c.b16 %v1906, %v1898
    %v2171 = vpack.c.b16 %v1907, %v1899
    %v2172 = vpack.c.b16 %v1908, %v1900
    %v2173 = vpack.c.b16 %v1917, %v1909
    %v2174 = vpack.c.b16 %v1918, %v1910
    %v2175 = vpack.c.b16 %v1919, %v1911
    %v2176 = vpack.c.b16 %v1920, %v1912
    %v2177 = vpack.c.b16 %v1921, %v1913
    %v2178 = vpack.c.b16 %v1922, %v1914
    %v2179 = vpack.c.b16 %v1923, %v1915
    %v2180 = vpack.c.b16 %v1924, %v1916
    %v2438 = vlaneseq
    %v2439 = vshrl.u32 %v2438, 7
    %v2440 = vsub.s32 0, %v2439
    %v2441 = vrot.slane %v1156, %v2440
    %v2442 = vlaneseq
    %v2443 = vshrl.u32 %v2442, 7
    %v2444 = vsub.s32 1, %v2443
    %v2445 = vrot.slane %v1156, %v2444
    %v2446 = vlaneseq
    %v2447 = vshrl.u32 %v2446, 7
    %v2448 = vsub.s32 2, %v2447
    %v2449 = vrot.slane %v1156, %v2448
    %v2450 = vlaneseq
    %v2451 = vshrl.u32 %v2450, 7
    %v2452 = vsub.s32 3, %v2451
    %v2453 = vrot.slane %v1156, %v2452
    %v2454 = vlaneseq
    %v2455 = vshrl.u32 %v2454, 7
    %v2456 = vsub.s32 4, %v2455
    %v2457 = vrot.slane %v1156, %v2456
    %v2458 = vlaneseq
    %v2459 = vshrl.u32 %v2458, 7
    %v2460 = vsub.s32 5, %v2459
    %v2461 = vrot.slane %v1156, %v2460
    %v2462 = vlaneseq
    %v2463 = vshrl.u32 %v2462, 7
    %v2464 = vsub.s32 6, %v2463
    %v2465 = vrot.slane %v1156, %v2464
    %v2466 = vlaneseq
    %v2467 = vshrl.u32 %v2466, 7
    %v2468 = vsub.s32 7, %v2467
    %v2469 = vrot.slane %v1156, %v2468
    %2478 = vmatprep.subr.bf16.mxu0 %v1982
    %2479 = vmatpush1.bf16.msra.mxu0 %v1981
    %2480 = vmatprep.subr.bf16.mxu0 %v1974
    %2481 = vmatpush1.bf16.msra.mxu0 %v1973
    %2482 = vmatprep.subr.bf16.mxu0 %v1966
    %2483 = vmatpush1.bf16.msra.mxu0 %v1965
    %2484 = vmatprep.subr.bf16.mxu0 %v1958
    %2485 = vmatpush1.bf16.msra.mxu0 %v1957
    %2486 = vmatprep.subr.bf16.mxu0 %v1950
    %2487 = vmatpush1.bf16.msra.mxu0 %v1949
    %2488 = vmatprep.subr.bf16.mxu0 %v1942
    %2489 = vmatpush1.bf16.msra.mxu0 %v1941
    %2490 = vmatprep.subr.bf16.mxu0 %v1934
    %2491 = vmatpush1.bf16.msra.mxu0 %v1933
    %2492 = vmatprep.subr.bf16.mxu0 %v1926
    %2493 = vmatpush1.bf16.msra.mxu0 %v1925
    %2494 = vmatprep.subr.bf16.mxu0 %v2046
    %2495 = vmatpush2.bf16.msra.mxu0 %v2045
    %2496 = vmatprep.subr.bf16.mxu0 %v2038
    %2497 = vmatpush2.bf16.msra.mxu0 %v2037
    %2498 = vmatprep.subr.bf16.mxu0 %v2030
    %2499 = vmatpush2.bf16.msra.mxu0 %v2029
    %2500 = vmatprep.subr.bf16.mxu0 %v2022
    %2501 = vmatpush2.bf16.msra.mxu0 %v2021
    %2502 = vmatprep.subr.bf16.mxu0 %v2014
    %2503 = vmatpush2.bf16.msra.mxu0 %v2013
    %2504 = vmatprep.subr.bf16.mxu0 %v2006
    %2505 = vmatpush2.bf16.msra.mxu0 %v2005
    %2506 = vmatprep.subr.bf16.mxu0 %v1998
    %2507 = vmatpush2.bf16.msra.mxu0 %v1997
    %2508 = vmatprep.subr.bf16.mxu0 %v1990
    %2509 = vmatpush2.bf16.msra.mxu0 %v1989
    %2510 = vmatprep.mubr.bf16.mxu0 %v897
    %2511 = vmatmul.mubr.bf16.gmra.mxu0 %v896
    %v2512 = vpop.f32.mrf.mxu0
    %v2513 = vadd.f32 %v2441, %v2512
    %v2514 = vpop.f32.mrf.mxu0
    %v2515 = vadd.f32 %v2445, %v2514
    %v2516 = vpop.f32.mrf.mxu0
    %v2517 = vpop.f32.mrf.mxu0
    %2518 = vdwg.mxu0
    %2519 = vmatprep.subr.bf16.mxu0 %v2110
    %2520 = vmatpush1.bf16.msra.mxu0 %v2109
    %2521 = vmatprep.subr.bf16.mxu0 %v2102
    %2522 = vmatpush1.bf16.msra.mxu0 %v2101
    %2523 = vmatprep.subr.bf16.mxu0 %v2094
    %2524 = vmatpush1.bf16.msra.mxu0 %v2093
    %2525 = vmatprep.subr.bf16.mxu0 %v2086
    %2526 = vmatpush1.bf16.msra.mxu0 %v2085
    %2527 = vmatprep.subr.bf16.mxu0 %v2078
    %2528 = vmatpush1.bf16.msra.mxu0 %v2077
    %2529 = vmatprep.subr.bf16.mxu0 %v2070
    %2530 = vmatpush1.bf16.msra.mxu0 %v2069
    %2531 = vmatprep.subr.bf16.mxu0 %v2062
    %2532 = vmatpush1.bf16.msra.mxu0 %v2061
    %2533 = vmatprep.subr.bf16.mxu0 %v2054
    %2534 = vmatpush1.bf16.msra.mxu0 %v2053
    %2535 = vmatprep.subr.bf16.mxu0 %v2174
    %2536 = vmatpush2.bf16.msra.mxu0 %v2173
    %2537 = vmatprep.subr.bf16.mxu0 %v2166
    %2538 = vmatpush2.bf16.msra.mxu0 %v2165
    %2539 = vmatprep.subr.bf16.mxu0 %v2158
    %2540 = vmatpush2.bf16.msra.mxu0 %v2157
    %2541 = vmatprep.subr.bf16.mxu0 %v2150
    %2542 = vmatpush2.bf16.msra.mxu0 %v2149
    %2543 = vmatprep.subr.bf16.mxu0 %v2142
    %2544 = vmatpush2.bf16.msra.mxu0 %v2141
    %2545 = vmatprep.subr.bf16.mxu0 %v2134
    %2546 = vmatpush2.bf16.msra.mxu0 %v2133
    %2547 = vmatprep.subr.bf16.mxu0 %v2126
    %2548 = vmatpush2.bf16.msra.mxu0 %v2125
    %2549 = vmatprep.subr.bf16.mxu0 %v2118
    %2550 = vmatpush2.bf16.msra.mxu0 %v2117
    %2551 = vmatprep.mubr.bf16.mxu0 %v899
    %2552 = vmatmul.mubr.bf16.gmra.mxu0 %v898
    %v2553 = vpop.f32.mrf.mxu0
    %v2554 = vadd.f32 %v2513, %v2553
    %v2555 = vpop.f32.mrf.mxu0
    %v2556 = vadd.f32 %v2515, %v2555
    %v2557 = vpop.f32.mrf.mxu0
    %v2558 = vpop.f32.mrf.mxu0
    %2559 = vdwg.mxu0
    %2560 = vmatprep.subr.bf16.mxu0 %v1984
    %2561 = vmatpush1.bf16.msra.mxu0 %v1983
    %2562 = vmatprep.subr.bf16.mxu0 %v1976
    %2563 = vmatpush1.bf16.msra.mxu0 %v1975
    %2564 = vmatprep.subr.bf16.mxu0 %v1968
    %2565 = vmatpush1.bf16.msra.mxu0 %v1967
    %2566 = vmatprep.subr.bf16.mxu0 %v1960
    %2567 = vmatpush1.bf16.msra.mxu0 %v1959
    %2568 = vmatprep.subr.bf16.mxu0 %v1952
    %2569 = vmatpush1.bf16.msra.mxu0 %v1951
    %2570 = vmatprep.subr.bf16.mxu0 %v1944
    %2571 = vmatpush1.bf16.msra.mxu0 %v1943
    %2572 = vmatprep.subr.bf16.mxu0 %v1936
    %2573 = vmatpush1.bf16.msra.mxu0 %v1935
    %2574 = vmatprep.subr.bf16.mxu0 %v1928
    %2575 = vmatpush1.bf16.msra.mxu0 %v1927
    %2576 = vmatprep.subr.bf16.mxu0 %v2048
    %2577 = vmatpush2.bf16.msra.mxu0 %v2047
    %2578 = vmatprep.subr.bf16.mxu0 %v2040
    %2579 = vmatpush2.bf16.msra.mxu0 %v2039
    %2580 = vmatprep.subr.bf16.mxu0 %v2032
    %2581 = vmatpush2.bf16.msra.mxu0 %v2031
    %2582 = vmatprep.subr.bf16.mxu0 %v2024
    %2583 = vmatpush2.bf16.msra.mxu0 %v2023
    %2584 = vmatprep.subr.bf16.mxu0 %v2016
    %2585 = vmatpush2.bf16.msra.mxu0 %v2015
    %2586 = vmatprep.subr.bf16.mxu0 %v2008
    %2587 = vmatpush2.bf16.msra.mxu0 %v2007
    %2588 = vmatprep.subr.bf16.mxu0 %v2000
    %2589 = vmatpush2.bf16.msra.mxu0 %v1999
    %2590 = vmatprep.subr.bf16.mxu0 %v1992
    %2591 = vmatpush2.bf16.msra.mxu0 %v1991
    %2592 = vmatprep.mubr.bf16.mxu0 %v897
    %2593 = vmatmul.mubr.bf16.gmra.mxu0 %v896
    %v2594 = vpop.f32.mrf.mxu0
    %v2595 = vadd.f32 %v2449, %v2594
    %v2596 = vpop.f32.mrf.mxu0
    %v2597 = vadd.f32 %v2453, %v2596
    %v2598 = vpop.f32.mrf.mxu0
    %v2599 = vpop.f32.mrf.mxu0
    %2600 = vdwg.mxu0
    %2601 = vmatprep.subr.bf16.mxu0 %v2112
    %2602 = vmatpush1.bf16.msra.mxu0 %v2111
    %2603 = vmatprep.subr.bf16.mxu0 %v2104
    %2604 = vmatpush1.bf16.msra.mxu0 %v2103
    %2605 = vmatprep.subr.bf16.mxu0 %v2096
    %2606 = vmatpush1.bf16.msra.mxu0 %v2095
    %2607 = vmatprep.subr.bf16.mxu0 %v2088
    %2608 = vmatpush1.bf16.msra.mxu0 %v2087
    %2609 = vmatprep.subr.bf16.mxu0 %v2080
    %2610 = vmatpush1.bf16.msra.mxu0 %v2079
    %2611 = vmatprep.subr.bf16.mxu0 %v2072
    %2612 = vmatpush1.bf16.msra.mxu0 %v2071
    %2613 = vmatprep.subr.bf16.mxu0 %v2064
    %2614 = vmatpush1.bf16.msra.mxu0 %v2063
    %2615 = vmatprep.subr.bf16.mxu0 %v2056
    %2616 = vmatpush1.bf16.msra.mxu0 %v2055
    %2617 = vmatprep.subr.bf16.mxu0 %v2176
    %2618 = vmatpush2.bf16.msra.mxu0 %v2175
    %2619 = vmatprep.subr.bf16.mxu0 %v2168
    %2620 = vmatpush2.bf16.msra.mxu0 %v2167
    %2621 = vmatprep.subr.bf16.mxu0 %v2160
    %2622 = vmatpush2.bf16.msra.mxu0 %v2159
    %2623 = vmatprep.subr.bf16.mxu0 %v2152
    %2624 = vmatpush2.bf16.msra.mxu0 %v2151
    %2625 = vmatprep.subr.bf16.mxu0 %v2144
    %2626 = vmatpush2.bf16.msra.mxu0 %v2143
    %2627 = vmatprep.subr.bf16.mxu0 %v2136
    %2628 = vmatpush2.bf16.msra.mxu0 %v2135
    %2629 = vmatprep.subr.bf16.mxu0 %v2128
    %2630 = vmatpush2.bf16.msra.mxu0 %v2127
    %2631 = vmatprep.subr.bf16.mxu0 %v2120
    %2632 = vmatpush2.bf16.msra.mxu0 %v2119
    %2633 = vmatprep.mubr.bf16.mxu0 %v899
    %2634 = vmatmul.mubr.bf16.gmra.mxu0 %v898
    %v2635 = vpop.f32.mrf.mxu0
    %v2636 = vadd.f32 %v2595, %v2635
    %v2637 = vpop.f32.mrf.mxu0
    %v2638 = vadd.f32 %v2597, %v2637
    %v2639 = vpop.f32.mrf.mxu0
    %v2640 = vpop.f32.mrf.mxu0
    %2641 = vdwg.mxu0
    %2642 = vmatprep.subr.bf16.mxu0 %v1986
    %2643 = vmatpush1.bf16.msra.mxu0 %v1985
    %2644 = vmatprep.subr.bf16.mxu0 %v1978
    %2645 = vmatpush1.bf16.msra.mxu0 %v1977
    %2646 = vmatprep.subr.bf16.mxu0 %v1970
    %2647 = vmatpush1.bf16.msra.mxu0 %v1969
    %2648 = vmatprep.subr.bf16.mxu0 %v1962
    %2649 = vmatpush1.bf16.msra.mxu0 %v1961
    %2650 = vmatprep.subr.bf16.mxu0 %v1954
    %2651 = vmatpush1.bf16.msra.mxu0 %v1953
    %2652 = vmatprep.subr.bf16.mxu0 %v1946
    %2653 = vmatpush1.bf16.msra.mxu0 %v1945
    %2654 = vmatprep.subr.bf16.mxu0 %v1938
    %2655 = vmatpush1.bf16.msra.mxu0 %v1937
    %2656 = vmatprep.subr.bf16.mxu0 %v1930
    %2657 = vmatpush1.bf16.msra.mxu0 %v1929
    %2658 = vmatprep.subr.bf16.mxu0 %v2050
    %2659 = vmatpush2.bf16.msra.mxu0 %v2049
    %2660 = vmatprep.subr.bf16.mxu0 %v2042
    %2661 = vmatpush2.bf16.msra.mxu0 %v2041
    %2662 = vmatprep.subr.bf16.mxu0 %v2034
    %2663 = vmatpush2.bf16.msra.mxu0 %v2033
    %2664 = vmatprep.subr.bf16.mxu0 %v2026
    %2665 = vmatpush2.bf16.msra.mxu0 %v2025
    %2666 = vmatprep.subr.bf16.mxu0 %v2018
    %2667 = vmatpush2.bf16.msra.mxu0 %v2017
    %2668 = vmatprep.subr.bf16.mxu0 %v2010
    %2669 = vmatpush2.bf16.msra.mxu0 %v2009
    %2670 = vmatprep.subr.bf16.mxu0 %v2002
    %2671 = vmatpush2.bf16.msra.mxu0 %v2001
    %2672 = vmatprep.subr.bf16.mxu0 %v1994
    %2673 = vmatpush2.bf16.msra.mxu0 %v1993
    %2674 = vmatprep.mubr.bf16.mxu0 %v897
    %2675 = vmatmul.mubr.bf16.gmra.mxu0 %v896
    %v2676 = vpop.f32.mrf.mxu0
    %v2677 = vadd.f32 %v2457, %v2676
    %v2678 = vpop.f32.mrf.mxu0
    %v2679 = vadd.f32 %v2461, %v2678
    %v2680 = vpop.f32.mrf.mxu0
    %v2681 = vpop.f32.mrf.mxu0
    %2682 = vdwg.mxu0
    %2683 = vmatprep.subr.bf16.mxu0 %v2114
    %2684 = vmatpush1.bf16.msra.mxu0 %v2113
    %2685 = vmatprep.subr.bf16.mxu0 %v2106
    %2686 = vmatpush1.bf16.msra.mxu0 %v2105
    %2687 = vmatprep.subr.bf16.mxu0 %v2098
    %2688 = vmatpush1.bf16.msra.mxu0 %v2097
    %2689 = vmatprep.subr.bf16.mxu0 %v2090
    %2690 = vmatpush1.bf16.msra.mxu0 %v2089
    %2691 = vmatprep.subr.bf16.mxu0 %v2082
    %2692 = vmatpush1.bf16.msra.mxu0 %v2081
    %2693 = vmatprep.subr.bf16.mxu0 %v2074
    %2694 = vmatpush1.bf16.msra.mxu0 %v2073
    %2695 = vmatprep.subr.bf16.mxu0 %v2066
    %2696 = vmatpush1.bf16.msra.mxu0 %v2065
    %2697 = vmatprep.subr.bf16.mxu0 %v2058
    %2698 = vmatpush1.bf16.msra.mxu0 %v2057
    %2699 = vmatprep.subr.bf16.mxu0 %v2178
    %2700 = vmatpush2.bf16.msra.mxu0 %v2177
    %2701 = vmatprep.subr.bf16.mxu0 %v2170
    %2702 = vmatpush2.bf16.msra.mxu0 %v2169
    %2703 = vmatprep.subr.bf16.mxu0 %v2162
    %2704 = vmatpush2.bf16.msra.mxu0 %v2161
    %2705 = vmatprep.subr.bf16.mxu0 %v2154
    %2706 = vmatpush2.bf16.msra.mxu0 %v2153
    %2707 = vmatprep.subr.bf16.mxu0 %v2146
    %2708 = vmatpush2.bf16.msra.mxu0 %v2145
    %2709 = vmatprep.subr.bf16.mxu0 %v2138
    %2710 = vmatpush2.bf16.msra.mxu0 %v2137
    %2711 = vmatprep.subr.bf16.mxu0 %v2130
    %2712 = vmatpush2.bf16.msra.mxu0 %v2129
    %2713 = vmatprep.subr.bf16.mxu0 %v2122
    %2714 = vmatpush2.bf16.msra.mxu0 %v2121
    %2715 = vmatprep.mubr.bf16.mxu0 %v899
    %2716 = vmatmul.mubr.bf16.gmra.mxu0 %v898
    %v2717 = vpop.f32.mrf.mxu0
    %v2718 = vadd.f32 %v2677, %v2717
    %v2719 = vpop.f32.mrf.mxu0
    %v2720 = vadd.f32 %v2679, %v2719
    %v2721 = vpop.f32.mrf.mxu0
    %v2722 = vpop.f32.mrf.mxu0
    %2723 = vdwg.mxu0
    %2724 = vmatprep.subr.bf16.mxu0 %v1988
    %2725 = vmatpush1.bf16.msra.mxu0 %v1987
    %2726 = vmatprep.subr.bf16.mxu0 %v1980
    %2727 = vmatpush1.bf16.msra.mxu0 %v1979
    %2728 = vmatprep.subr.bf16.mxu0 %v1972
    %2729 = vmatpush1.bf16.msra.mxu0 %v1971
    %2730 = vmatprep.subr.bf16.mxu0 %v1964
    %2731 = vmatpush1.bf16.msra.mxu0 %v1963
    %2732 = vmatprep.subr.bf16.mxu0 %v1956
    %2733 = vmatpush1.bf16.msra.mxu0 %v1955
    %2734 = vmatprep.subr.bf16.mxu0 %v1948
    %2735 = vmatpush1.bf16.msra.mxu0 %v1947
    %2736 = vmatprep.subr.bf16.mxu0 %v1940
    %2737 = vmatpush1.bf16.msra.mxu0 %v1939
    %2738 = vmatprep.subr.bf16.mxu0 %v1932
    %2739 = vmatpush1.bf16.msra.mxu0 %v1931
    %2740 = vmatprep.subr.bf16.mxu0 %v2052
    %2741 = vmatpush2.bf16.msra.mxu0 %v2051
    %2742 = vmatprep.subr.bf16.mxu0 %v2044
    %2743 = vmatpush2.bf16.msra.mxu0 %v2043
    %2744 = vmatprep.subr.bf16.mxu0 %v2036
    %2745 = vmatpush2.bf16.msra.mxu0 %v2035
    %2746 = vmatprep.subr.bf16.mxu0 %v2028
    %2747 = vmatpush2.bf16.msra.mxu0 %v2027
    %2748 = vmatprep.subr.bf16.mxu0 %v2020
    %2749 = vmatpush2.bf16.msra.mxu0 %v2019
    %2750 = vmatprep.subr.bf16.mxu0 %v2012
    %2751 = vmatpush2.bf16.msra.mxu0 %v2011
    %2752 = vmatprep.subr.bf16.mxu0 %v2004
    %2753 = vmatpush2.bf16.msra.mxu0 %v2003
    %2754 = vmatprep.subr.bf16.mxu0 %v1996
    %2755 = vmatpush2.bf16.msra.mxu0 %v1995
    %2756 = vmatprep.mubr.bf16.mxu0 %v897
    %2757 = vmatmul.mubr.bf16.gmra.mxu0 %v896
    %v2758 = vpop.f32.mrf.mxu0
    %v2759 = vadd.f32 %v2465, %v2758
    %v2760 = vpop.f32.mrf.mxu0
    %v2761 = vadd.f32 %v2469, %v2760
    %v2762 = vpop.f32.mrf.mxu0
    %v2763 = vpop.f32.mrf.mxu0
    %2764 = vdwg.mxu0
    %2765 = vmatprep.subr.bf16.mxu0 %v2116
    %2766 = vmatpush1.bf16.msra.mxu0 %v2115
    %2767 = vmatprep.subr.bf16.mxu0 %v2108
    %2768 = vmatpush1.bf16.msra.mxu0 %v2107
    %2769 = vmatprep.subr.bf16.mxu0 %v2100
    %2770 = vmatpush1.bf16.msra.mxu0 %v2099
    %2771 = vmatprep.subr.bf16.mxu0 %v2092
    %2772 = vmatpush1.bf16.msra.mxu0 %v2091
    %2773 = vmatprep.subr.bf16.mxu0 %v2084
    %2774 = vmatpush1.bf16.msra.mxu0 %v2083
    %2775 = vmatprep.subr.bf16.mxu0 %v2076
    %2776 = vmatpush1.bf16.msra.mxu0 %v2075
    %2777 = vmatprep.subr.bf16.mxu0 %v2068
    %2778 = vmatpush1.bf16.msra.mxu0 %v2067
    %2779 = vmatprep.subr.bf16.mxu0 %v2060
    %2780 = vmatpush1.bf16.msra.mxu0 %v2059
    %2781 = vmatprep.subr.bf16.mxu0 %v2180
    %2782 = vmatpush2.bf16.msra.mxu0 %v2179
    %2783 = vmatprep.subr.bf16.mxu0 %v2172
    %2784 = vmatpush2.bf16.msra.mxu0 %v2171
    %2785 = vmatprep.subr.bf16.mxu0 %v2164
    %2786 = vmatpush2.bf16.msra.mxu0 %v2163
    %2787 = vmatprep.subr.bf16.mxu0 %v2156
    %2788 = vmatpush2.bf16.msra.mxu0 %v2155
    %2789 = vmatprep.subr.bf16.mxu0 %v2148
    %2790 = vmatpush2.bf16.msra.mxu0 %v2147
    %2791 = vmatprep.subr.bf16.mxu0 %v2140
    %2792 = vmatpush2.bf16.msra.mxu0 %v2139
    %2793 = vmatprep.subr.bf16.mxu0 %v2132
    %2794 = vmatpush2.bf16.msra.mxu0 %v2131
    %2795 = vmatprep.subr.bf16.mxu0 %v2124
    %2796 = vmatpush2.bf16.msra.mxu0 %v2123
    %2797 = vmatprep.mubr.bf16.mxu0 %v899
    %2798 = vmatmul.mubr.bf16.gmra.mxu0 %v898
    %v2799 = vpop.f32.mrf.mxu0
    %v2800 = vadd.f32 %v2759, %v2799
    %v2801 = vpop.f32.mrf.mxu0
    %v2802 = vadd.f32 %v2761, %v2801
    %v2803 = vpop.f32.mrf.mxu0
    %v2804 = vpop.f32.mrf.mxu0
    %2805 = vdwg.mxu0
    %v2806 = vmax.f32 %v2554, 0.0
    %v2807 = vmax.f32 %v2556, 0.0
    %v2808 = vmax.f32 %v2636, 0.0
    %v2809 = vmax.f32 %v2638, 0.0
    %v2810 = vmax.f32 %v2718, 0.0
    %v2811 = vmax.f32 %v2720, 0.0
    %v2812 = vmax.f32 %v2800, 0.0
    %v2813 = vmax.f32 %v2802, 0.0
    %v2814 = vpack.c.bf16 %v2806, %v2806
    %v2815 = vpack.c.bf16 %v2807, %v2807
    %v2816 = vpack.c.bf16 %v2808, %v2808
    %v2817 = vpack.c.bf16 %v2809, %v2809
    %v2818 = vpack.c.bf16 %v2810, %v2810
    %v2819 = vpack.c.bf16 %v2811, %v2811
    %v2820 = vpack.c.bf16 %v2812, %v2812
    %v2821 = vpack.c.bf16 %v2813, %v2813
    %v2822 = vld [vmem:[#allocation16] sm:$0xff]
    %v2823 = vld [vmem:[#allocation16 + $0x8] sm:$0xff]
    %v2824 = vld [vmem:[#allocation16 + $0x10] sm:$0xff]
    %v2825 = vld [vmem:[#allocation16 + $0x18] sm:$0xf]
    %v2826 = vld [vmem:[#allocation16 + $0x1c] sm:$0xff]
    %v2827 = vld [vmem:[#allocation16 + $0x24] sm:$0xff]
    %v2828 = vld [vmem:[#allocation16 + $0x2c] sm:$0xff]
    %v2829 = vld [vmem:[#allocation16 + $0x34] sm:$0xf]
    %v2830 = vld [vmem:[#allocation16 + $0x38] sm:$0xff]
    %v2831 = vld [vmem:[#allocation16 + $0x40] sm:$0xff]
    %v2832 = vld [vmem:[#allocation16 + $0x48] sm:$0xff]
    %v2833 = vld [vmem:[#allocation16 + $0x50] sm:$0xf]
    %v2834 = vld [vmem:[#allocation16 + $0x54] sm:$0xff]
    %v2835 = vld [vmem:[#allocation16 + $0x5c] sm:$0xff]
    %v2836 = vld [vmem:[#allocation16 + $0x64] sm:$0xff]
    %v2837 = vld [vmem:[#allocation16 + $0x6c] sm:$0xf]
    %v2838 = vld [vmem:[#allocation16 + $0x70] sm:$0xff]
    %v2839 = vld [vmem:[#allocation16 + $0x78] sm:$0xff]
    %v2840 = vld [vmem:[#allocation16 + $0x80] sm:$0xff]
    %v2841 = vld [vmem:[#allocation16 + $0x88] sm:$0xf]
    %v2842 = vld [vmem:[#allocation16 + $0x8c] sm:$0xff]
    %v2843 = vld [vmem:[#allocation16 + $0x94] sm:$0xff]
    %v2844 = vld [vmem:[#allocation16 + $0x9c] sm:$0xff]
    %v2845 = vld [vmem:[#allocation16 + $0xa4] sm:$0xf]
    %v2846 = vld [vmem:[#allocation16 + $0xa8] sm:$0xff]
    %v2847 = vld [vmem:[#allocation16 + $0xb0] sm:$0xff]
    %v2848 = vld [vmem:[#allocation16 + $0xb8] sm:$0xff]
    %v2849 = vld [vmem:[#allocation16 + $0xc0] sm:$0xf]
    %v2850 = vld [vmem:[#allocation16 + $0xc4] sm:$0xff]
    %v2851 = vld [vmem:[#allocation16 + $0xcc] sm:$0xff]
    %v2852 = vld [vmem:[#allocation16 + $0xd4] sm:$0xff]
    %v2853 = vld [vmem:[#allocation16 + $0xdc] sm:$0xf]
    %v2854 = vld [vmem:[#allocation16 + $0xe0] sm:$0xff]
    %v2855 = vld [vmem:[#allocation16 + $0xe8] sm:$0xff]
    %v2856 = vld [vmem:[#allocation16 + $0xf0] sm:$0xff]
    %v2857 = vld [vmem:[#allocation16 + $0xf8] sm:$0xf]
    %v2858 = vld [vmem:[#allocation16 + $0xfc] sm:$0xff]
    %v2859 = vld [vmem:[#allocation16 + $0x104] sm:$0xff]
    %v2860 = vld [vmem:[#allocation16 + $0x10c] sm:$0xff]
    %v2861 = vld [vmem:[#allocation16 + $0x114] sm:$0xf]
    %v2862 = vld [vmem:[#allocation16 + $0x118] sm:$0xff]
    %v2863 = vld [vmem:[#allocation16 + $0x120] sm:$0xff]
    %v2864 = vld [vmem:[#allocation16 + $0x128] sm:$0xff]
    %v2865 = vld [vmem:[#allocation16 + $0x130] sm:$0xf]
    %v2866 = vld [vmem:[#allocation16 + $0x134] sm:$0xff]
    %v2867 = vld [vmem:[#allocation16 + $0x13c] sm:$0xff]
    %v2868 = vld [vmem:[#allocation16 + $0x144] sm:$0xff]
    %v2869 = vld [vmem:[#allocation16 + $0x14c] sm:$0xf]
    %v2870 = vld [vmem:[#allocation16 + $0x150] sm:$0xff]
    %v2871 = vld [vmem:[#allocation16 + $0x158] sm:$0xff]
    %v2872 = vld [vmem:[#allocation16 + $0x160] sm:$0xff]
    %v2873 = vld [vmem:[#allocation16 + $0x168] sm:$0xf]
    %v2874 = vld [vmem:[#allocation16 + $0x16c] sm:$0xff]
    %v2875 = vld [vmem:[#allocation16 + $0x174] sm:$0xff]
    %v2876 = vld [vmem:[#allocation16 + $0x17c] sm:$0xff]
    %v2877 = vld [vmem:[#allocation16 + $0x184] sm:$0xf]
    %v2878 = vld [vmem:[#allocation16 + $0x188] sm:$0xff]
    %v2879 = vld [vmem:[#allocation16 + $0x190] sm:$0xff]
    %v2880 = vld [vmem:[#allocation16 + $0x198] sm:$0xff]
    %v2881 = vld [vmem:[#allocation16 + $0x1a0] sm:$0xf]
    %v2882 = vld [vmem:[#allocation16 + $0x1a4] sm:$0xff]
    %v2883 = vld [vmem:[#allocation16 + $0x1ac] sm:$0xff]
    %v2884 = vld [vmem:[#allocation16 + $0x1b4] sm:$0xff]
    %v2885 = vld [vmem:[#allocation16 + $0x1bc] sm:$0xf]
    %v2886 = vld [vmem:[#allocation16 + $0x1c0] sm:$0xff]
    %v2887 = vld [vmem:[#allocation16 + $0x1c8] sm:$0xff]
    %v2888 = vld [vmem:[#allocation16 + $0x1d0] sm:$0xff]
    %v2889 = vld [vmem:[#allocation16 + $0x1d8] sm:$0xf]
    %v2890 = vld [vmem:[#allocation16 + $0x1dc] sm:$0xff]
    %v2891 = vld [vmem:[#allocation16 + $0x1e4] sm:$0xff]
    %v2892 = vld [vmem:[#allocation16 + $0x1ec] sm:$0xff]
    %v2893 = vld [vmem:[#allocation16 + $0x1f4] sm:$0xf]
    %v2894 = vld [vmem:[#allocation16 + $0x1f8] sm:$0xff]
    %v2895 = vld [vmem:[#allocation16 + $0x200] sm:$0xff]
    %v2896 = vld [vmem:[#allocation16 + $0x208] sm:$0xff]
    %v2897 = vld [vmem:[#allocation16 + $0x210] sm:$0xf]
    %v2898 = vld [vmem:[#allocation16 + $0x214] sm:$0xff]
    %v2899 = vld [vmem:[#allocation16 + $0x21c] sm:$0xff]
    %v2900 = vld [vmem:[#allocation16 + $0x224] sm:$0xff]
    %v2901 = vld [vmem:[#allocation16 + $0x22c] sm:$0xf]
    %v2902 = vld [vmem:[#allocation16 + $0x230] sm:$0xff]
    %v2903 = vld [vmem:[#allocation16 + $0x238] sm:$0xff]
    %v2904 = vld [vmem:[#allocation16 + $0x240] sm:$0xff]
    %v2905 = vld [vmem:[#allocation16 + $0x248] sm:$0xf]
    %v2906 = vld [vmem:[#allocation16 + $0x24c] sm:$0xff]
    %v2907 = vld [vmem:[#allocation16 + $0x254] sm:$0xff]
    %v2908 = vld [vmem:[#allocation16 + $0x25c] sm:$0xff]
    %v2909 = vld [vmem:[#allocation16 + $0x264] sm:$0xf]
    %v2910 = vld [vmem:[#allocation16 + $0x268] sm:$0xff]
    %v2911 = vld [vmem:[#allocation16 + $0x270] sm:$0xff]
    %v2912 = vld [vmem:[#allocation16 + $0x278] sm:$0xff]
    %v2913 = vld [vmem:[#allocation16 + $0x280] sm:$0xf]
    %v2914 = vld [vmem:[#allocation16 + $0x284] sm:$0xff]
    %v2915 = vld [vmem:[#allocation16 + $0x28c] sm:$0xff]
    %v2916 = vld [vmem:[#allocation16 + $0x294] sm:$0xff]
    %v2917 = vld [vmem:[#allocation16 + $0x29c] sm:$0xf]
    %v2918 = vld [vmem:[#allocation16 + $0x2a0] sm:$0xff]
    %v2919 = vld [vmem:[#allocation16 + $0x2a8] sm:$0xff]
    %v2920 = vld [vmem:[#allocation16 + $0x2b0] sm:$0xff]
    %v2921 = vld [vmem:[#allocation16 + $0x2b8] sm:$0xf]
    %v2922 = vld [vmem:[#allocation16 + $0x2bc] sm:$0xff]
    %v2923 = vld [vmem:[#allocation16 + $0x2c4] sm:$0xff]
    %v2924 = vld [vmem:[#allocation16 + $0x2cc] sm:$0xff]
    %v2925 = vld [vmem:[#allocation16 + $0x2d4] sm:$0xf]
    %v2926 = vld [vmem:[#allocation16 + $0x2d8] sm:$0xff]
    %v2927 = vld [vmem:[#allocation16 + $0x2e0] sm:$0xff]
    %v2928 = vld [vmem:[#allocation16 + $0x2e8] sm:$0xff]
    %v2929 = vld [vmem:[#allocation16 + $0x2f0] sm:$0xf]
    %v2930 = vld [vmem:[#allocation16 + $0x2f4] sm:$0xff]
    %v2931 = vld [vmem:[#allocation16 + $0x2fc] sm:$0xff]
    %v2932 = vld [vmem:[#allocation16 + $0x304] sm:$0xff]
    %v2933 = vld [vmem:[#allocation16 + $0x30c] sm:$0xf]
    %v2934 = vld [vmem:[#allocation16 + $0x310] sm:$0xff]
    %v2935 = vld [vmem:[#allocation16 + $0x318] sm:$0xff]
    %v2936 = vld [vmem:[#allocation16 + $0x320] sm:$0xff]
    %v2937 = vld [vmem:[#allocation16 + $0x328] sm:$0xf]
    %v2938 = vld [vmem:[#allocation16 + $0x32c] sm:$0xff]
    %v2939 = vld [vmem:[#allocation16 + $0x334] sm:$0xff]
    %v2940 = vld [vmem:[#allocation16 + $0x33c] sm:$0xff]
    %v2941 = vld [vmem:[#allocation16 + $0x344] sm:$0xf]
    %v2942 = vld [vmem:[#allocation16 + $0x348] sm:$0xff]
    %v2943 = vld [vmem:[#allocation16 + $0x350] sm:$0xff]
    %v2944 = vld [vmem:[#allocation16 + $0x358] sm:$0xff]
    %v2945 = vld [vmem:[#allocation16 + $0x360] sm:$0xf]
    %v2946 = vld [vmem:[#allocation16 + $0x364] sm:$0xff]
    %v2947 = vld [vmem:[#allocation16 + $0x36c] sm:$0xff]
    %v2948 = vld [vmem:[#allocation16 + $0x374] sm:$0xff]
    %v2949 = vld [vmem:[#allocation16 + $0x37c] sm:$0xf]
    %v2950 = vld [vmem:[#allocation16 + $0x380] sm:$0xff]
    %v2951 = vld [vmem:[#allocation16 + $0x388] sm:$0xff]
    %v2952 = vld [vmem:[#allocation16 + $0x390] sm:$0xff]
    %v2953 = vld [vmem:[#allocation16 + $0x398] sm:$0xf]
    %v2954 = vld [vmem:[#allocation16 + $0x39c] sm:$0xff]
    %v2955 = vld [vmem:[#allocation16 + $0x3a4] sm:$0xff]
    %v2956 = vld [vmem:[#allocation16 + $0x3ac] sm:$0xff]
    %v2957 = vld [vmem:[#allocation16 + $0x3b4] sm:$0xf]
    %v2958 = vld [vmem:[#allocation16 + $0x3b8] sm:$0xff]
    %v2959 = vld [vmem:[#allocation16 + $0x3c0] sm:$0xff]
    %v2960 = vld [vmem:[#allocation16 + $0x3c8] sm:$0xff]
    %v2961 = vld [vmem:[#allocation16 + $0x3d0] sm:$0xf]
    %v2962 = vld [vmem:[#allocation16 + $0x3d4] sm:$0xff]
    %v2963 = vld [vmem:[#allocation16 + $0x3dc] sm:$0xff]
    %v2964 = vld [vmem:[#allocation16 + $0x3e4] sm:$0xff]
    %v2965 = vld [vmem:[#allocation16 + $0x3ec] sm:$0xf]
    %v2966 = vld [vmem:[#allocation16 + $0x3f0] sm:$0xff]
    %v2967 = vld [vmem:[#allocation16 + $0x3f8] sm:$0xff]
    %v2968 = vld [vmem:[#allocation16 + $0x400] sm:$0xff]
    %v2969 = vld [vmem:[#allocation16 + $0x408] sm:$0xf]
    %v2970 = vld [vmem:[#allocation16 + $0x40c] sm:$0xff]
    %v2971 = vld [vmem:[#allocation16 + $0x414] sm:$0xff]
    %v2972 = vld [vmem:[#allocation16 + $0x41c] sm:$0xff]
    %v2973 = vld [vmem:[#allocation16 + $0x424] sm:$0xf]
    %v2974 = vld [vmem:[#allocation16 + $0x428] sm:$0xff]
    %v2975 = vld [vmem:[#allocation16 + $0x430] sm:$0xff]
    %v2976 = vld [vmem:[#allocation16 + $0x438] sm:$0xff]
    %v2977 = vld [vmem:[#allocation16 + $0x440] sm:$0xf]
    %v2978 = vld [vmem:[#allocation16 + $0x444] sm:$0xff]
    %v2979 = vld [vmem:[#allocation16 + $0x44c] sm:$0xff]
    %v2980 = vld [vmem:[#allocation16 + $0x454] sm:$0xff]
    %v2981 = vld [vmem:[#allocation16 + $0x45c] sm:$0xf]
    %v2982 = vld [vmem:[#allocation16 + $0x460] sm:$0xff]
    %v2983 = vld [vmem:[#allocation16 + $0x468] sm:$0xff]
    %v2984 = vld [vmem:[#allocation16 + $0x470] sm:$0xff]
    %v2985 = vld [vmem:[#allocation16 + $0x478] sm:$0xf]
    %v2986 = vld [vmem:[#allocation16 + $0x47c] sm:$0xff]
    %v2987 = vld [vmem:[#allocation16 + $0x484] sm:$0xff]
    %v2988 = vld [vmem:[#allocation16 + $0x48c] sm:$0xff]
    %v2989 = vld [vmem:[#allocation16 + $0x494] sm:$0xf]
    %v2990 = vld [vmem:[#allocation16 + $0x498] sm:$0xff]
    %v2991 = vld [vmem:[#allocation16 + $0x4a0] sm:$0xff]
    %v2992 = vld [vmem:[#allocation16 + $0x4a8] sm:$0xff]
    %v2993 = vld [vmem:[#allocation16 + $0x4b0] sm:$0xf]
    %v2994 = vld [vmem:[#allocation16 + $0x4b4] sm:$0xff]
    %v2995 = vld [vmem:[#allocation16 + $0x4bc] sm:$0xff]
    %v2996 = vld [vmem:[#allocation16 + $0x4c4] sm:$0xff]
    %v2997 = vld [vmem:[#allocation16 + $0x4cc] sm:$0xf]
    %v2998 = vld [vmem:[#allocation16 + $0x4d0] sm:$0xff]
    %v2999 = vld [vmem:[#allocation16 + $0x4d8] sm:$0xff]
    %v3000 = vld [vmem:[#allocation16 + $0x4e0] sm:$0xff]
    %v3001 = vld [vmem:[#allocation16 + $0x4e8] sm:$0xf]
    %v3002 = vld [vmem:[#allocation16 + $0x4ec] sm:$0xff]
    %v3003 = vld [vmem:[#allocation16 + $0x4f4] sm:$0xff]
    %v3004 = vld [vmem:[#allocation16 + $0x4fc] sm:$0xff]
    %v3005 = vld [vmem:[#allocation16 + $0x504] sm:$0xf]
    %v3006 = vld [vmem:[#allocation16 + $0x508] sm:$0xff]
    %v3007 = vld [vmem:[#allocation16 + $0x510] sm:$0xff]
    %v3008 = vld [vmem:[#allocation16 + $0x518] sm:$0xff]
    %v3009 = vld [vmem:[#allocation16 + $0x520] sm:$0xf]
    %v3010 = vld [vmem:[#allocation16 + $0x524] sm:$0xff]
    %v3011 = vld [vmem:[#allocation16 + $0x52c] sm:$0xff]
    %v3012 = vld [vmem:[#allocation16 + $0x534] sm:$0xff]
    %v3013 = vld [vmem:[#allocation16 + $0x53c] sm:$0xf]
    %v3014 = vld [vmem:[#allocation16 + $0x540] sm:$0xff]
    %v3015 = vld [vmem:[#allocation16 + $0x548] sm:$0xff]
    %v3016 = vld [vmem:[#allocation16 + $0x550] sm:$0xff]
    %v3017 = vld [vmem:[#allocation16 + $0x558] sm:$0xf]
    %v3018 = vld [vmem:[#allocation16 + $0x55c] sm:$0xff]
    %v3019 = vld [vmem:[#allocation16 + $0x564] sm:$0xff]
    %v3020 = vld [vmem:[#allocation16 + $0x56c] sm:$0xff]
    %v3021 = vld [vmem:[#allocation16 + $0x574] sm:$0xf]
    %v3022 = vld [vmem:[#allocation16 + $0x578] sm:$0xff]
    %v3023 = vld [vmem:[#allocation16 + $0x580] sm:$0xff]
    %v3024 = vld [vmem:[#allocation16 + $0x588] sm:$0xff]
    %v3025 = vld [vmem:[#allocation16 + $0x590] sm:$0xf]
    %v3026 = vld [vmem:[#allocation16 + $0x594] sm:$0xff]
    %v3027 = vld [vmem:[#allocation16 + $0x59c] sm:$0xff]
    %v3028 = vld [vmem:[#allocation16 + $0x5a4] sm:$0xff]
    %v3029 = vld [vmem:[#allocation16 + $0x5ac] sm:$0xf]
    %v3030 = vld [vmem:[#allocation16 + $0x5b0] sm:$0xff]
    %v3031 = vld [vmem:[#allocation16 + $0x5b8] sm:$0xff]
    %v3032 = vld [vmem:[#allocation16 + $0x5c0] sm:$0xff]
    %v3033 = vld [vmem:[#allocation16 + $0x5c8] sm:$0xf]
    %v3034 = vld [vmem:[#allocation16 + $0x5cc] sm:$0xff]
    %v3035 = vld [vmem:[#allocation16 + $0x5d4] sm:$0xff]
    %v3036 = vld [vmem:[#allocation16 + $0x5dc] sm:$0xff]
    %v3037 = vld [vmem:[#allocation16 + $0x5e4] sm:$0xf]
    %v3038 = vld [vmem:[#allocation16 + $0x5e8] sm:$0xff]
    %v3039 = vld [vmem:[#allocation16 + $0x5f0] sm:$0xff]
    %v3040 = vld [vmem:[#allocation16 + $0x5f8] sm:$0xff]
    %v3041 = vld [vmem:[#allocation16 + $0x600] sm:$0xf]
    %v3042 = vld [vmem:[#allocation16 + $0x604] sm:$0xff]
    %v3043 = vld [vmem:[#allocation16 + $0x60c] sm:$0xff]
    %v3044 = vld [vmem:[#allocation16 + $0x614] sm:$0xff]
    %v3045 = vld [vmem:[#allocation16 + $0x61c] sm:$0xf]
    %v3046 = vld [vmem:[#allocation16 + $0x620] sm:$0xff]
    %v3047 = vld [vmem:[#allocation16 + $0x628] sm:$0xff]
    %v3048 = vld [vmem:[#allocation16 + $0x630] sm:$0xff]
    %v3049 = vld [vmem:[#allocation16 + $0x638] sm:$0xf]
    %v3050 = vld [vmem:[#allocation16 + $0x63c] sm:$0xff]
    %v3051 = vld [vmem:[#allocation16 + $0x644] sm:$0xff]
    %v3052 = vld [vmem:[#allocation16 + $0x64c] sm:$0xff]
    %v3053 = vld [vmem:[#allocation16 + $0x654] sm:$0xf]
    %v3054 = vld [vmem:[#allocation16 + $0x658] sm:$0xff]
    %v3055 = vld [vmem:[#allocation16 + $0x660] sm:$0xff]
    %v3056 = vld [vmem:[#allocation16 + $0x668] sm:$0xff]
    %v3057 = vld [vmem:[#allocation16 + $0x670] sm:$0xf]
    %v3058 = vld [vmem:[#allocation16 + $0x674] sm:$0xff]
    %v3059 = vld [vmem:[#allocation16 + $0x67c] sm:$0xff]
    %v3060 = vld [vmem:[#allocation16 + $0x684] sm:$0xff]
    %v3061 = vld [vmem:[#allocation16 + $0x68c] sm:$0xf]
    %v3062 = vld [vmem:[#allocation16 + $0x690] sm:$0xff]
    %v3063 = vld [vmem:[#allocation16 + $0x698] sm:$0xff]
    %v3064 = vld [vmem:[#allocation16 + $0x6a0] sm:$0xff]
    %v3065 = vld [vmem:[#allocation16 + $0x6a8] sm:$0xf]
    %v3066 = vld [vmem:[#allocation16 + $0x6ac] sm:$0xff]
    %v3067 = vld [vmem:[#allocation16 + $0x6b4] sm:$0xff]
    %v3068 = vld [vmem:[#allocation16 + $0x6bc] sm:$0xff]
    %v3069 = vld [vmem:[#allocation16 + $0x6c4] sm:$0xf]
    %v3070 = vld [vmem:[#allocation16 + $0x6c8] sm:$0xff]
    %v3071 = vld [vmem:[#allocation16 + $0x6d0] sm:$0xff]
    %v3072 = vld [vmem:[#allocation16 + $0x6d8] sm:$0xff]
    %v3073 = vld [vmem:[#allocation16 + $0x6e0] sm:$0xf]
    %v3074 = vld [vmem:[#allocation16 + $0x6e4] sm:$0xff]
    %v3075 = vld [vmem:[#allocation16 + $0x6ec] sm:$0xff]
    %v3076 = vld [vmem:[#allocation16 + $0x6f4] sm:$0xff]
    %v3077 = vld [vmem:[#allocation16 + $0x6fc] sm:$0xf]
    %v3078 = vld [vmem:[#allocation16 + $0x700] sm:$0xff]
    %v3079 = vld [vmem:[#allocation16 + $0x708] sm:$0xff]
    %v3080 = vld [vmem:[#allocation16 + $0x710] sm:$0xff]
    %v3081 = vld [vmem:[#allocation16 + $0x718] sm:$0xf]
    %v3082 = vld [vmem:[#allocation16 + $0x71c] sm:$0xff]
    %v3083 = vld [vmem:[#allocation16 + $0x724] sm:$0xff]
    %v3084 = vld [vmem:[#allocation16 + $0x72c] sm:$0xff]
    %v3085 = vld [vmem:[#allocation16 + $0x734] sm:$0xf]
    %v3086 = vld [vmem:[#allocation16 + $0x738] sm:$0xff]
    %v3087 = vld [vmem:[#allocation16 + $0x740] sm:$0xff]
    %v3088 = vld [vmem:[#allocation16 + $0x748] sm:$0xff]
    %v3089 = vld [vmem:[#allocation16 + $0x750] sm:$0xf]
    %v3090 = vld [vmem:[#allocation16 + $0x754] sm:$0xff]
    %v3091 = vld [vmem:[#allocation16 + $0x75c] sm:$0xff]
    %v3092 = vld [vmem:[#allocation16 + $0x764] sm:$0xff]
    %v3093 = vld [vmem:[#allocation16 + $0x76c] sm:$0xf]
    %v3094 = vld [vmem:[#allocation16 + $0x770] sm:$0xff]
    %v3095 = vld [vmem:[#allocation16 + $0x778] sm:$0xff]
    %v3096 = vld [vmem:[#allocation16 + $0x780] sm:$0xff]
    %v3097 = vld [vmem:[#allocation16 + $0x788] sm:$0xf]
    %v3098 = vld [vmem:[#allocation16 + $0x78c] sm:$0xff]
    %v3099 = vld [vmem:[#allocation16 + $0x794] sm:$0xff]
    %v3100 = vld [vmem:[#allocation16 + $0x79c] sm:$0xff]
    %v3101 = vld [vmem:[#allocation16 + $0x7a4] sm:$0xf]
    %v3102 = vld [vmem:[#allocation16 + $0x7a8] sm:$0xff]
    %v3103 = vld [vmem:[#allocation16 + $0x7b0] sm:$0xff]
    %v3104 = vld [vmem:[#allocation16 + $0x7b8] sm:$0xff]
    %v3105 = vld [vmem:[#allocation16 + $0x7c0] sm:$0xf]
    %v3106 = vld [vmem:[#allocation16 + $0x7c4] sm:$0xff]
    %v3107 = vld [vmem:[#allocation16 + $0x7cc] sm:$0xff]
    %v3108 = vld [vmem:[#allocation16 + $0x7d4] sm:$0xff]
    %v3109 = vld [vmem:[#allocation16 + $0x7dc] sm:$0xf]
    %v3110 = vld [vmem:[#allocation16 + $0x7e0] sm:$0xff]
    %v3111 = vld [vmem:[#allocation16 + $0x7e8] sm:$0xff]
    %v3112 = vld [vmem:[#allocation16 + $0x7f0] sm:$0xff]
    %v3113 = vld [vmem:[#allocation16 + $0x7f8] sm:$0xf]
    %v3114 = vld [vmem:[#allocation16 + $0x7fc] sm:$0xff]
    %v3115 = vld [vmem:[#allocation16 + $0x804] sm:$0xff]
    %v3116 = vld [vmem:[#allocation16 + $0x80c] sm:$0xff]
    %v3117 = vld [vmem:[#allocation16 + $0x814] sm:$0xf]
    %v3118 = vld [vmem:[#allocation16 + $0x818] sm:$0xff]
    %v3119 = vld [vmem:[#allocation16 + $0x820] sm:$0xff]
    %v3120 = vld [vmem:[#allocation16 + $0x828] sm:$0xff]
    %v3121 = vld [vmem:[#allocation16 + $0x830] sm:$0xf]
    %v3122 = vld [vmem:[#allocation16 + $0x834] sm:$0xff]
    %v3123 = vld [vmem:[#allocation16 + $0x83c] sm:$0xff]
    %v3124 = vld [vmem:[#allocation16 + $0x844] sm:$0xff]
    %v3125 = vld [vmem:[#allocation16 + $0x84c] sm:$0xf]
    %v3126 = vld [vmem:[#allocation16 + $0x850] sm:$0xff]
    %v3127 = vld [vmem:[#allocation16 + $0x858] sm:$0xff]
    %v3128 = vld [vmem:[#allocation16 + $0x860] sm:$0xff]
    %v3129 = vld [vmem:[#allocation16 + $0x868] sm:$0xf]
    %v3130 = vld [vmem:[#allocation16 + $0x86c] sm:$0xff]
    %v3131 = vld [vmem:[#allocation16 + $0x874] sm:$0xff]
    %v3132 = vld [vmem:[#allocation16 + $0x87c] sm:$0xff]
    %v3133 = vld [vmem:[#allocation16 + $0x884] sm:$0xf]
    %v3134 = vld [vmem:[#allocation16 + $0x888] sm:$0xff]
    %v3135 = vld [vmem:[#allocation16 + $0x890] sm:$0xff]
    %v3136 = vld [vmem:[#allocation16 + $0x898] sm:$0xff]
    %v3137 = vld [vmem:[#allocation16 + $0x8a0] sm:$0xf]
    %v3138 = vld [vmem:[#allocation16 + $0x8a4] sm:$0xff]
    %v3139 = vld [vmem:[#allocation16 + $0x8ac] sm:$0xff]
    %v3140 = vld [vmem:[#allocation16 + $0x8b4] sm:$0xff]
    %v3141 = vld [vmem:[#allocation16 + $0x8bc] sm:$0xf]
    %v3142 = vld [vmem:[#allocation16 + $0x8c0] sm:$0xff]
    %v3143 = vld [vmem:[#allocation16 + $0x8c8] sm:$0xff]
    %v3144 = vld [vmem:[#allocation16 + $0x8d0] sm:$0xff]
    %v3145 = vld [vmem:[#allocation16 + $0x8d8] sm:$0xf]
    %v3146 = vld [vmem:[#allocation16 + $0x8dc] sm:$0xff]
    %v3147 = vld [vmem:[#allocation16 + $0x8e4] sm:$0xff]
    %v3148 = vld [vmem:[#allocation16 + $0x8ec] sm:$0xff]
    %v3149 = vld [vmem:[#allocation16 + $0x8f4] sm:$0xf]
    %v3150 = vld [vmem:[#allocation16 + $0x8f8] sm:$0xff]
    %v3151 = vld [vmem:[#allocation16 + $0x900] sm:$0xff]
    %v3152 = vld [vmem:[#allocation16 + $0x908] sm:$0xff]
    %v3153 = vld [vmem:[#allocation16 + $0x910] sm:$0xf]
    %v3154 = vld [vmem:[#allocation16 + $0x914] sm:$0xff]
    %v3155 = vld [vmem:[#allocation16 + $0x91c] sm:$0xff]
    %v3156 = vld [vmem:[#allocation16 + $0x924] sm:$0xff]
    %v3157 = vld [vmem:[#allocation16 + $0x92c] sm:$0xf]
    %v3158 = vld [vmem:[#allocation16 + $0x930] sm:$0xff]
    %v3159 = vld [vmem:[#allocation16 + $0x938] sm:$0xff]
    %v3160 = vld [vmem:[#allocation16 + $0x940] sm:$0xff]
    %v3161 = vld [vmem:[#allocation16 + $0x948] sm:$0xf]
    %v3162 = vld [vmem:[#allocation16 + $0x94c] sm:$0xff]
    %v3163 = vld [vmem:[#allocation16 + $0x954] sm:$0xff]
    %v3164 = vld [vmem:[#allocation16 + $0x95c] sm:$0xff]
    %v3165 = vld [vmem:[#allocation16 + $0x964] sm:$0xf]
    %v3166 = vld [vmem:[#allocation16 + $0x968] sm:$0xff]
    %v3167 = vld [vmem:[#allocation16 + $0x970] sm:$0xff]
    %v3168 = vld [vmem:[#allocation16 + $0x978] sm:$0xff]
    %v3169 = vld [vmem:[#allocation16 + $0x980] sm:$0xf]
    %v3170 = vld [vmem:[#allocation16 + $0x984] sm:$0xff]
    %v3171 = vld [vmem:[#allocation16 + $0x98c] sm:$0xff]
    %v3172 = vld [vmem:[#allocation16 + $0x994] sm:$0xff]
    %v3173 = vld [vmem:[#allocation16 + $0x99c] sm:$0xf]
    %v3174 = vld [vmem:[#allocation16 + $0x9a0] sm:$0xff]
    %v3175 = vld [vmem:[#allocation16 + $0x9a8] sm:$0xff]
    %v3176 = vld [vmem:[#allocation16 + $0x9b0] sm:$0xff]
    %v3177 = vld [vmem:[#allocation16 + $0x9b8] sm:$0xf]
    %v3178 = vld [vmem:[#allocation16 + $0x9bc] sm:$0xff]
    %v3179 = vld [vmem:[#allocation16 + $0x9c4] sm:$0xff]
    %v3180 = vld [vmem:[#allocation16 + $0x9cc] sm:$0xff]
    %v3181 = vld [vmem:[#allocation16 + $0x9d4] sm:$0xf]
    %v3182 = vld [vmem:[#allocation16 + $0x9d8] sm:$0xff]
    %v3183 = vld [vmem:[#allocation16 + $0x9e0] sm:$0xff]
    %v3184 = vld [vmem:[#allocation16 + $0x9e8] sm:$0xff]
    %v3185 = vld [vmem:[#allocation16 + $0x9f0] sm:$0xf]
    %v3186 = vld [vmem:[#allocation16 + $0x9f4] sm:$0xff]
    %v3187 = vld [vmem:[#allocation16 + $0x9fc] sm:$0xff]
    %v3188 = vld [vmem:[#allocation16 + $0xa04] sm:$0xff]
    %v3189 = vld [vmem:[#allocation16 + $0xa0c] sm:$0xf]
    %v3190 = vld [vmem:[#allocation16 + $0xa10] sm:$0xff]
    %v3191 = vld [vmem:[#allocation16 + $0xa18] sm:$0xff]
    %v3192 = vld [vmem:[#allocation16 + $0xa20] sm:$0xff]
    %v3193 = vld [vmem:[#allocation16 + $0xa28] sm:$0xf]
    %v3194 = vld [vmem:[#allocation16 + $0xa2c] sm:$0xff]
    %v3195 = vld [vmem:[#allocation16 + $0xa34] sm:$0xff]
    %v3196 = vld [vmem:[#allocation16 + $0xa3c] sm:$0xff]
    %v3197 = vld [vmem:[#allocation16 + $0xa44] sm:$0xf]
    %v3198 = vld [vmem:[#allocation16 + $0xa48] sm:$0xff]
    %v3199 = vld [vmem:[#allocation16 + $0xa50] sm:$0xff]
    %v3200 = vld [vmem:[#allocation16 + $0xa58] sm:$0xff]
    %v3201 = vld [vmem:[#allocation16 + $0xa60] sm:$0xf]
    %v3202 = vld [vmem:[#allocation16 + $0xa64] sm:$0xff]
    %v3203 = vld [vmem:[#allocation16 + $0xa6c] sm:$0xff]
    %v3204 = vld [vmem:[#allocation16 + $0xa74] sm:$0xff]
    %v3205 = vld [vmem:[#allocation16 + $0xa7c] sm:$0xf]
    %v3206 = vld [vmem:[#allocation16 + $0xa80] sm:$0xff]
    %v3207 = vld [vmem:[#allocation16 + $0xa88] sm:$0xff]
    %v3208 = vld [vmem:[#allocation16 + $0xa90] sm:$0xff]
    %v3209 = vld [vmem:[#allocation16 + $0xa98] sm:$0xf]
    %v3210 = vld [vmem:[#allocation16 + $0xa9c] sm:$0xff]
    %v3211 = vld [vmem:[#allocation16 + $0xaa4] sm:$0xff]
    %v3212 = vld [vmem:[#allocation16 + $0xaac] sm:$0xff]
    %v3213 = vld [vmem:[#allocation16 + $0xab4] sm:$0xf]
    %v3214 = vld [vmem:[#allocation16 + $0xab8] sm:$0xff]
    %v3215 = vld [vmem:[#allocation16 + $0xac0] sm:$0xff]
    %v3216 = vld [vmem:[#allocation16 + $0xac8] sm:$0xff]
    %v3217 = vld [vmem:[#allocation16 + $0xad0] sm:$0xf]
    %v3218 = vld [vmem:[#allocation16 + $0xad4] sm:$0xff]
    %v3219 = vld [vmem:[#allocation16 + $0xadc] sm:$0xff]
    %v3220 = vld [vmem:[#allocation16 + $0xae4] sm:$0xff]
    %v3221 = vld [vmem:[#allocation16 + $0xaec] sm:$0xf]
    %v3222 = vld [vmem:[#allocation16 + $0xaf0] sm:$0xff]
    %v3223 = vld [vmem:[#allocation16 + $0xaf8] sm:$0xff]
    %v3224 = vld [vmem:[#allocation16 + $0xb00] sm:$0xff]
    %v3225 = vld [vmem:[#allocation16 + $0xb08] sm:$0xf]
    %v3226 = vld [vmem:[#allocation16 + $0xb0c] sm:$0xff]
    %v3227 = vld [vmem:[#allocation16 + $0xb14] sm:$0xff]
    %v3228 = vld [vmem:[#allocation16 + $0xb1c] sm:$0xff]
    %v3229 = vld [vmem:[#allocation16 + $0xb24] sm:$0xf]
    %v3230 = vld [vmem:[#allocation16 + $0xb28] sm:$0xff]
    %v3231 = vld [vmem:[#allocation16 + $0xb30] sm:$0xff]
    %v3232 = vld [vmem:[#allocation16 + $0xb38] sm:$0xff]
    %v3233 = vld [vmem:[#allocation16 + $0xb40] sm:$0xf]
    %v3234 = vld [vmem:[#allocation16 + $0xb44] sm:$0xff]
    %v3235 = vld [vmem:[#allocation16 + $0xb4c] sm:$0xff]
    %v3236 = vld [vmem:[#allocation16 + $0xb54] sm:$0xff]
    %v3237 = vld [vmem:[#allocation16 + $0xb5c] sm:$0xf]
    %v3238 = vld [vmem:[#allocation16 + $0xb60] sm:$0xff]
    %v3239 = vld [vmem:[#allocation16 + $0xb68] sm:$0xff]
    %v3240 = vld [vmem:[#allocation16 + $0xb70] sm:$0xff]
    %v3241 = vld [vmem:[#allocation16 + $0xb78] sm:$0xf]
    %v3242 = vld [vmem:[#allocation16 + $0xb7c] sm:$0xff]
    %v3243 = vld [vmem:[#allocation16 + $0xb84] sm:$0xff]
    %v3244 = vld [vmem:[#allocation16 + $0xb8c] sm:$0xff]
    %v3245 = vld [vmem:[#allocation16 + $0xb94] sm:$0xf]
    %v3246 = vld [vmem:[#allocation16 + $0xb98] sm:$0xff]
    %v3247 = vld [vmem:[#allocation16 + $0xba0] sm:$0xff]
    %v3248 = vld [vmem:[#allocation16 + $0xba8] sm:$0xff]
    %v3249 = vld [vmem:[#allocation16 + $0xbb0] sm:$0xf]
    %v3250 = vld [vmem:[#allocation16 + $0xbb4] sm:$0xff]
    %v3251 = vld [vmem:[#allocation16 + $0xbbc] sm:$0xff]
    %v3252 = vld [vmem:[#allocation16 + $0xbc4] sm:$0xff]
    %v3253 = vld [vmem:[#allocation16 + $0xbcc] sm:$0xf]
    %v3254 = vld [vmem:[#allocation16 + $0xbd0] sm:$0xff]
    %v3255 = vld [vmem:[#allocation16 + $0xbd8] sm:$0xff]
    %v3256 = vld [vmem:[#allocation16 + $0xbe0] sm:$0xff]
    %v3257 = vld [vmem:[#allocation16 + $0xbe8] sm:$0xf]
    %v3258 = vld [vmem:[#allocation16 + $0xbec] sm:$0xff]
    %v3259 = vld [vmem:[#allocation16 + $0xbf4] sm:$0xff]
    %v3260 = vld [vmem:[#allocation16 + $0xbfc] sm:$0xff]
    %v3261 = vld [vmem:[#allocation16 + $0xc04] sm:$0xf]
    %v3262 = vld [vmem:[#allocation16 + $0xc08] sm:$0xff]
    %v3263 = vld [vmem:[#allocation16 + $0xc10] sm:$0xff]
    %v3264 = vld [vmem:[#allocation16 + $0xc18] sm:$0xff]
    %v3265 = vld [vmem:[#allocation16 + $0xc20] sm:$0xf]
    %v3266 = vld [vmem:[#allocation16 + $0xc24] sm:$0xff]
    %v3267 = vld [vmem:[#allocation16 + $0xc2c] sm:$0xff]
    %v3268 = vld [vmem:[#allocation16 + $0xc34] sm:$0xff]
    %v3269 = vld [vmem:[#allocation16 + $0xc3c] sm:$0xf]
    %v3270 = vld [vmem:[#allocation16 + $0xc40] sm:$0xff]
    %v3271 = vld [vmem:[#allocation16 + $0xc48] sm:$0xff]
    %v3272 = vld [vmem:[#allocation16 + $0xc50] sm:$0xff]
    %v3273 = vld [vmem:[#allocation16 + $0xc58] sm:$0xf]
    %v3274 = vld [vmem:[#allocation16 + $0xc5c] sm:$0xff]
    %v3275 = vld [vmem:[#allocation16 + $0xc64] sm:$0xff]
    %v3276 = vld [vmem:[#allocation16 + $0xc6c] sm:$0xff]
    %v3277 = vld [vmem:[#allocation16 + $0xc74] sm:$0xf]
    %v3278 = vld [vmem:[#allocation16 + $0xc78] sm:$0xff]
    %v3279 = vld [vmem:[#allocation16 + $0xc80] sm:$0xff]
    %v3280 = vld [vmem:[#allocation16 + $0xc88] sm:$0xff]
    %v3281 = vld [vmem:[#allocation16 + $0xc90] sm:$0xf]
    %v3282 = vld [vmem:[#allocation16 + $0xc94] sm:$0xff]
    %v3283 = vld [vmem:[#allocation16 + $0xc9c] sm:$0xff]
    %v3284 = vld [vmem:[#allocation16 + $0xca4] sm:$0xff]
    %v3285 = vld [vmem:[#allocation16 + $0xcac] sm:$0xf]
    %v3286 = vld [vmem:[#allocation16 + $0xcb0] sm:$0xff]
    %v3287 = vld [vmem:[#allocation16 + $0xcb8] sm:$0xff]
    %v3288 = vld [vmem:[#allocation16 + $0xcc0] sm:$0xff]
    %v3289 = vld [vmem:[#allocation16 + $0xcc8] sm:$0xf]
    %v3290 = vld [vmem:[#allocation16 + $0xccc] sm:$0xff]
    %v3291 = vld [vmem:[#allocation16 + $0xcd4] sm:$0xff]
    %v3292 = vld [vmem:[#allocation16 + $0xcdc] sm:$0xff]
    %v3293 = vld [vmem:[#allocation16 + $0xce4] sm:$0xf]
    %v3294 = vld [vmem:[#allocation16 + $0xce8] sm:$0xff]
    %v3295 = vld [vmem:[#allocation16 + $0xcf0] sm:$0xff]
    %v3296 = vld [vmem:[#allocation16 + $0xcf8] sm:$0xff]
    %v3297 = vld [vmem:[#allocation16 + $0xd00] sm:$0xf]
    %v3298 = vld [vmem:[#allocation16 + $0xd04] sm:$0xff]
    %v3299 = vld [vmem:[#allocation16 + $0xd0c] sm:$0xff]
    %v3300 = vld [vmem:[#allocation16 + $0xd14] sm:$0xff]
    %v3301 = vld [vmem:[#allocation16 + $0xd1c] sm:$0xf]
    %v3302 = vld [vmem:[#allocation16 + $0xd20] sm:$0xff]
    %v3303 = vld [vmem:[#allocation16 + $0xd28] sm:$0xff]
    %v3304 = vld [vmem:[#allocation16 + $0xd30] sm:$0xff]
    %v3305 = vld [vmem:[#allocation16 + $0xd38] sm:$0xf]
    %v3306 = vld [vmem:[#allocation16 + $0xd3c] sm:$0xff]
    %v3307 = vld [vmem:[#allocation16 + $0xd44] sm:$0xff]
    %v3308 = vld [vmem:[#allocation16 + $0xd4c] sm:$0xff]
    %v3309 = vld [vmem:[#allocation16 + $0xd54] sm:$0xf]
    %v3310 = vld [vmem:[#allocation16 + $0xd58] sm:$0xff]
    %v3311 = vld [vmem:[#allocation16 + $0xd60] sm:$0xff]
    %v3312 = vld [vmem:[#allocation16 + $0xd68] sm:$0xff]
    %v3313 = vld [vmem:[#allocation16 + $0xd70] sm:$0xf]
    %v3314 = vld [vmem:[#allocation16 + $0xd74] sm:$0xff]
    %v3315 = vld [vmem:[#allocation16 + $0xd7c] sm:$0xff]
    %v3316 = vld [vmem:[#allocation16 + $0xd84] sm:$0xff]
    %v3317 = vld [vmem:[#allocation16 + $0xd8c] sm:$0xf]
    %v3318 = vld [vmem:[#allocation16 + $0xd90] sm:$0xff]
    %v3319 = vld [vmem:[#allocation16 + $0xd98] sm:$0xff]
    %v3320 = vld [vmem:[#allocation16 + $0xda0] sm:$0xff]
    %v3321 = vld [vmem:[#allocation16 + $0xda8] sm:$0xf]
    %v3322 = vld [vmem:[#allocation16 + $0xdac] sm:$0xff]
    %v3323 = vld [vmem:[#allocation16 + $0xdb4] sm:$0xff]
    %v3324 = vld [vmem:[#allocation16 + $0xdbc] sm:$0xff]
    %v3325 = vld [vmem:[#allocation16 + $0xdc4] sm:$0xf]
    %v3326 = vld [vmem:[#allocation16 + $0xdc8] sm:$0xff]
    %v3327 = vld [vmem:[#allocation16 + $0xdd0] sm:$0xff]
    %v3328 = vld [vmem:[#allocation16 + $0xdd8] sm:$0xff]
    %v3329 = vld [vmem:[#allocation16 + $0xde0] sm:$0xf]
    %v3330 = vld [vmem:[#allocation16 + $0xde4] sm:$0xff]
    %v3331 = vld [vmem:[#allocation16 + $0xdec] sm:$0xff]
    %v3332 = vld [vmem:[#allocation16 + $0xdf4] sm:$0xff]
    %v3333 = vld [vmem:[#allocation16 + $0xdfc] sm:$0xf]
    %v3334 = vld [vmem:[#allocation18] sm:$0xff]
    %v3847 = vunpack.c.l.b16 %v2822
    %v3848 = vunpack.c.h.b16 %v2822
    %v3849 = vunpack.c.l.b16 %v2823
    %v3850 = vunpack.c.h.b16 %v2823
    %v3851 = vunpack.c.l.b16 %v2824
    %v3852 = vunpack.c.h.b16 %v2824
    %v3853 = vunpack.c.l.b16 %v2825
    %v3854 = vunpack.c.l.b16 %v2826
    %v3855 = vunpack.c.h.b16 %v2826
    %v3856 = vunpack.c.l.b16 %v2827
    %v3857 = vunpack.c.h.b16 %v2827
    %v3858 = vunpack.c.l.b16 %v2828
    %v3859 = vunpack.c.h.b16 %v2828
    %v3860 = vunpack.c.l.b16 %v2829
    %v3861 = vunpack.c.l.b16 %v2830
    %v3862 = vunpack.c.h.b16 %v2830
    %v3863 = vunpack.c.l.b16 %v2831
    %v3864 = vunpack.c.h.b16 %v2831
    %v3865 = vunpack.c.l.b16 %v2832
    %v3866 = vunpack.c.h.b16 %v2832
    %v3867 = vunpack.c.l.b16 %v2833
    %v3868 = vunpack.c.l.b16 %v2834
    %v3869 = vunpack.c.h.b16 %v2834
    %v3870 = vunpack.c.l.b16 %v2835
    %v3871 = vunpack.c.h.b16 %v2835
    %v3872 = vunpack.c.l.b16 %v2836
    %v3873 = vunpack.c.h.b16 %v2836
    %v3874 = vunpack.c.l.b16 %v2837
    %v3875 = vunpack.c.l.b16 %v2838
    %v3876 = vunpack.c.h.b16 %v2838
    %v3877 = vunpack.c.l.b16 %v2839
    %v3878 = vunpack.c.h.b16 %v2839
    %v3879 = vunpack.c.l.b16 %v2840
    %v3880 = vunpack.c.h.b16 %v2840
    %v3881 = vunpack.c.l.b16 %v2841
    %v3882 = vunpack.c.l.b16 %v2842
    %v3883 = vunpack.c.h.b16 %v2842
    %v3884 = vunpack.c.l.b16 %v2843
    %v3885 = vunpack.c.h.b16 %v2843
    %v3886 = vunpack.c.l.b16 %v2844
    %v3887 = vunpack.c.h.b16 %v2844
    %v3888 = vunpack.c.l.b16 %v2845
    %v3889 = vunpack.c.l.b16 %v2846
    %v3890 = vunpack.c.h.b16 %v2846
    %v3891 = vunpack.c.l.b16 %v2847
    %v3892 = vunpack.c.h.b16 %v2847
    %v3893 = vunpack.c.l.b16 %v2848
    %v3894 = vunpack.c.h.b16 %v2848
    %v3895 = vunpack.c.l.b16 %v2849
    %v3896 = vunpack.c.l.b16 %v2850
    %v3897 = vunpack.c.h.b16 %v2850
    %v3898 = vunpack.c.l.b16 %v2851
    %v3899 = vunpack.c.h.b16 %v2851
    %v3900 = vunpack.c.l.b16 %v2852
    %v3901 = vunpack.c.h.b16 %v2852
    %v3902 = vunpack.c.l.b16 %v2853
    %v3903 = vunpack.c.l.b16 %v2854
    %v3904 = vunpack.c.h.b16 %v2854
    %v3905 = vunpack.c.l.b16 %v2855
    %v3906 = vunpack.c.h.b16 %v2855
    %v3907 = vunpack.c.l.b16 %v2856
    %v3908 = vunpack.c.h.b16 %v2856
    %v3909 = vunpack.c.l.b16 %v2857
    %v3910 = vunpack.c.l.b16 %v2858
    %v3911 = vunpack.c.h.b16 %v2858
    %v3912 = vunpack.c.l.b16 %v2859
    %v3913 = vunpack.c.h.b16 %v2859
    %v3914 = vunpack.c.l.b16 %v2860
    %v3915 = vunpack.c.h.b16 %v2860
    %v3916 = vunpack.c.l.b16 %v2861
    %v3917 = vunpack.c.l.b16 %v2862
    %v3918 = vunpack.c.h.b16 %v2862
    %v3919 = vunpack.c.l.b16 %v2863
    %v3920 = vunpack.c.h.b16 %v2863
    %v3921 = vunpack.c.l.b16 %v2864
    %v3922 = vunpack.c.h.b16 %v2864
    %v3923 = vunpack.c.l.b16 %v2865
    %v3924 = vunpack.c.l.b16 %v2866
    %v3925 = vunpack.c.h.b16 %v2866
    %v3926 = vunpack.c.l.b16 %v2867
    %v3927 = vunpack.c.h.b16 %v2867
    %v3928 = vunpack.c.l.b16 %v2868
    %v3929 = vunpack.c.h.b16 %v2868
    %v3930 = vunpack.c.l.b16 %v2869
    %v3931 = vunpack.c.l.b16 %v2870
    %v3932 = vunpack.c.h.b16 %v2870
    %v3933 = vunpack.c.l.b16 %v2871
    %v3934 = vunpack.c.h.b16 %v2871
    %v3935 = vunpack.c.l.b16 %v2872
    %v3936 = vunpack.c.h.b16 %v2872
    %v3937 = vunpack.c.l.b16 %v2873
    %v3938 = vunpack.c.l.b16 %v2874
    %v3939 = vunpack.c.h.b16 %v2874
    %v3940 = vunpack.c.l.b16 %v2875
    %v3941 = vunpack.c.h.b16 %v2875
    %v3942 = vunpack.c.l.b16 %v2876
    %v3943 = vunpack.c.h.b16 %v2876
    %v3944 = vunpack.c.l.b16 %v2877
    %v3945 = vunpack.c.l.b16 %v2878
    %v3946 = vunpack.c.h.b16 %v2878
    %v3947 = vunpack.c.l.b16 %v2879
    %v3948 = vunpack.c.h.b16 %v2879
    %v3949 = vunpack.c.l.b16 %v2880
    %v3950 = vunpack.c.h.b16 %v2880
    %v3951 = vunpack.c.l.b16 %v2881
    %v3952 = vunpack.c.l.b16 %v2882
    %v3953 = vunpack.c.h.b16 %v2882
    %v3954 = vunpack.c.l.b16 %v2883
    %v3955 = vunpack.c.h.b16 %v2883
    %v3956 = vunpack.c.l.b16 %v2884
    %v3957 = vunpack.c.h.b16 %v2884
    %v3958 = vunpack.c.l.b16 %v2885
    %v3959 = vunpack.c.l.b16 %v2886
    %v3960 = vunpack.c.h.b16 %v2886
    %v3961 = vunpack.c.l.b16 %v2887
    %v3962 = vunpack.c.h.b16 %v2887
    %v3963 = vunpack.c.l.b16 %v2888
    %v3964 = vunpack.c.h.b16 %v2888
    %v3965 = vunpack.c.l.b16 %v2889
    %v3966 = vunpack.c.l.b16 %v2890
    %v3967 = vunpack.c.h.b16 %v2890
    %v3968 = vunpack.c.l.b16 %v2891
    %v3969 = vunpack.c.h.b16 %v2891
    %v3970 = vunpack.c.l.b16 %v2892
    %v3971 = vunpack.c.h.b16 %v2892
    %v3972 = vunpack.c.l.b16 %v2893
    %v3973 = vunpack.c.l.b16 %v2894
    %v3974 = vunpack.c.h.b16 %v2894
    %v3975 = vunpack.c.l.b16 %v2895
    %v3976 = vunpack.c.h.b16 %v2895
    %v3977 = vunpack.c.l.b16 %v2896
    %v3978 = vunpack.c.h.b16 %v2896
    %v3979 = vunpack.c.l.b16 %v2897
    %v3980 = vunpack.c.l.b16 %v2898
    %v3981 = vunpack.c.h.b16 %v2898
    %v3982 = vunpack.c.l.b16 %v2899
    %v3983 = vunpack.c.h.b16 %v2899
    %v3984 = vunpack.c.l.b16 %v2900
    %v3985 = vunpack.c.h.b16 %v2900
    %v3986 = vunpack.c.l.b16 %v2901
    %v3987 = vunpack.c.l.b16 %v2902
    %v3988 = vunpack.c.h.b16 %v2902
    %v3989 = vunpack.c.l.b16 %v2903
    %v3990 = vunpack.c.h.b16 %v2903
    %v3991 = vunpack.c.l.b16 %v2904
    %v3992 = vunpack.c.h.b16 %v2904
    %v3993 = vunpack.c.l.b16 %v2905
    %v3994 = vunpack.c.l.b16 %v2906
    %v3995 = vunpack.c.h.b16 %v2906
    %v3996 = vunpack.c.l.b16 %v2907
    %v3997 = vunpack.c.h.b16 %v2907
    %v3998 = vunpack.c.l.b16 %v2908
    %v3999 = vunpack.c.h.b16 %v2908
    %v4000 = vunpack.c.l.b16 %v2909
    %v4001 = vunpack.c.l.b16 %v2910
    %v4002 = vunpack.c.h.b16 %v2910
    %v4003 = vunpack.c.l.b16 %v2911
    %v4004 = vunpack.c.h.b16 %v2911
    %v4005 = vunpack.c.l.b16 %v2912
    %v4006 = vunpack.c.h.b16 %v2912
    %v4007 = vunpack.c.l.b16 %v2913
    %v4008 = vunpack.c.l.b16 %v2914
    %v4009 = vunpack.c.h.b16 %v2914
    %v4010 = vunpack.c.l.b16 %v2915
    %v4011 = vunpack.c.h.b16 %v2915
    %v4012 = vunpack.c.l.b16 %v2916
    %v4013 = vunpack.c.h.b16 %v2916
    %v4014 = vunpack.c.l.b16 %v2917
    %v4015 = vunpack.c.l.b16 %v2918
    %v4016 = vunpack.c.h.b16 %v2918
    %v4017 = vunpack.c.l.b16 %v2919
    %v4018 = vunpack.c.h.b16 %v2919
    %v4019 = vunpack.c.l.b16 %v2920
    %v4020 = vunpack.c.h.b16 %v2920
    %v4021 = vunpack.c.l.b16 %v2921
    %v4022 = vunpack.c.l.b16 %v2922
    %v4023 = vunpack.c.h.b16 %v2922
    %v4024 = vunpack.c.l.b16 %v2923
    %v4025 = vunpack.c.h.b16 %v2923
    %v4026 = vunpack.c.l.b16 %v2924
    %v4027 = vunpack.c.h.b16 %v2924
    %v4028 = vunpack.c.l.b16 %v2925
    %v4029 = vunpack.c.l.b16 %v2926
    %v4030 = vunpack.c.h.b16 %v2926
    %v4031 = vunpack.c.l.b16 %v2927
    %v4032 = vunpack.c.h.b16 %v2927
    %v4033 = vunpack.c.l.b16 %v2928
    %v4034 = vunpack.c.h.b16 %v2928
    %v4035 = vunpack.c.l.b16 %v2929
    %v4036 = vunpack.c.l.b16 %v2930
    %v4037 = vunpack.c.h.b16 %v2930
    %v4038 = vunpack.c.l.b16 %v2931
    %v4039 = vunpack.c.h.b16 %v2931
    %v4040 = vunpack.c.l.b16 %v2932
    %v4041 = vunpack.c.h.b16 %v2932
    %v4042 = vunpack.c.l.b16 %v2933
    %v4043 = vunpack.c.l.b16 %v2934
    %v4044 = vunpack.c.h.b16 %v2934
    %v4045 = vunpack.c.l.b16 %v2935
    %v4046 = vunpack.c.h.b16 %v2935
    %v4047 = vunpack.c.l.b16 %v2936
    %v4048 = vunpack.c.h.b16 %v2936
    %v4049 = vunpack.c.l.b16 %v2937
    %v4050 = vunpack.c.l.b16 %v2938
    %v4051 = vunpack.c.h.b16 %v2938
    %v4052 = vunpack.c.l.b16 %v2939
    %v4053 = vunpack.c.h.b16 %v2939
    %v4054 = vunpack.c.l.b16 %v2940
    %v4055 = vunpack.c.h.b16 %v2940
    %v4056 = vunpack.c.l.b16 %v2941
    %v4057 = vunpack.c.l.b16 %v2942
    %v4058 = vunpack.c.h.b16 %v2942
    %v4059 = vunpack.c.l.b16 %v2943
    %v4060 = vunpack.c.h.b16 %v2943
    %v4061 = vunpack.c.l.b16 %v2944
    %v4062 = vunpack.c.h.b16 %v2944
    %v4063 = vunpack.c.l.b16 %v2945
    %v4064 = vunpack.c.l.b16 %v2946
    %v4065 = vunpack.c.h.b16 %v2946
    %v4066 = vunpack.c.l.b16 %v2947
    %v4067 = vunpack.c.h.b16 %v2947
    %v4068 = vunpack.c.l.b16 %v2948
    %v4069 = vunpack.c.h.b16 %v2948
    %v4070 = vunpack.c.l.b16 %v2949
    %v4071 = vunpack.c.l.b16 %v2950
    %v4072 = vunpack.c.h.b16 %v2950
    %v4073 = vunpack.c.l.b16 %v2951
    %v4074 = vunpack.c.h.b16 %v2951
    %v4075 = vunpack.c.l.b16 %v2952
    %v4076 = vunpack.c.h.b16 %v2952
    %v4077 = vunpack.c.l.b16 %v2953
    %v4078 = vunpack.c.l.b16 %v2954
    %v4079 = vunpack.c.h.b16 %v2954
    %v4080 = vunpack.c.l.b16 %v2955
    %v4081 = vunpack.c.h.b16 %v2955
    %v4082 = vunpack.c.l.b16 %v2956
    %v4083 = vunpack.c.h.b16 %v2956
    %v4084 = vunpack.c.l.b16 %v2957
    %v4085 = vunpack.c.l.b16 %v2958
    %v4086 = vunpack.c.h.b16 %v2958
    %v4087 = vunpack.c.l.b16 %v2959
    %v4088 = vunpack.c.h.b16 %v2959
    %v4089 = vunpack.c.l.b16 %v2960
    %v4090 = vunpack.c.h.b16 %v2960
    %v4091 = vunpack.c.l.b16 %v2961
    %v4092 = vunpack.c.l.b16 %v2962
    %v4093 = vunpack.c.h.b16 %v2962
    %v4094 = vunpack.c.l.b16 %v2963
    %v4095 = vunpack.c.h.b16 %v2963
    %v4096 = vunpack.c.l.b16 %v2964
    %v4097 = vunpack.c.h.b16 %v2964
    %v4098 = vunpack.c.l.b16 %v2965
    %v4099 = vunpack.c.l.b16 %v2966
    %v4100 = vunpack.c.h.b16 %v2966
    %v4101 = vunpack.c.l.b16 %v2967
    %v4102 = vunpack.c.h.b16 %v2967
    %v4103 = vunpack.c.l.b16 %v2968
    %v4104 = vunpack.c.h.b16 %v2968
    %v4105 = vunpack.c.l.b16 %v2969
    %v4106 = vunpack.c.l.b16 %v2970
    %v4107 = vunpack.c.h.b16 %v2970
    %v4108 = vunpack.c.l.b16 %v2971
    %v4109 = vunpack.c.h.b16 %v2971
    %v4110 = vunpack.c.l.b16 %v2972
    %v4111 = vunpack.c.h.b16 %v2972
    %v4112 = vunpack.c.l.b16 %v2973
    %v4113 = vunpack.c.l.b16 %v2974
    %v4114 = vunpack.c.h.b16 %v2974
    %v4115 = vunpack.c.l.b16 %v2975
    %v4116 = vunpack.c.h.b16 %v2975
    %v4117 = vunpack.c.l.b16 %v2976
    %v4118 = vunpack.c.h.b16 %v2976
    %v4119 = vunpack.c.l.b16 %v2977
    %v4120 = vunpack.c.l.b16 %v2978
    %v4121 = vunpack.c.h.b16 %v2978
    %v4122 = vunpack.c.l.b16 %v2979
    %v4123 = vunpack.c.h.b16 %v2979
    %v4124 = vunpack.c.l.b16 %v2980
    %v4125 = vunpack.c.h.b16 %v2980
    %v4126 = vunpack.c.l.b16 %v2981
    %v4127 = vunpack.c.l.b16 %v2982
    %v4128 = vunpack.c.h.b16 %v2982
    %v4129 = vunpack.c.l.b16 %v2983
    %v4130 = vunpack.c.h.b16 %v2983
    %v4131 = vunpack.c.l.b16 %v2984
    %v4132 = vunpack.c.h.b16 %v2984
    %v4133 = vunpack.c.l.b16 %v2985
    %v4134 = vunpack.c.l.b16 %v2986
    %v4135 = vunpack.c.h.b16 %v2986
    %v4136 = vunpack.c.l.b16 %v2987
    %v4137 = vunpack.c.h.b16 %v2987
    %v4138 = vunpack.c.l.b16 %v2988
    %v4139 = vunpack.c.h.b16 %v2988
    %v4140 = vunpack.c.l.b16 %v2989
    %v4141 = vunpack.c.l.b16 %v2990
    %v4142 = vunpack.c.h.b16 %v2990
    %v4143 = vunpack.c.l.b16 %v2991
    %v4144 = vunpack.c.h.b16 %v2991
    %v4145 = vunpack.c.l.b16 %v2992
    %v4146 = vunpack.c.h.b16 %v2992
    %v4147 = vunpack.c.l.b16 %v2993
    %v4148 = vunpack.c.l.b16 %v2994
    %v4149 = vunpack.c.h.b16 %v2994
    %v4150 = vunpack.c.l.b16 %v2995
    %v4151 = vunpack.c.h.b16 %v2995
    %v4152 = vunpack.c.l.b16 %v2996
    %v4153 = vunpack.c.h.b16 %v2996
    %v4154 = vunpack.c.l.b16 %v2997
    %v4155 = vunpack.c.l.b16 %v2998
    %v4156 = vunpack.c.h.b16 %v2998
    %v4157 = vunpack.c.l.b16 %v2999
    %v4158 = vunpack.c.h.b16 %v2999
    %v4159 = vunpack.c.l.b16 %v3000
    %v4160 = vunpack.c.h.b16 %v3000
    %v4161 = vunpack.c.l.b16 %v3001
    %v4162 = vunpack.c.l.b16 %v3002
    %v4163 = vunpack.c.h.b16 %v3002
    %v4164 = vunpack.c.l.b16 %v3003
    %v4165 = vunpack.c.h.b16 %v3003
    %v4166 = vunpack.c.l.b16 %v3004
    %v4167 = vunpack.c.h.b16 %v3004
    %v4168 = vunpack.c.l.b16 %v3005
    %v4169 = vunpack.c.l.b16 %v3006
    %v4170 = vunpack.c.h.b16 %v3006
    %v4171 = vunpack.c.l.b16 %v3007
    %v4172 = vunpack.c.h.b16 %v3007
    %v4173 = vunpack.c.l.b16 %v3008
    %v4174 = vunpack.c.h.b16 %v3008
    %v4175 = vunpack.c.l.b16 %v3009
    %v4176 = vunpack.c.l.b16 %v3010
    %v4177 = vunpack.c.h.b16 %v3010
    %v4178 = vunpack.c.l.b16 %v3011
    %v4179 = vunpack.c.h.b16 %v3011
    %v4180 = vunpack.c.l.b16 %v3012
    %v4181 = vunpack.c.h.b16 %v3012
    %v4182 = vunpack.c.l.b16 %v3013
    %v4183 = vunpack.c.l.b16 %v3014
    %v4184 = vunpack.c.h.b16 %v3014
    %v4185 = vunpack.c.l.b16 %v3015
    %v4186 = vunpack.c.h.b16 %v3015
    %v4187 = vunpack.c.l.b16 %v3016
    %v4188 = vunpack.c.h.b16 %v3016
    %v4189 = vunpack.c.l.b16 %v3017
    %v4190 = vunpack.c.l.b16 %v3018
    %v4191 = vunpack.c.h.b16 %v3018
    %v4192 = vunpack.c.l.b16 %v3019
    %v4193 = vunpack.c.h.b16 %v3019
    %v4194 = vunpack.c.l.b16 %v3020
    %v4195 = vunpack.c.h.b16 %v3020
    %v4196 = vunpack.c.l.b16 %v3021
    %v4197 = vunpack.c.l.b16 %v3022
    %v4198 = vunpack.c.h.b16 %v3022
    %v4199 = vunpack.c.l.b16 %v3023
    %v4200 = vunpack.c.h.b16 %v3023
    %v4201 = vunpack.c.l.b16 %v3024
    %v4202 = vunpack.c.h.b16 %v3024
    %v4203 = vunpack.c.l.b16 %v3025
    %v4204 = vunpack.c.l.b16 %v3026
    %v4205 = vunpack.c.h.b16 %v3026
    %v4206 = vunpack.c.l.b16 %v3027
    %v4207 = vunpack.c.h.b16 %v3027
    %v4208 = vunpack.c.l.b16 %v3028
    %v4209 = vunpack.c.h.b16 %v3028
    %v4210 = vunpack.c.l.b16 %v3029
    %v4211 = vunpack.c.l.b16 %v3030
    %v4212 = vunpack.c.h.b16 %v3030
    %v4213 = vunpack.c.l.b16 %v3031
    %v4214 = vunpack.c.h.b16 %v3031
    %v4215 = vunpack.c.l.b16 %v3032
    %v4216 = vunpack.c.h.b16 %v3032
    %v4217 = vunpack.c.l.b16 %v3033
    %v4218 = vunpack.c.l.b16 %v3034
    %v4219 = vunpack.c.h.b16 %v3034
    %v4220 = vunpack.c.l.b16 %v3035
    %v4221 = vunpack.c.h.b16 %v3035
    %v4222 = vunpack.c.l.b16 %v3036
    %v4223 = vunpack.c.h.b16 %v3036
    %v4224 = vunpack.c.l.b16 %v3037
    %v4225 = vunpack.c.l.b16 %v3038
    %v4226 = vunpack.c.h.b16 %v3038
    %v4227 = vunpack.c.l.b16 %v3039
    %v4228 = vunpack.c.h.b16 %v3039
    %v4229 = vunpack.c.l.b16 %v3040
    %v4230 = vunpack.c.h.b16 %v3040
    %v4231 = vunpack.c.l.b16 %v3041
    %v4232 = vunpack.c.l.b16 %v3042
    %v4233 = vunpack.c.h.b16 %v3042
    %v4234 = vunpack.c.l.b16 %v3043
    %v4235 = vunpack.c.h.b16 %v3043
    %v4236 = vunpack.c.l.b16 %v3044
    %v4237 = vunpack.c.h.b16 %v3044
    %v4238 = vunpack.c.l.b16 %v3045
    %v4239 = vunpack.c.l.b16 %v3046
    %v4240 = vunpack.c.h.b16 %v3046
    %v4241 = vunpack.c.l.b16 %v3047
    %v4242 = vunpack.c.h.b16 %v3047
    %v4243 = vunpack.c.l.b16 %v3048
    %v4244 = vunpack.c.h.b16 %v3048
    %v4245 = vunpack.c.l.b16 %v3049
    %v4246 = vunpack.c.l.b16 %v3050
    %v4247 = vunpack.c.h.b16 %v3050
    %v4248 = vunpack.c.l.b16 %v3051
    %v4249 = vunpack.c.h.b16 %v3051
    %v4250 = vunpack.c.l.b16 %v3052
    %v4251 = vunpack.c.h.b16 %v3052
    %v4252 = vunpack.c.l.b16 %v3053
    %v4253 = vunpack.c.l.b16 %v3054
    %v4254 = vunpack.c.h.b16 %v3054
    %v4255 = vunpack.c.l.b16 %v3055
    %v4256 = vunpack.c.h.b16 %v3055
    %v4257 = vunpack.c.l.b16 %v3056
    %v4258 = vunpack.c.h.b16 %v3056
    %v4259 = vunpack.c.l.b16 %v3057
    %v4260 = vunpack.c.l.b16 %v3058
    %v4261 = vunpack.c.h.b16 %v3058
    %v4262 = vunpack.c.l.b16 %v3059
    %v4263 = vunpack.c.h.b16 %v3059
    %v4264 = vunpack.c.l.b16 %v3060
    %v4265 = vunpack.c.h.b16 %v3060
    %v4266 = vunpack.c.l.b16 %v3061
    %v4267 = vunpack.c.l.b16 %v3062
    %v4268 = vunpack.c.h.b16 %v3062
    %v4269 = vunpack.c.l.b16 %v3063
    %v4270 = vunpack.c.h.b16 %v3063
    %v4271 = vunpack.c.l.b16 %v3064
    %v4272 = vunpack.c.h.b16 %v3064
    %v4273 = vunpack.c.l.b16 %v3065
    %v4274 = vunpack.c.l.b16 %v3066
    %v4275 = vunpack.c.h.b16 %v3066
    %v4276 = vunpack.c.l.b16 %v3067
    %v4277 = vunpack.c.h.b16 %v3067
    %v4278 = vunpack.c.l.b16 %v3068
    %v4279 = vunpack.c.h.b16 %v3068
    %v4280 = vunpack.c.l.b16 %v3069
    %v4281 = vunpack.c.l.b16 %v3070
    %v4282 = vunpack.c.h.b16 %v3070
    %v4283 = vunpack.c.l.b16 %v3071
    %v4284 = vunpack.c.h.b16 %v3071
    %v4285 = vunpack.c.l.b16 %v3072
    %v4286 = vunpack.c.h.b16 %v3072
    %v4287 = vunpack.c.l.b16 %v3073
    %v4288 = vunpack.c.l.b16 %v3074
    %v4289 = vunpack.c.h.b16 %v3074
    %v4290 = vunpack.c.l.b16 %v3075
    %v4291 = vunpack.c.h.b16 %v3075
    %v4292 = vunpack.c.l.b16 %v3076
    %v4293 = vunpack.c.h.b16 %v3076
    %v4294 = vunpack.c.l.b16 %v3077
    %v4295 = vunpack.c.l.b16 %v3078
    %v4296 = vunpack.c.h.b16 %v3078
    %v4297 = vunpack.c.l.b16 %v3079
    %v4298 = vunpack.c.h.b16 %v3079
    %v4299 = vunpack.c.l.b16 %v3080
    %v4300 = vunpack.c.h.b16 %v3080
    %v4301 = vunpack.c.l.b16 %v3081
    %v4302 = vunpack.c.l.b16 %v3082
    %v4303 = vunpack.c.h.b16 %v3082
    %v4304 = vunpack.c.l.b16 %v3083
    %v4305 = vunpack.c.h.b16 %v3083
    %v4306 = vunpack.c.l.b16 %v3084
    %v4307 = vunpack.c.h.b16 %v3084
    %v4308 = vunpack.c.l.b16 %v3085
    %v4309 = vunpack.c.l.b16 %v3086
    %v4310 = vunpack.c.h.b16 %v3086
    %v4311 = vunpack.c.l.b16 %v3087
    %v4312 = vunpack.c.h.b16 %v3087
    %v4313 = vunpack.c.l.b16 %v3088
    %v4314 = vunpack.c.h.b16 %v3088
    %v4315 = vunpack.c.l.b16 %v3089
    %v4316 = vunpack.c.l.b16 %v3090
    %v4317 = vunpack.c.h.b16 %v3090
    %v4318 = vunpack.c.l.b16 %v3091
    %v4319 = vunpack.c.h.b16 %v3091
    %v4320 = vunpack.c.l.b16 %v3092
    %v4321 = vunpack.c.h.b16 %v3092
    %v4322 = vunpack.c.l.b16 %v3093
    %v4323 = vunpack.c.l.b16 %v3094
    %v4324 = vunpack.c.h.b16 %v3094
    %v4325 = vunpack.c.l.b16 %v3095
    %v4326 = vunpack.c.h.b16 %v3095
    %v4327 = vunpack.c.l.b16 %v3096
    %v4328 = vunpack.c.h.b16 %v3096
    %v4329 = vunpack.c.l.b16 %v3097
    %v4330 = vunpack.c.l.b16 %v3098
    %v4331 = vunpack.c.h.b16 %v3098
    %v4332 = vunpack.c.l.b16 %v3099
    %v4333 = vunpack.c.h.b16 %v3099
    %v4334 = vunpack.c.l.b16 %v3100
    %v4335 = vunpack.c.h.b16 %v3100
    %v4336 = vunpack.c.l.b16 %v3101
    %v4337 = vunpack.c.l.b16 %v3102
    %v4338 = vunpack.c.h.b16 %v3102
    %v4339 = vunpack.c.l.b16 %v3103
    %v4340 = vunpack.c.h.b16 %v3103
    %v4341 = vunpack.c.l.b16 %v3104
    %v4342 = vunpack.c.h.b16 %v3104
    %v4343 = vunpack.c.l.b16 %v3105
    %v4344 = vunpack.c.l.b16 %v3106
    %v4345 = vunpack.c.h.b16 %v3106
    %v4346 = vunpack.c.l.b16 %v3107
    %v4347 = vunpack.c.h.b16 %v3107
    %v4348 = vunpack.c.l.b16 %v3108
    %v4349 = vunpack.c.h.b16 %v3108
    %v4350 = vunpack.c.l.b16 %v3109
    %v4351 = vunpack.c.l.b16 %v3110
    %v4352 = vunpack.c.h.b16 %v3110
    %v4353 = vunpack.c.l.b16 %v3111
    %v4354 = vunpack.c.h.b16 %v3111
    %v4355 = vunpack.c.l.b16 %v3112
    %v4356 = vunpack.c.h.b16 %v3112
    %v4357 = vunpack.c.l.b16 %v3113
    %v4358 = vunpack.c.l.b16 %v3114
    %v4359 = vunpack.c.h.b16 %v3114
    %v4360 = vunpack.c.l.b16 %v3115
    %v4361 = vunpack.c.h.b16 %v3115
    %v4362 = vunpack.c.l.b16 %v3116
    %v4363 = vunpack.c.h.b16 %v3116
    %v4364 = vunpack.c.l.b16 %v3117
    %v4365 = vunpack.c.l.b16 %v3118
    %v4366 = vunpack.c.h.b16 %v3118
    %v4367 = vunpack.c.l.b16 %v3119
    %v4368 = vunpack.c.h.b16 %v3119
    %v4369 = vunpack.c.l.b16 %v3120
    %v4370 = vunpack.c.h.b16 %v3120
    %v4371 = vunpack.c.l.b16 %v3121
    %v4372 = vunpack.c.l.b16 %v3122
    %v4373 = vunpack.c.h.b16 %v3122
    %v4374 = vunpack.c.l.b16 %v3123
    %v4375 = vunpack.c.h.b16 %v3123
    %v4376 = vunpack.c.l.b16 %v3124
    %v4377 = vunpack.c.h.b16 %v3124
    %v4378 = vunpack.c.l.b16 %v3125
    %v4379 = vunpack.c.l.b16 %v3126
    %v4380 = vunpack.c.h.b16 %v3126
    %v4381 = vunpack.c.l.b16 %v3127
    %v4382 = vunpack.c.h.b16 %v3127
    %v4383 = vunpack.c.l.b16 %v3128
    %v4384 = vunpack.c.h.b16 %v3128
    %v4385 = vunpack.c.l.b16 %v3129
    %v4386 = vunpack.c.l.b16 %v3130
    %v4387 = vunpack.c.h.b16 %v3130
    %v4388 = vunpack.c.l.b16 %v3131
    %v4389 = vunpack.c.h.b16 %v3131
    %v4390 = vunpack.c.l.b16 %v3132
    %v4391 = vunpack.c.h.b16 %v3132
    %v4392 = vunpack.c.l.b16 %v3133
    %v4393 = vunpack.c.l.b16 %v3134
    %v4394 = vunpack.c.h.b16 %v3134
    %v4395 = vunpack.c.l.b16 %v3135
    %v4396 = vunpack.c.h.b16 %v3135
    %v4397 = vunpack.c.l.b16 %v3136
    %v4398 = vunpack.c.h.b16 %v3136
    %v4399 = vunpack.c.l.b16 %v3137
    %v4400 = vunpack.c.l.b16 %v3138
    %v4401 = vunpack.c.h.b16 %v3138
    %v4402 = vunpack.c.l.b16 %v3139
    %v4403 = vunpack.c.h.b16 %v3139
    %v4404 = vunpack.c.l.b16 %v3140
    %v4405 = vunpack.c.h.b16 %v3140
    %v4406 = vunpack.c.l.b16 %v3141
    %v4407 = vunpack.c.l.b16 %v3142
    %v4408 = vunpack.c.h.b16 %v3142
    %v4409 = vunpack.c.l.b16 %v3143
    %v4410 = vunpack.c.h.b16 %v3143
    %v4411 = vunpack.c.l.b16 %v3144
    %v4412 = vunpack.c.h.b16 %v3144
    %v4413 = vunpack.c.l.b16 %v3145
    %v4414 = vunpack.c.l.b16 %v3146
    %v4415 = vunpack.c.h.b16 %v3146
    %v4416 = vunpack.c.l.b16 %v3147
    %v4417 = vunpack.c.h.b16 %v3147
    %v4418 = vunpack.c.l.b16 %v3148
    %v4419 = vunpack.c.h.b16 %v3148
    %v4420 = vunpack.c.l.b16 %v3149
    %v4421 = vunpack.c.l.b16 %v3150
    %v4422 = vunpack.c.h.b16 %v3150
    %v4423 = vunpack.c.l.b16 %v3151
    %v4424 = vunpack.c.h.b16 %v3151
    %v4425 = vunpack.c.l.b16 %v3152
    %v4426 = vunpack.c.h.b16 %v3152
    %v4427 = vunpack.c.l.b16 %v3153
    %v4428 = vunpack.c.l.b16 %v3154
    %v4429 = vunpack.c.h.b16 %v3154
    %v4430 = vunpack.c.l.b16 %v3155
    %v4431 = vunpack.c.h.b16 %v3155
    %v4432 = vunpack.c.l.b16 %v3156
    %v4433 = vunpack.c.h.b16 %v3156
    %v4434 = vunpack.c.l.b16 %v3157
    %v4435 = vunpack.c.l.b16 %v3158
    %v4436 = vunpack.c.h.b16 %v3158
    %v4437 = vunpack.c.l.b16 %v3159
    %v4438 = vunpack.c.h.b16 %v3159
    %v4439 = vunpack.c.l.b16 %v3160
    %v4440 = vunpack.c.h.b16 %v3160
    %v4441 = vunpack.c.l.b16 %v3161
    %v4442 = vunpack.c.l.b16 %v3162
    %v4443 = vunpack.c.h.b16 %v3162
    %v4444 = vunpack.c.l.b16 %v3163
    %v4445 = vunpack.c.h.b16 %v3163
    %v4446 = vunpack.c.l.b16 %v3164
    %v4447 = vunpack.c.h.b16 %v3164
    %v4448 = vunpack.c.l.b16 %v3165
    %v4449 = vunpack.c.l.b16 %v3166
    %v4450 = vunpack.c.h.b16 %v3166
    %v4451 = vunpack.c.l.b16 %v3167
    %v4452 = vunpack.c.h.b16 %v3167
    %v4453 = vunpack.c.l.b16 %v3168
    %v4454 = vunpack.c.h.b16 %v3168
    %v4455 = vunpack.c.l.b16 %v3169
    %v4456 = vunpack.c.l.b16 %v3170
    %v4457 = vunpack.c.h.b16 %v3170
    %v4458 = vunpack.c.l.b16 %v3171
    %v4459 = vunpack.c.h.b16 %v3171
    %v4460 = vunpack.c.l.b16 %v3172
    %v4461 = vunpack.c.h.b16 %v3172
    %v4462 = vunpack.c.l.b16 %v3173
    %v4463 = vunpack.c.l.b16 %v3174
    %v4464 = vunpack.c.h.b16 %v3174
    %v4465 = vunpack.c.l.b16 %v3175
    %v4466 = vunpack.c.h.b16 %v3175
    %v4467 = vunpack.c.l.b16 %v3176
    %v4468 = vunpack.c.h.b16 %v3176
    %v4469 = vunpack.c.l.b16 %v3177
    %v4470 = vunpack.c.l.b16 %v3178
    %v4471 = vunpack.c.h.b16 %v3178
    %v4472 = vunpack.c.l.b16 %v3179
    %v4473 = vunpack.c.h.b16 %v3179
    %v4474 = vunpack.c.l.b16 %v3180
    %v4475 = vunpack.c.h.b16 %v3180
    %v4476 = vunpack.c.l.b16 %v3181
    %v4477 = vunpack.c.l.b16 %v3182
    %v4478 = vunpack.c.h.b16 %v3182
    %v4479 = vunpack.c.l.b16 %v3183
    %v4480 = vunpack.c.h.b16 %v3183
    %v4481 = vunpack.c.l.b16 %v3184
    %v4482 = vunpack.c.h.b16 %v3184
    %v4483 = vunpack.c.l.b16 %v3185
    %v4484 = vunpack.c.l.b16 %v3186
    %v4485 = vunpack.c.h.b16 %v3186
    %v4486 = vunpack.c.l.b16 %v3187
    %v4487 = vunpack.c.h.b16 %v3187
    %v4488 = vunpack.c.l.b16 %v3188
    %v4489 = vunpack.c.h.b16 %v3188
    %v4490 = vunpack.c.l.b16 %v3189
    %v4491 = vunpack.c.l.b16 %v3190
    %v4492 = vunpack.c.h.b16 %v3190
    %v4493 = vunpack.c.l.b16 %v3191
    %v4494 = vunpack.c.h.b16 %v3191
    %v4495 = vunpack.c.l.b16 %v3192
    %v4496 = vunpack.c.h.b16 %v3192
    %v4497 = vunpack.c.l.b16 %v3193
    %v4498 = vunpack.c.l.b16 %v3194
    %v4499 = vunpack.c.h.b16 %v3194
    %v4500 = vunpack.c.l.b16 %v3195
    %v4501 = vunpack.c.h.b16 %v3195
    %v4502 = vunpack.c.l.b16 %v3196
    %v4503 = vunpack.c.h.b16 %v3196
    %v4504 = vunpack.c.l.b16 %v3197
    %v4505 = vunpack.c.l.b16 %v3198
    %v4506 = vunpack.c.h.b16 %v3198
    %v4507 = vunpack.c.l.b16 %v3199
    %v4508 = vunpack.c.h.b16 %v3199
    %v4509 = vunpack.c.l.b16 %v3200
    %v4510 = vunpack.c.h.b16 %v3200
    %v4511 = vunpack.c.l.b16 %v3201
    %v4512 = vunpack.c.l.b16 %v3202
    %v4513 = vunpack.c.h.b16 %v3202
    %v4514 = vunpack.c.l.b16 %v3203
    %v4515 = vunpack.c.h.b16 %v3203
    %v4516 = vunpack.c.l.b16 %v3204
    %v4517 = vunpack.c.h.b16 %v3204
    %v4518 = vunpack.c.l.b16 %v3205
    %v4519 = vunpack.c.l.b16 %v3206
    %v4520 = vunpack.c.h.b16 %v3206
    %v4521 = vunpack.c.l.b16 %v3207
    %v4522 = vunpack.c.h.b16 %v3207
    %v4523 = vunpack.c.l.b16 %v3208
    %v4524 = vunpack.c.h.b16 %v3208
    %v4525 = vunpack.c.l.b16 %v3209
    %v4526 = vunpack.c.l.b16 %v3210
    %v4527 = vunpack.c.h.b16 %v3210
    %v4528 = vunpack.c.l.b16 %v3211
    %v4529 = vunpack.c.h.b16 %v3211
    %v4530 = vunpack.c.l.b16 %v3212
    %v4531 = vunpack.c.h.b16 %v3212
    %v4532 = vunpack.c.l.b16 %v3213
    %v4533 = vunpack.c.l.b16 %v3214
    %v4534 = vunpack.c.h.b16 %v3214
    %v4535 = vunpack.c.l.b16 %v3215
    %v4536 = vunpack.c.h.b16 %v3215
    %v4537 = vunpack.c.l.b16 %v3216
    %v4538 = vunpack.c.h.b16 %v3216
    %v4539 = vunpack.c.l.b16 %v3217
    %v4540 = vunpack.c.l.b16 %v3218
    %v4541 = vunpack.c.h.b16 %v3218
    %v4542 = vunpack.c.l.b16 %v3219
    %v4543 = vunpack.c.h.b16 %v3219
    %v4544 = vunpack.c.l.b16 %v3220
    %v4545 = vunpack.c.h.b16 %v3220
    %v4546 = vunpack.c.l.b16 %v3221
    %v4547 = vunpack.c.l.b16 %v3222
    %v4548 = vunpack.c.h.b16 %v3222
    %v4549 = vunpack.c.l.b16 %v3223
    %v4550 = vunpack.c.h.b16 %v3223
    %v4551 = vunpack.c.l.b16 %v3224
    %v4552 = vunpack.c.h.b16 %v3224
    %v4553 = vunpack.c.l.b16 %v3225
    %v4554 = vunpack.c.l.b16 %v3226
    %v4555 = vunpack.c.h.b16 %v3226
    %v4556 = vunpack.c.l.b16 %v3227
    %v4557 = vunpack.c.h.b16 %v3227
    %v4558 = vunpack.c.l.b16 %v3228
    %v4559 = vunpack.c.h.b16 %v3228
    %v4560 = vunpack.c.l.b16 %v3229
    %v4561 = vunpack.c.l.b16 %v3230
    %v4562 = vunpack.c.h.b16 %v3230
    %v4563 = vunpack.c.l.b16 %v3231
    %v4564 = vunpack.c.h.b16 %v3231
    %v4565 = vunpack.c.l.b16 %v3232
    %v4566 = vunpack.c.h.b16 %v3232
    %v4567 = vunpack.c.l.b16 %v3233
    %v4568 = vunpack.c.l.b16 %v3234
    %v4569 = vunpack.c.h.b16 %v3234
    %v4570 = vunpack.c.l.b16 %v3235
    %v4571 = vunpack.c.h.b16 %v3235
    %v4572 = vunpack.c.l.b16 %v3236
    %v4573 = vunpack.c.h.b16 %v3236
    %v4574 = vunpack.c.l.b16 %v3237
    %v4575 = vunpack.c.l.b16 %v3238
    %v4576 = vunpack.c.h.b16 %v3238
    %v4577 = vunpack.c.l.b16 %v3239
    %v4578 = vunpack.c.h.b16 %v3239
    %v4579 = vunpack.c.l.b16 %v3240
    %v4580 = vunpack.c.h.b16 %v3240
    %v4581 = vunpack.c.l.b16 %v3241
    %v4582 = vunpack.c.l.b16 %v3242
    %v4583 = vunpack.c.h.b16 %v3242
    %v4584 = vunpack.c.l.b16 %v3243
    %v4585 = vunpack.c.h.b16 %v3243
    %v4586 = vunpack.c.l.b16 %v3244
    %v4587 = vunpack.c.h.b16 %v3244
    %v4588 = vunpack.c.l.b16 %v3245
    %v4589 = vunpack.c.l.b16 %v3246
    %v4590 = vunpack.c.h.b16 %v3246
    %v4591 = vunpack.c.l.b16 %v3247
    %v4592 = vunpack.c.h.b16 %v3247
    %v4593 = vunpack.c.l.b16 %v3248
    %v4594 = vunpack.c.h.b16 %v3248
    %v4595 = vunpack.c.l.b16 %v3249
    %v4596 = vunpack.c.l.b16 %v3250
    %v4597 = vunpack.c.h.b16 %v3250
    %v4598 = vunpack.c.l.b16 %v3251
    %v4599 = vunpack.c.h.b16 %v3251
    %v4600 = vunpack.c.l.b16 %v3252
    %v4601 = vunpack.c.h.b16 %v3252
    %v4602 = vunpack.c.l.b16 %v3253
    %v4603 = vunpack.c.l.b16 %v3254
    %v4604 = vunpack.c.h.b16 %v3254
    %v4605 = vunpack.c.l.b16 %v3255
    %v4606 = vunpack.c.h.b16 %v3255
    %v4607 = vunpack.c.l.b16 %v3256
    %v4608 = vunpack.c.h.b16 %v3256
    %v4609 = vunpack.c.l.b16 %v3257
    %v4610 = vunpack.c.l.b16 %v3258
    %v4611 = vunpack.c.h.b16 %v3258
    %v4612 = vunpack.c.l.b16 %v3259
    %v4613 = vunpack.c.h.b16 %v3259
    %v4614 = vunpack.c.l.b16 %v3260
    %v4615 = vunpack.c.h.b16 %v3260
    %v4616 = vunpack.c.l.b16 %v3261
    %v4617 = vunpack.c.l.b16 %v3262
    %v4618 = vunpack.c.h.b16 %v3262
    %v4619 = vunpack.c.l.b16 %v3263
    %v4620 = vunpack.c.h.b16 %v3263
    %v4621 = vunpack.c.l.b16 %v3264
    %v4622 = vunpack.c.h.b16 %v3264
    %v4623 = vunpack.c.l.b16 %v3265
    %v4624 = vunpack.c.l.b16 %v3266
    %v4625 = vunpack.c.h.b16 %v3266
    %v4626 = vunpack.c.l.b16 %v3267
    %v4627 = vunpack.c.h.b16 %v3267
    %v4628 = vunpack.c.l.b16 %v3268
    %v4629 = vunpack.c.h.b16 %v3268
    %v4630 = vunpack.c.l.b16 %v3269
    %v4631 = vunpack.c.l.b16 %v3270
    %v4632 = vunpack.c.h.b16 %v3270
    %v4633 = vunpack.c.l.b16 %v3271
    %v4634 = vunpack.c.h.b16 %v3271
    %v4635 = vunpack.c.l.b16 %v3272
    %v4636 = vunpack.c.h.b16 %v3272
    %v4637 = vunpack.c.l.b16 %v3273
    %v4638 = vunpack.c.l.b16 %v3274
    %v4639 = vunpack.c.h.b16 %v3274
    %v4640 = vunpack.c.l.b16 %v3275
    %v4641 = vunpack.c.h.b16 %v3275
    %v4642 = vunpack.c.l.b16 %v3276
    %v4643 = vunpack.c.h.b16 %v3276
    %v4644 = vunpack.c.l.b16 %v3277
    %v4645 = vunpack.c.l.b16 %v3278
    %v4646 = vunpack.c.h.b16 %v3278
    %v4647 = vunpack.c.l.b16 %v3279
    %v4648 = vunpack.c.h.b16 %v3279
    %v4649 = vunpack.c.l.b16 %v3280
    %v4650 = vunpack.c.h.b16 %v3280
    %v4651 = vunpack.c.l.b16 %v3281
    %v4652 = vunpack.c.l.b16 %v3282
    %v4653 = vunpack.c.h.b16 %v3282
    %v4654 = vunpack.c.l.b16 %v3283
    %v4655 = vunpack.c.h.b16 %v3283
    %v4656 = vunpack.c.l.b16 %v3284
    %v4657 = vunpack.c.h.b16 %v3284
    %v4658 = vunpack.c.l.b16 %v3285
    %v4659 = vunpack.c.l.b16 %v3286
    %v4660 = vunpack.c.h.b16 %v3286
    %v4661 = vunpack.c.l.b16 %v3287
    %v4662 = vunpack.c.h.b16 %v3287
    %v4663 = vunpack.c.l.b16 %v3288
    %v4664 = vunpack.c.h.b16 %v3288
    %v4665 = vunpack.c.l.b16 %v3289
    %v4666 = vunpack.c.l.b16 %v3290
    %v4667 = vunpack.c.h.b16 %v3290
    %v4668 = vunpack.c.l.b16 %v3291
    %v4669 = vunpack.c.h.b16 %v3291
    %v4670 = vunpack.c.l.b16 %v3292
    %v4671 = vunpack.c.h.b16 %v3292
    %v4672 = vunpack.c.l.b16 %v3293
    %v4673 = vunpack.c.l.b16 %v3294
    %v4674 = vunpack.c.h.b16 %v3294
    %v4675 = vunpack.c.l.b16 %v3295
    %v4676 = vunpack.c.h.b16 %v3295
    %v4677 = vunpack.c.l.b16 %v3296
    %v4678 = vunpack.c.h.b16 %v3296
    %v4679 = vunpack.c.l.b16 %v3297
    %v4680 = vunpack.c.l.b16 %v3298
    %v4681 = vunpack.c.h.b16 %v3298
    %v4682 = vunpack.c.l.b16 %v3299
    %v4683 = vunpack.c.h.b16 %v3299
    %v4684 = vunpack.c.l.b16 %v3300
    %v4685 = vunpack.c.h.b16 %v3300
    %v4686 = vunpack.c.l.b16 %v3301
    %v4687 = vunpack.c.l.b16 %v3302
    %v4688 = vunpack.c.h.b16 %v3302
    %v4689 = vunpack.c.l.b16 %v3303
    %v4690 = vunpack.c.h.b16 %v3303
    %v4691 = vunpack.c.l.b16 %v3304
    %v4692 = vunpack.c.h.b16 %v3304
    %v4693 = vunpack.c.l.b16 %v3305
    %v4694 = vunpack.c.l.b16 %v3306
    %v4695 = vunpack.c.h.b16 %v3306
    %v4696 = vunpack.c.l.b16 %v3307
    %v4697 = vunpack.c.h.b16 %v3307
    %v4698 = vunpack.c.l.b16 %v3308
    %v4699 = vunpack.c.h.b16 %v3308
    %v4700 = vunpack.c.l.b16 %v3309
    %v4701 = vunpack.c.l.b16 %v3310
    %v4702 = vunpack.c.h.b16 %v3310
    %v4703 = vunpack.c.l.b16 %v3311
    %v4704 = vunpack.c.h.b16 %v3311
    %v4705 = vunpack.c.l.b16 %v3312
    %v4706 = vunpack.c.h.b16 %v3312
    %v4707 = vunpack.c.l.b16 %v3313
    %v4708 = vunpack.c.l.b16 %v3314
    %v4709 = vunpack.c.h.b16 %v3314
    %v4710 = vunpack.c.l.b16 %v3315
    %v4711 = vunpack.c.h.b16 %v3315
    %v4712 = vunpack.c.l.b16 %v3316
    %v4713 = vunpack.c.h.b16 %v3316
    %v4714 = vunpack.c.l.b16 %v3317
    %v4715 = vunpack.c.l.b16 %v3318
    %v4716 = vunpack.c.h.b16 %v3318
    %v4717 = vunpack.c.l.b16 %v3319
    %v4718 = vunpack.c.h.b16 %v3319
    %v4719 = vunpack.c.l.b16 %v3320
    %v4720 = vunpack.c.h.b16 %v3320
    %v4721 = vunpack.c.l.b16 %v3321
    %v4722 = vunpack.c.l.b16 %v3322
    %v4723 = vunpack.c.h.b16 %v3322
    %v4724 = vunpack.c.l.b16 %v3323
    %v4725 = vunpack.c.h.b16 %v3323
    %v4726 = vunpack.c.l.b16 %v3324
    %v4727 = vunpack.c.h.b16 %v3324
    %v4728 = vunpack.c.l.b16 %v3325
    %v4729 = vunpack.c.l.b16 %v3326
    %v4730 = vunpack.c.h.b16 %v3326
    %v4731 = vunpack.c.l.b16 %v3327
    %v4732 = vunpack.c.h.b16 %v3327
    %v4733 = vunpack.c.l.b16 %v3328
    %v4734 = vunpack.c.h.b16 %v3328
    %v4735 = vunpack.c.l.b16 %v3329
    %v4736 = vunpack.c.l.b16 %v3330
    %v4737 = vunpack.c.h.b16 %v3330
    %v4738 = vunpack.c.l.b16 %v3331
    %v4739 = vunpack.c.h.b16 %v3331
    %v4740 = vunpack.c.l.b16 %v3332
    %v4741 = vunpack.c.h.b16 %v3332
    %v4742 = vunpack.c.l.b16 %v3333
    %v4743 = vpack.c.b16 %v3854, %v3847
    %v4744 = vpack.c.b16 %v3855, %v3848
    %v4745 = vpack.c.b16 %v3856, %v3849
    %v4746 = vpack.c.b16 %v3857, %v3850
    %v4747 = vpack.c.b16 %v3858, %v3851
    %v4748 = vpack.c.b16 %v3859, %v3852
    %v4749 = vpack.c.b16 %v3860, %v3853
    %v4750 = vpack.c.b16 %v3868, %v3861
    %v4751 = vpack.c.b16 %v3869, %v3862
    %v4752 = vpack.c.b16 %v3870, %v3863
    %v4753 = vpack.c.b16 %v3871, %v3864
    %v4754 = vpack.c.b16 %v3872, %v3865
    %v4755 = vpack.c.b16 %v3873, %v3866
    %v4756 = vpack.c.b16 %v3874, %v3867
    %v4757 = vpack.c.b16 %v3882, %v3875
    %v4758 = vpack.c.b16 %v3883, %v3876
    %v4759 = vpack.c.b16 %v3884, %v3877
    %v4760 = vpack.c.b16 %v3885, %v3878
    %v4761 = vpack.c.b16 %v3886, %v3879
    %v4762 = vpack.c.b16 %v3887, %v3880
    %v4763 = vpack.c.b16 %v3888, %v3881
    %v4764 = vpack.c.b16 %v3896, %v3889
    %v4765 = vpack.c.b16 %v3897, %v3890
    %v4766 = vpack.c.b16 %v3898, %v3891
    %v4767 = vpack.c.b16 %v3899, %v3892
    %v4768 = vpack.c.b16 %v3900, %v3893
    %v4769 = vpack.c.b16 %v3901, %v3894
    %v4770 = vpack.c.b16 %v3902, %v3895
    %v4771 = vpack.c.b16 %v3910, %v3903
    %v4772 = vpack.c.b16 %v3911, %v3904
    %v4773 = vpack.c.b16 %v3912, %v3905
    %v4774 = vpack.c.b16 %v3913, %v3906
    %v4775 = vpack.c.b16 %v3914, %v3907
    %v4776 = vpack.c.b16 %v3915, %v3908
    %v4777 = vpack.c.b16 %v3916, %v3909
    %v4778 = vpack.c.b16 %v3924, %v3917
    %v4779 = vpack.c.b16 %v3925, %v3918
    %v4780 = vpack.c.b16 %v3926, %v3919
    %v4781 = vpack.c.b16 %v3927, %v3920
    %v4782 = vpack.c.b16 %v3928, %v3921
    %v4783 = vpack.c.b16 %v3929, %v3922
    %v4784 = vpack.c.b16 %v3930, %v3923
    %v4785 = vpack.c.b16 %v3938, %v3931
    %v4786 = vpack.c.b16 %v3939, %v3932
    %v4787 = vpack.c.b16 %v3940, %v3933
    %v4788 = vpack.c.b16 %v3941, %v3934
    %v4789 = vpack.c.b16 %v3942, %v3935
    %v4790 = vpack.c.b16 %v3943, %v3936
    %v4791 = vpack.c.b16 %v3944, %v3937
    %v4792 = vpack.c.b16 %v3952, %v3945
    %v4793 = vpack.c.b16 %v3953, %v3946
    %v4794 = vpack.c.b16 %v3954, %v3947
    %v4795 = vpack.c.b16 %v3955, %v3948
    %v4796 = vpack.c.b16 %v3956, %v3949
    %v4797 = vpack.c.b16 %v3957, %v3950
    %v4798 = vpack.c.b16 %v3958, %v3951
    %v4799 = vpack.c.b16 %v3966, %v3959
    %v4800 = vpack.c.b16 %v3967, %v3960
    %v4801 = vpack.c.b16 %v3968, %v3961
    %v4802 = vpack.c.b16 %v3969, %v3962
    %v4803 = vpack.c.b16 %v3970, %v3963
    %v4804 = vpack.c.b16 %v3971, %v3964
    %v4805 = vpack.c.b16 %v3972, %v3965
    %v4806 = vpack.c.b16 %v3980, %v3973
    %v4807 = vpack.c.b16 %v3981, %v3974
    %v4808 = vpack.c.b16 %v3982, %v3975
    %v4809 = vpack.c.b16 %v3983, %v3976
    %v4810 = vpack.c.b16 %v3984, %v3977
    %v4811 = vpack.c.b16 %v3985, %v3978
    %v4812 = vpack.c.b16 %v3986, %v3979
    %v4813 = vpack.c.b16 %v3994, %v3987
    %v4814 = vpack.c.b16 %v3995, %v3988
    %v4815 = vpack.c.b16 %v3996, %v3989
    %v4816 = vpack.c.b16 %v3997, %v3990
    %v4817 = vpack.c.b16 %v3998, %v3991
    %v4818 = vpack.c.b16 %v3999, %v3992
    %v4819 = vpack.c.b16 %v4000, %v3993
    %v4820 = vpack.c.b16 %v4008, %v4001
    %v4821 = vpack.c.b16 %v4009, %v4002
    %v4822 = vpack.c.b16 %v4010, %v4003
    %v4823 = vpack.c.b16 %v4011, %v4004
    %v4824 = vpack.c.b16 %v4012, %v4005
    %v4825 = vpack.c.b16 %v4013, %v4006
    %v4826 = vpack.c.b16 %v4014, %v4007
    %v4827 = vpack.c.b16 %v4022, %v4015
    %v4828 = vpack.c.b16 %v4023, %v4016
    %v4829 = vpack.c.b16 %v4024, %v4017
    %v4830 = vpack.c.b16 %v4025, %v4018
    %v4831 = vpack.c.b16 %v4026, %v4019
    %v4832 = vpack.c.b16 %v4027, %v4020
    %v4833 = vpack.c.b16 %v4028, %v4021
    %v4834 = vpack.c.b16 %v4036, %v4029
    %v4835 = vpack.c.b16 %v4037, %v4030
    %v4836 = vpack.c.b16 %v4038, %v4031
    %v4837 = vpack.c.b16 %v4039, %v4032
    %v4838 = vpack.c.b16 %v4040, %v4033
    %v4839 = vpack.c.b16 %v4041, %v4034
    %v4840 = vpack.c.b16 %v4042, %v4035
    %v4841 = vpack.c.b16 %v4050, %v4043
    %v4842 = vpack.c.b16 %v4051, %v4044
    %v4843 = vpack.c.b16 %v4052, %v4045
    %v4844 = vpack.c.b16 %v4053, %v4046
    %v4845 = vpack.c.b16 %v4054, %v4047
    %v4846 = vpack.c.b16 %v4055, %v4048
    %v4847 = vpack.c.b16 %v4056, %v4049
    %v4848 = vpack.c.b16 %v4064, %v4057
    %v4849 = vpack.c.b16 %v4065, %v4058
    %v4850 = vpack.c.b16 %v4066, %v4059
    %v4851 = vpack.c.b16 %v4067, %v4060
    %v4852 = vpack.c.b16 %v4068, %v4061
    %v4853 = vpack.c.b16 %v4069, %v4062
    %v4854 = vpack.c.b16 %v4070, %v4063
    %v4855 = vpack.c.b16 %v4078, %v4071
    %v4856 = vpack.c.b16 %v4079, %v4072
    %v4857 = vpack.c.b16 %v4080, %v4073
    %v4858 = vpack.c.b16 %v4081, %v4074
    %v4859 = vpack.c.b16 %v4082, %v4075
    %v4860 = vpack.c.b16 %v4083, %v4076
    %v4861 = vpack.c.b16 %v4084, %v4077
    %v4862 = vpack.c.b16 %v4092, %v4085
    %v4863 = vpack.c.b16 %v4093, %v4086
    %v4864 = vpack.c.b16 %v4094, %v4087
    %v4865 = vpack.c.b16 %v4095, %v4088
    %v4866 = vpack.c.b16 %v4096, %v4089
    %v4867 = vpack.c.b16 %v4097, %v4090
    %v4868 = vpack.c.b16 %v4098, %v4091
    %v4869 = vpack.c.b16 %v4106, %v4099
    %v4870 = vpack.c.b16 %v4107, %v4100
    %v4871 = vpack.c.b16 %v4108, %v4101
    %v4872 = vpack.c.b16 %v4109, %v4102
    %v4873 = vpack.c.b16 %v4110, %v4103
    %v4874 = vpack.c.b16 %v4111, %v4104
    %v4875 = vpack.c.b16 %v4112, %v4105
    %v4876 = vpack.c.b16 %v4120, %v4113
    %v4877 = vpack.c.b16 %v4121, %v4114
    %v4878 = vpack.c.b16 %v4122, %v4115
    %v4879 = vpack.c.b16 %v4123, %v4116
    %v4880 = vpack.c.b16 %v4124, %v4117
    %v4881 = vpack.c.b16 %v4125, %v4118
    %v4882 = vpack.c.b16 %v4126, %v4119
    %v4883 = vpack.c.b16 %v4134, %v4127
    %v4884 = vpack.c.b16 %v4135, %v4128
    %v4885 = vpack.c.b16 %v4136, %v4129
    %v4886 = vpack.c.b16 %v4137, %v4130
    %v4887 = vpack.c.b16 %v4138, %v4131
    %v4888 = vpack.c.b16 %v4139, %v4132
    %v4889 = vpack.c.b16 %v4140, %v4133
    %v4890 = vpack.c.b16 %v4148, %v4141
    %v4891 = vpack.c.b16 %v4149, %v4142
    %v4892 = vpack.c.b16 %v4150, %v4143
    %v4893 = vpack.c.b16 %v4151, %v4144
    %v4894 = vpack.c.b16 %v4152, %v4145
    %v4895 = vpack.c.b16 %v4153, %v4146
    %v4896 = vpack.c.b16 %v4154, %v4147
    %v4897 = vpack.c.b16 %v4162, %v4155
    %v4898 = vpack.c.b16 %v4163, %v4156
    %v4899 = vpack.c.b16 %v4164, %v4157
    %v4900 = vpack.c.b16 %v4165, %v4158
    %v4901 = vpack.c.b16 %v4166, %v4159
    %v4902 = vpack.c.b16 %v4167, %v4160
    %v4903 = vpack.c.b16 %v4168, %v4161
    %v4904 = vpack.c.b16 %v4176, %v4169
    %v4905 = vpack.c.b16 %v4177, %v4170
    %v4906 = vpack.c.b16 %v4178, %v4171
    %v4907 = vpack.c.b16 %v4179, %v4172
    %v4908 = vpack.c.b16 %v4180, %v4173
    %v4909 = vpack.c.b16 %v4181, %v4174
    %v4910 = vpack.c.b16 %v4182, %v4175
    %v4911 = vpack.c.b16 %v4190, %v4183
    %v4912 = vpack.c.b16 %v4191, %v4184
    %v4913 = vpack.c.b16 %v4192, %v4185
    %v4914 = vpack.c.b16 %v4193, %v4186
    %v4915 = vpack.c.b16 %v4194, %v4187
    %v4916 = vpack.c.b16 %v4195, %v4188
    %v4917 = vpack.c.b16 %v4196, %v4189
    %v4918 = vpack.c.b16 %v4204, %v4197
    %v4919 = vpack.c.b16 %v4205, %v4198
    %v4920 = vpack.c.b16 %v4206, %v4199
    %v4921 = vpack.c.b16 %v4207, %v4200
    %v4922 = vpack.c.b16 %v4208, %v4201
    %v4923 = vpack.c.b16 %v4209, %v4202
    %v4924 = vpack.c.b16 %v4210, %v4203
    %v4925 = vpack.c.b16 %v4218, %v4211
    %v4926 = vpack.c.b16 %v4219, %v4212
    %v4927 = vpack.c.b16 %v4220, %v4213
    %v4928 = vpack.c.b16 %v4221, %v4214
    %v4929 = vpack.c.b16 %v4222, %v4215
    %v4930 = vpack.c.b16 %v4223, %v4216
    %v4931 = vpack.c.b16 %v4224, %v4217
    %v4932 = vpack.c.b16 %v4232, %v4225
    %v4933 = vpack.c.b16 %v4233, %v4226
    %v4934 = vpack.c.b16 %v4234, %v4227
    %v4935 = vpack.c.b16 %v4235, %v4228
    %v4936 = vpack.c.b16 %v4236, %v4229
    %v4937 = vpack.c.b16 %v4237, %v4230
    %v4938 = vpack.c.b16 %v4238, %v4231
    %v4939 = vpack.c.b16 %v4246, %v4239
    %v4940 = vpack.c.b16 %v4247, %v4240
    %v4941 = vpack.c.b16 %v4248, %v4241
    %v4942 = vpack.c.b16 %v4249, %v4242
    %v4943 = vpack.c.b16 %v4250, %v4243
    %v4944 = vpack.c.b16 %v4251, %v4244
    %v4945 = vpack.c.b16 %v4252, %v4245
    %v4946 = vpack.c.b16 %v4260, %v4253
    %v4947 = vpack.c.b16 %v4261, %v4254
    %v4948 = vpack.c.b16 %v4262, %v4255
    %v4949 = vpack.c.b16 %v4263, %v4256
    %v4950 = vpack.c.b16 %v4264, %v4257
    %v4951 = vpack.c.b16 %v4265, %v4258
    %v4952 = vpack.c.b16 %v4266, %v4259
    %v4953 = vpack.c.b16 %v4274, %v4267
    %v4954 = vpack.c.b16 %v4275, %v4268
    %v4955 = vpack.c.b16 %v4276, %v4269
    %v4956 = vpack.c.b16 %v4277, %v4270
    %v4957 = vpack.c.b16 %v4278, %v4271
    %v4958 = vpack.c.b16 %v4279, %v4272
    %v4959 = vpack.c.b16 %v4280, %v4273
    %v4960 = vpack.c.b16 %v4288, %v4281
    %v4961 = vpack.c.b16 %v4289, %v4282
    %v4962 = vpack.c.b16 %v4290, %v4283
    %v4963 = vpack.c.b16 %v4291, %v4284
    %v4964 = vpack.c.b16 %v4292, %v4285
    %v4965 = vpack.c.b16 %v4293, %v4286
    %v4966 = vpack.c.b16 %v4294, %v4287
    %v4967 = vpack.c.b16 %v4302, %v4295
    %v4968 = vpack.c.b16 %v4303, %v4296
    %v4969 = vpack.c.b16 %v4304, %v4297
    %v4970 = vpack.c.b16 %v4305, %v4298
    %v4971 = vpack.c.b16 %v4306, %v4299
    %v4972 = vpack.c.b16 %v4307, %v4300
    %v4973 = vpack.c.b16 %v4308, %v4301
    %v4974 = vpack.c.b16 %v4316, %v4309
    %v4975 = vpack.c.b16 %v4317, %v4310
    %v4976 = vpack.c.b16 %v4318, %v4311
    %v4977 = vpack.c.b16 %v4319, %v4312
    %v4978 = vpack.c.b16 %v4320, %v4313
    %v4979 = vpack.c.b16 %v4321, %v4314
    %v4980 = vpack.c.b16 %v4322, %v4315
    %v4981 = vpack.c.b16 %v4330, %v4323
    %v4982 = vpack.c.b16 %v4331, %v4324
    %v4983 = vpack.c.b16 %v4332, %v4325
    %v4984 = vpack.c.b16 %v4333, %v4326
    %v4985 = vpack.c.b16 %v4334, %v4327
    %v4986 = vpack.c.b16 %v4335, %v4328
    %v4987 = vpack.c.b16 %v4336, %v4329
    %v4988 = vpack.c.b16 %v4344, %v4337
    %v4989 = vpack.c.b16 %v4345, %v4338
    %v4990 = vpack.c.b16 %v4346, %v4339
    %v4991 = vpack.c.b16 %v4347, %v4340
    %v4992 = vpack.c.b16 %v4348, %v4341
    %v4993 = vpack.c.b16 %v4349, %v4342
    %v4994 = vpack.c.b16 %v4350, %v4343
    %v4995 = vpack.c.b16 %v4358, %v4351
    %v4996 = vpack.c.b16 %v4359, %v4352
    %v4997 = vpack.c.b16 %v4360, %v4353
    %v4998 = vpack.c.b16 %v4361, %v4354
    %v4999 = vpack.c.b16 %v4362, %v4355
    %v5000 = vpack.c.b16 %v4363, %v4356
    %v5001 = vpack.c.b16 %v4364, %v4357
    %v5002 = vpack.c.b16 %v4372, %v4365
    %v5003 = vpack.c.b16 %v4373, %v4366
    %v5004 = vpack.c.b16 %v4374, %v4367
    %v5005 = vpack.c.b16 %v4375, %v4368
    %v5006 = vpack.c.b16 %v4376, %v4369
    %v5007 = vpack.c.b16 %v4377, %v4370
    %v5008 = vpack.c.b16 %v4378, %v4371
    %v5009 = vpack.c.b16 %v4386, %v4379
    %v5010 = vpack.c.b16 %v4387, %v4380
    %v5011 = vpack.c.b16 %v4388, %v4381
    %v5012 = vpack.c.b16 %v4389, %v4382
    %v5013 = vpack.c.b16 %v4390, %v4383
    %v5014 = vpack.c.b16 %v4391, %v4384
    %v5015 = vpack.c.b16 %v4392, %v4385
    %v5016 = vpack.c.b16 %v4400, %v4393
    %v5017 = vpack.c.b16 %v4401, %v4394
    %v5018 = vpack.c.b16 %v4402, %v4395
    %v5019 = vpack.c.b16 %v4403, %v4396
    %v5020 = vpack.c.b16 %v4404, %v4397
    %v5021 = vpack.c.b16 %v4405, %v4398
    %v5022 = vpack.c.b16 %v4406, %v4399
    %v5023 = vpack.c.b16 %v4414, %v4407
    %v5024 = vpack.c.b16 %v4415, %v4408
    %v5025 = vpack.c.b16 %v4416, %v4409
    %v5026 = vpack.c.b16 %v4417, %v4410
    %v5027 = vpack.c.b16 %v4418, %v4411
    %v5028 = vpack.c.b16 %v4419, %v4412
    %v5029 = vpack.c.b16 %v4420, %v4413
    %v5030 = vpack.c.b16 %v4428, %v4421
    %v5031 = vpack.c.b16 %v4429, %v4422
    %v5032 = vpack.c.b16 %v4430, %v4423
    %v5033 = vpack.c.b16 %v4431, %v4424
    %v5034 = vpack.c.b16 %v4432, %v4425
    %v5035 = vpack.c.b16 %v4433, %v4426
    %v5036 = vpack.c.b16 %v4434, %v4427
    %v5037 = vpack.c.b16 %v4442, %v4435
    %v5038 = vpack.c.b16 %v4443, %v4436
    %v5039 = vpack.c.b16 %v4444, %v4437
    %v5040 = vpack.c.b16 %v4445, %v4438
    %v5041 = vpack.c.b16 %v4446, %v4439
    %v5042 = vpack.c.b16 %v4447, %v4440
    %v5043 = vpack.c.b16 %v4448, %v4441
    %v5044 = vpack.c.b16 %v4456, %v4449
    %v5045 = vpack.c.b16 %v4457, %v4450
    %v5046 = vpack.c.b16 %v4458, %v4451
    %v5047 = vpack.c.b16 %v4459, %v4452
    %v5048 = vpack.c.b16 %v4460, %v4453
    %v5049 = vpack.c.b16 %v4461, %v4454
    %v5050 = vpack.c.b16 %v4462, %v4455
    %v5051 = vpack.c.b16 %v4470, %v4463
    %v5052 = vpack.c.b16 %v4471, %v4464
    %v5053 = vpack.c.b16 %v4472, %v4465
    %v5054 = vpack.c.b16 %v4473, %v4466
    %v5055 = vpack.c.b16 %v4474, %v4467
    %v5056 = vpack.c.b16 %v4475, %v4468
    %v5057 = vpack.c.b16 %v4476, %v4469
    %v5058 = vpack.c.b16 %v4484, %v4477
    %v5059 = vpack.c.b16 %v4485, %v4478
    %v5060 = vpack.c.b16 %v4486, %v4479
    %v5061 = vpack.c.b16 %v4487, %v4480
    %v5062 = vpack.c.b16 %v4488, %v4481
    %v5063 = vpack.c.b16 %v4489, %v4482
    %v5064 = vpack.c.b16 %v4490, %v4483
    %v5065 = vpack.c.b16 %v4498, %v4491
    %v5066 = vpack.c.b16 %v4499, %v4492
    %v5067 = vpack.c.b16 %v4500, %v4493
    %v5068 = vpack.c.b16 %v4501, %v4494
    %v5069 = vpack.c.b16 %v4502, %v4495
    %v5070 = vpack.c.b16 %v4503, %v4496
    %v5071 = vpack.c.b16 %v4504, %v4497
    %v5072 = vpack.c.b16 %v4512, %v4505
    %v5073 = vpack.c.b16 %v4513, %v4506
    %v5074 = vpack.c.b16 %v4514, %v4507
    %v5075 = vpack.c.b16 %v4515, %v4508
    %v5076 = vpack.c.b16 %v4516, %v4509
    %v5077 = vpack.c.b16 %v4517, %v4510
    %v5078 = vpack.c.b16 %v4518, %v4511
    %v5079 = vpack.c.b16 %v4526, %v4519
    %v5080 = vpack.c.b16 %v4527, %v4520
    %v5081 = vpack.c.b16 %v4528, %v4521
    %v5082 = vpack.c.b16 %v4529, %v4522
    %v5083 = vpack.c.b16 %v4530, %v4523
    %v5084 = vpack.c.b16 %v4531, %v4524
    %v5085 = vpack.c.b16 %v4532, %v4525
    %v5086 = vpack.c.b16 %v4540, %v4533
    %v5087 = vpack.c.b16 %v4541, %v4534
    %v5088 = vpack.c.b16 %v4542, %v4535
    %v5089 = vpack.c.b16 %v4543, %v4536
    %v5090 = vpack.c.b16 %v4544, %v4537
    %v5091 = vpack.c.b16 %v4545, %v4538
    %v5092 = vpack.c.b16 %v4546, %v4539
    %v5093 = vpack.c.b16 %v4554, %v4547
    %v5094 = vpack.c.b16 %v4555, %v4548
    %v5095 = vpack.c.b16 %v4556, %v4549
    %v5096 = vpack.c.b16 %v4557, %v4550
    %v5097 = vpack.c.b16 %v4558, %v4551
    %v5098 = vpack.c.b16 %v4559, %v4552
    %v5099 = vpack.c.b16 %v4560, %v4553
    %v5100 = vpack.c.b16 %v4568, %v4561
    %v5101 = vpack.c.b16 %v4569, %v4562
    %v5102 = vpack.c.b16 %v4570, %v4563
    %v5103 = vpack.c.b16 %v4571, %v4564
    %v5104 = vpack.c.b16 %v4572, %v4565
    %v5105 = vpack.c.b16 %v4573, %v4566
    %v5106 = vpack.c.b16 %v4574, %v4567
    %v5107 = vpack.c.b16 %v4582, %v4575
    %v5108 = vpack.c.b16 %v4583, %v4576
    %v5109 = vpack.c.b16 %v4584, %v4577
    %v5110 = vpack.c.b16 %v4585, %v4578
    %v5111 = vpack.c.b16 %v4586, %v4579
    %v5112 = vpack.c.b16 %v4587, %v4580
    %v5113 = vpack.c.b16 %v4588, %v4581
    %v5114 = vpack.c.b16 %v4596, %v4589
    %v5115 = vpack.c.b16 %v4597, %v4590
    %v5116 = vpack.c.b16 %v4598, %v4591
    %v5117 = vpack.c.b16 %v4599, %v4592
    %v5118 = vpack.c.b16 %v4600, %v4593
    %v5119 = vpack.c.b16 %v4601, %v4594
    %v5120 = vpack.c.b16 %v4602, %v4595
    %v5121 = vpack.c.b16 %v4610, %v4603
    %v5122 = vpack.c.b16 %v4611, %v4604
    %v5123 = vpack.c.b16 %v4612, %v4605
    %v5124 = vpack.c.b16 %v4613, %v4606
    %v5125 = vpack.c.b16 %v4614, %v4607
    %v5126 = vpack.c.b16 %v4615, %v4608
    %v5127 = vpack.c.b16 %v4616, %v4609
    %v5128 = vpack.c.b16 %v4624, %v4617
    %v5129 = vpack.c.b16 %v4625, %v4618
    %v5130 = vpack.c.b16 %v4626, %v4619
    %v5131 = vpack.c.b16 %v4627, %v4620
    %v5132 = vpack.c.b16 %v4628, %v4621
    %v5133 = vpack.c.b16 %v4629, %v4622
    %v5134 = vpack.c.b16 %v4630, %v4623
    %v5135 = vpack.c.b16 %v4638, %v4631
    %v5136 = vpack.c.b16 %v4639, %v4632
    %v5137 = vpack.c.b16 %v4640, %v4633
    %v5138 = vpack.c.b16 %v4641, %v4634
    %v5139 = vpack.c.b16 %v4642, %v4635
    %v5140 = vpack.c.b16 %v4643, %v4636
    %v5141 = vpack.c.b16 %v4644, %v4637
    %v5142 = vpack.c.b16 %v4652, %v4645
    %v5143 = vpack.c.b16 %v4653, %v4646
    %v5144 = vpack.c.b16 %v4654, %v4647
    %v5145 = vpack.c.b16 %v4655, %v4648
    %v5146 = vpack.c.b16 %v4656, %v4649
    %v5147 = vpack.c.b16 %v4657, %v4650
    %v5148 = vpack.c.b16 %v4658, %v4651
    %v5149 = vpack.c.b16 %v4666, %v4659
    %v5150 = vpack.c.b16 %v4667, %v4660
    %v5151 = vpack.c.b16 %v4668, %v4661
    %v5152 = vpack.c.b16 %v4669, %v4662
    %v5153 = vpack.c.b16 %v4670, %v4663
    %v5154 = vpack.c.b16 %v4671, %v4664
    %v5155 = vpack.c.b16 %v4672, %v4665
    %v5156 = vpack.c.b16 %v4680, %v4673
    %v5157 = vpack.c.b16 %v4681, %v4674
    %v5158 = vpack.c.b16 %v4682, %v4675
    %v5159 = vpack.c.b16 %v4683, %v4676
    %v5160 = vpack.c.b16 %v4684, %v4677
    %v5161 = vpack.c.b16 %v4685, %v4678
    %v5162 = vpack.c.b16 %v4686, %v4679
    %v5163 = vpack.c.b16 %v4694, %v4687
    %v5164 = vpack.c.b16 %v4695, %v4688
    %v5165 = vpack.c.b16 %v4696, %v4689
    %v5166 = vpack.c.b16 %v4697, %v4690
    %v5167 = vpack.c.b16 %v4698, %v4691
    %v5168 = vpack.c.b16 %v4699, %v4692
    %v5169 = vpack.c.b16 %v4700, %v4693
    %v5170 = vpack.c.b16 %v4708, %v4701
    %v5171 = vpack.c.b16 %v4709, %v4702
    %v5172 = vpack.c.b16 %v4710, %v4703
    %v5173 = vpack.c.b16 %v4711, %v4704
    %v5174 = vpack.c.b16 %v4712, %v4705
    %v5175 = vpack.c.b16 %v4713, %v4706
    %v5176 = vpack.c.b16 %v4714, %v4707
    %v5177 = vpack.c.b16 %v4722, %v4715
    %v5178 = vpack.c.b16 %v4723, %v4716
    %v5179 = vpack.c.b16 %v4724, %v4717
    %v5180 = vpack.c.b16 %v4725, %v4718
    %v5181 = vpack.c.b16 %v4726, %v4719
    %v5182 = vpack.c.b16 %v4727, %v4720
    %v5183 = vpack.c.b16 %v4728, %v4721
    %v5184 = vpack.c.b16 %v4736, %v4729
    %v5185 = vpack.c.b16 %v4737, %v4730
    %v5186 = vpack.c.b16 %v4738, %v4731
    %v5187 = vpack.c.b16 %v4739, %v4732
    %v5188 = vpack.c.b16 %v4740, %v4733
    %v5189 = vpack.c.b16 %v4741, %v4734
    %v5190 = vpack.c.b16 %v4742, %v4735
    %v5640 = vlaneseq
    %v5641 = vshrl.u32 %v5640, 7
    %v5642 = vsub.s32 0, %v5641
    %v5643 = vrot.slane %v3334, %v5642
    %v5644 = vlaneseq
    %v5645 = vshrl.u32 %v5644, 7
    %v5646 = vsub.s32 1, %v5645
    %v5647 = vrot.slane %v3334, %v5646
    %v5648 = vlaneseq
    %v5649 = vshrl.u32 %v5648, 7
    %v5650 = vsub.s32 2, %v5649
    %v5651 = vrot.slane %v3334, %v5650
    %v5652 = vlaneseq
    %v5653 = vshrl.u32 %v5652, 7
    %v5654 = vsub.s32 3, %v5653
    %v5655 = vrot.slane %v3334, %v5654
    %v5656 = vlaneseq
    %v5657 = vshrl.u32 %v5656, 7
    %v5658 = vsub.s32 4, %v5657
    %v5659 = vrot.slane %v3334, %v5658
    %v5660 = vlaneseq
    %v5661 = vshrl.u32 %v5660, 7
    %v5662 = vsub.s32 5, %v5661
    %v5663 = vrot.slane %v3334, %v5662
    %v5664 = vlaneseq
    %v5665 = vshrl.u32 %v5664, 7
    %v5666 = vsub.s32 6, %v5665
    %v5667 = vrot.slane %v3334, %v5666
    %5675 = vmatprep.subr.bf16.mxu0 %v4793
    %5676 = vmatpush1.bf16.msra.mxu0 %v4792
    %5677 = vmatprep.subr.bf16.mxu0 %v4786
    %5678 = vmatpush1.bf16.msra.mxu0 %v4785
    %5679 = vmatprep.subr.bf16.mxu0 %v4779
    %5680 = vmatpush1.bf16.msra.mxu0 %v4778
    %5681 = vmatprep.subr.bf16.mxu0 %v4772
    %5682 = vmatpush1.bf16.msra.mxu0 %v4771
    %5683 = vmatprep.subr.bf16.mxu0 %v4765
    %5684 = vmatpush1.bf16.msra.mxu0 %v4764
    %5685 = vmatprep.subr.bf16.mxu0 %v4758
    %5686 = vmatpush1.bf16.msra.mxu0 %v4757
    %5687 = vmatprep.subr.bf16.mxu0 %v4751
    %5688 = vmatpush1.bf16.msra.mxu0 %v4750
    %5689 = vmatprep.subr.bf16.mxu0 %v4744
    %5690 = vmatpush1.bf16.msra.mxu0 %v4743
    %5691 = vmatprep.subr.bf16.mxu0 %v4849
    %5692 = vmatpush2.bf16.msra.mxu0 %v4848
    %5693 = vmatprep.subr.bf16.mxu0 %v4842
    %5694 = vmatpush2.bf16.msra.mxu0 %v4841
    %5695 = vmatprep.subr.bf16.mxu0 %v4835
    %5696 = vmatpush2.bf16.msra.mxu0 %v4834
    %5697 = vmatprep.subr.bf16.mxu0 %v4828
    %5698 = vmatpush2.bf16.msra.mxu0 %v4827
    %5699 = vmatprep.subr.bf16.mxu0 %v4821
    %5700 = vmatpush2.bf16.msra.mxu0 %v4820
    %5701 = vmatprep.subr.bf16.mxu0 %v4814
    %5702 = vmatpush2.bf16.msra.mxu0 %v4813
    %5703 = vmatprep.subr.bf16.mxu0 %v4807
    %5704 = vmatpush2.bf16.msra.mxu0 %v4806
    %5705 = vmatprep.subr.bf16.mxu0 %v4800
    %5706 = vmatpush2.bf16.msra.mxu0 %v4799
    %5707 = vmatprep.mubr.bf16.mxu0 %v2815
    %5708 = vmatmul.mubr.bf16.gmra.mxu0 %v2814
    %v5709 = vpop.f32.mrf.mxu0
    %v5710 = vadd.f32 %v5643, %v5709
    %v5711 = vpop.f32.mrf.mxu0
    %v5712 = vadd.f32 %v5647, %v5711
    %v5713 = vpop.f32.mrf.mxu0
    %v5714 = vpop.f32.mrf.mxu0
    %5715 = vdwg.mxu0
    %5716 = vmatprep.subr.bf16.mxu0 %v4905
    %5717 = vmatpush1.bf16.msra.mxu0 %v4904
    %5718 = vmatprep.subr.bf16.mxu0 %v4898
    %5719 = vmatpush1.bf16.msra.mxu0 %v4897
    %5720 = vmatprep.subr.bf16.mxu0 %v4891
    %5721 = vmatpush1.bf16.msra.mxu0 %v4890
    %5722 = vmatprep.subr.bf16.mxu0 %v4884
    %5723 = vmatpush1.bf16.msra.mxu0 %v4883
    %5724 = vmatprep.subr.bf16.mxu0 %v4877
    %5725 = vmatpush1.bf16.msra.mxu0 %v4876
    %5726 = vmatprep.subr.bf16.mxu0 %v4870
    %5727 = vmatpush1.bf16.msra.mxu0 %v4869
    %5728 = vmatprep.subr.bf16.mxu0 %v4863
    %5729 = vmatpush1.bf16.msra.mxu0 %v4862
    %5730 = vmatprep.subr.bf16.mxu0 %v4856
    %5731 = vmatpush1.bf16.msra.mxu0 %v4855
    %5732 = vmatprep.subr.bf16.mxu0 %v4961
    %5733 = vmatpush2.bf16.msra.mxu0 %v4960
    %5734 = vmatprep.subr.bf16.mxu0 %v4954
    %5735 = vmatpush2.bf16.msra.mxu0 %v4953
    %5736 = vmatprep.subr.bf16.mxu0 %v4947
    %5737 = vmatpush2.bf16.msra.mxu0 %v4946
    %5738 = vmatprep.subr.bf16.mxu0 %v4940
    %5739 = vmatpush2.bf16.msra.mxu0 %v4939
    %5740 = vmatprep.subr.bf16.mxu0 %v4933
    %5741 = vmatpush2.bf16.msra.mxu0 %v4932
    %5742 = vmatprep.subr.bf16.mxu0 %v4926
    %5743 = vmatpush2.bf16.msra.mxu0 %v4925
    %5744 = vmatprep.subr.bf16.mxu0 %v4919
    %5745 = vmatpush2.bf16.msra.mxu0 %v4918
    %5746 = vmatprep.subr.bf16.mxu0 %v4912
    %5747 = vmatpush2.bf16.msra.mxu0 %v4911
    %5748 = vmatprep.mubr.bf16.mxu0 %v2817
    %5749 = vmatmul.mubr.bf16.gmra.mxu0 %v2816
    %v5750 = vpop.f32.mrf.mxu0
    %v5751 = vadd.f32 %v5710, %v5750
    %v5752 = vpop.f32.mrf.mxu0
    %v5753 = vadd.f32 %v5712, %v5752
    %v5754 = vpop.f32.mrf.mxu0
    %v5755 = vpop.f32.mrf.mxu0
    %5756 = vdwg.mxu0
    %5757 = vmatprep.subr.bf16.mxu0 %v5017
    %5758 = vmatpush1.bf16.msra.mxu0 %v5016
    %5759 = vmatprep.subr.bf16.mxu0 %v5010
    %5760 = vmatpush1.bf16.msra.mxu0 %v5009
    %5761 = vmatprep.subr.bf16.mxu0 %v5003
    %5762 = vmatpush1.bf16.msra.mxu0 %v5002
    %5763 = vmatprep.subr.bf16.mxu0 %v4996
    %5764 = vmatpush1.bf16.msra.mxu0 %v4995
    %5765 = vmatprep.subr.bf16.mxu0 %v4989
    %5766 = vmatpush1.bf16.msra.mxu0 %v4988
    %5767 = vmatprep.subr.bf16.mxu0 %v4982
    %5768 = vmatpush1.bf16.msra.mxu0 %v4981
    %5769 = vmatprep.subr.bf16.mxu0 %v4975
    %5770 = vmatpush1.bf16.msra.mxu0 %v4974
    %5771 = vmatprep.subr.bf16.mxu0 %v4968
    %5772 = vmatpush1.bf16.msra.mxu0 %v4967
    %5773 = vmatprep.subr.bf16.mxu0 %v5073
    %5774 = vmatpush2.bf16.msra.mxu0 %v5072
    %5775 = vmatprep.subr.bf16.mxu0 %v5066
    %5776 = vmatpush2.bf16.msra.mxu0 %v5065
    %5777 = vmatprep.subr.bf16.mxu0 %v5059
    %5778 = vmatpush2.bf16.msra.mxu0 %v5058
    %5779 = vmatprep.subr.bf16.mxu0 %v5052
    %5780 = vmatpush2.bf16.msra.mxu0 %v5051
    %5781 = vmatprep.subr.bf16.mxu0 %v5045
    %5782 = vmatpush2.bf16.msra.mxu0 %v5044
    %5783 = vmatprep.subr.bf16.mxu0 %v5038
    %5784 = vmatpush2.bf16.msra.mxu0 %v5037
    %5785 = vmatprep.subr.bf16.mxu0 %v5031
    %5786 = vmatpush2.bf16.msra.mxu0 %v5030
    %5787 = vmatprep.subr.bf16.mxu0 %v5024
    %5788 = vmatpush2.bf16.msra.mxu0 %v5023
    %5789 = vmatprep.mubr.bf16.mxu0 %v2819
    %5790 = vmatmul.mubr.bf16.gmra.mxu0 %v2818
    %v5791 = vpop.f32.mrf.mxu0
    %v5792 = vadd.f32 %v5751, %v5791
    %v5793 = vpop.f32.mrf.mxu0
    %v5794 = vadd.f32 %v5753, %v5793
    %v5795 = vpop.f32.mrf.mxu0
    %v5796 = vpop.f32.mrf.mxu0
    %5797 = vdwg.mxu0
    %5798 = vmatprep.subr.bf16.mxu0 %v5129
    %5799 = vmatpush1.bf16.msra.mxu0 %v5128
    %5800 = vmatprep.subr.bf16.mxu0 %v5122
    %5801 = vmatpush1.bf16.msra.mxu0 %v5121
    %5802 = vmatprep.subr.bf16.mxu0 %v5115
    %5803 = vmatpush1.bf16.msra.mxu0 %v5114
    %5804 = vmatprep.subr.bf16.mxu0 %v5108
    %5805 = vmatpush1.bf16.msra.mxu0 %v5107
    %5806 = vmatprep.subr.bf16.mxu0 %v5101
    %5807 = vmatpush1.bf16.msra.mxu0 %v5100
    %5808 = vmatprep.subr.bf16.mxu0 %v5094
    %5809 = vmatpush1.bf16.msra.mxu0 %v5093
    %5810 = vmatprep.subr.bf16.mxu0 %v5087
    %5811 = vmatpush1.bf16.msra.mxu0 %v5086
    %5812 = vmatprep.subr.bf16.mxu0 %v5080
    %5813 = vmatpush1.bf16.msra.mxu0 %v5079
    %5814 = vmatprep.subr.bf16.mxu0 %v5185
    %5815 = vmatpush2.bf16.msra.mxu0 %v5184
    %5816 = vmatprep.subr.bf16.mxu0 %v5178
    %5817 = vmatpush2.bf16.msra.mxu0 %v5177
    %5818 = vmatprep.subr.bf16.mxu0 %v5171
    %5819 = vmatpush2.bf16.msra.mxu0 %v5170
    %5820 = vmatprep.subr.bf16.mxu0 %v5164
    %5821 = vmatpush2.bf16.msra.mxu0 %v5163
    %5822 = vmatprep.subr.bf16.mxu0 %v5157
    %5823 = vmatpush2.bf16.msra.mxu0 %v5156
    %5824 = vmatprep.subr.bf16.mxu0 %v5150
    %5825 = vmatpush2.bf16.msra.mxu0 %v5149
    %5826 = vmatprep.subr.bf16.mxu0 %v5143
    %5827 = vmatpush2.bf16.msra.mxu0 %v5142
    %5828 = vmatprep.subr.bf16.mxu0 %v5136
    %5829 = vmatpush2.bf16.msra.mxu0 %v5135
    %5830 = vmatprep.mubr.bf16.mxu0 %v2821
    %5831 = vmatmul.mubr.bf16.gmra.mxu0 %v2820
    %v5832 = vpop.f32.mrf.mxu0
    %v5833 = vadd.f32 %v5792, %v5832
    %v5834 = vpop.f32.mrf.mxu0
    %v5835 = vadd.f32 %v5794, %v5834
    %v5836 = vpop.f32.mrf.mxu0
    %v5837 = vpop.f32.mrf.mxu0
    %5838 = vdwg.mxu0
    %5839 = vmatprep.subr.bf16.mxu0 %v4795
    %5840 = vmatpush1.bf16.msra.mxu0 %v4794
    %5841 = vmatprep.subr.bf16.mxu0 %v4788
    %5842 = vmatpush1.bf16.msra.mxu0 %v4787
    %5843 = vmatprep.subr.bf16.mxu0 %v4781
    %5844 = vmatpush1.bf16.msra.mxu0 %v4780
    %5845 = vmatprep.subr.bf16.mxu0 %v4774
    %5846 = vmatpush1.bf16.msra.mxu0 %v4773
    %5847 = vmatprep.subr.bf16.mxu0 %v4767
    %5848 = vmatpush1.bf16.msra.mxu0 %v4766
    %5849 = vmatprep.subr.bf16.mxu0 %v4760
    %5850 = vmatpush1.bf16.msra.mxu0 %v4759
    %5851 = vmatprep.subr.bf16.mxu0 %v4753
    %5852 = vmatpush1.bf16.msra.mxu0 %v4752
    %5853 = vmatprep.subr.bf16.mxu0 %v4746
    %5854 = vmatpush1.bf16.msra.mxu0 %v4745
    %5855 = vmatprep.subr.bf16.mxu0 %v4851
    %5856 = vmatpush2.bf16.msra.mxu0 %v4850
    %5857 = vmatprep.subr.bf16.mxu0 %v4844
    %5858 = vmatpush2.bf16.msra.mxu0 %v4843
    %5859 = vmatprep.subr.bf16.mxu0 %v4837
    %5860 = vmatpush2.bf16.msra.mxu0 %v4836
    %5861 = vmatprep.subr.bf16.mxu0 %v4830
    %5862 = vmatpush2.bf16.msra.mxu0 %v4829
    %5863 = vmatprep.subr.bf16.mxu0 %v4823
    %5864 = vmatpush2.bf16.msra.mxu0 %v4822
    %5865 = vmatprep.subr.bf16.mxu0 %v4816
    %5866 = vmatpush2.bf16.msra.mxu0 %v4815
    %5867 = vmatprep.subr.bf16.mxu0 %v4809
    %5868 = vmatpush2.bf16.msra.mxu0 %v4808
    %5869 = vmatprep.subr.bf16.mxu0 %v4802
    %5870 = vmatpush2.bf16.msra.mxu0 %v4801
    %5871 = vmatprep.mubr.bf16.mxu0 %v2815
    %5872 = vmatmul.mubr.bf16.gmra.mxu0 %v2814
    %v5873 = vpop.f32.mrf.mxu0
    %v5874 = vadd.f32 %v5651, %v5873
    %v5875 = vpop.f32.mrf.mxu0
    %v5876 = vadd.f32 %v5655, %v5875
    %v5877 = vpop.f32.mrf.mxu0
    %v5878 = vpop.f32.mrf.mxu0
    %5879 = vdwg.mxu0
    %5880 = vmatprep.subr.bf16.mxu0 %v4907
    %5881 = vmatpush1.bf16.msra.mxu0 %v4906
    %5882 = vmatprep.subr.bf16.mxu0 %v4900
    %5883 = vmatpush1.bf16.msra.mxu0 %v4899
    %5884 = vmatprep.subr.bf16.mxu0 %v4893
    %5885 = vmatpush1.bf16.msra.mxu0 %v4892
    %5886 = vmatprep.subr.bf16.mxu0 %v4886
    %5887 = vmatpush1.bf16.msra.mxu0 %v4885
    %5888 = vmatprep.subr.bf16.mxu0 %v4879
    %5889 = vmatpush1.bf16.msra.mxu0 %v4878
    %5890 = vmatprep.subr.bf16.mxu0 %v4872
    %5891 = vmatpush1.bf16.msra.mxu0 %v4871
    %5892 = vmatprep.subr.bf16.mxu0 %v4865
    %5893 = vmatpush1.bf16.msra.mxu0 %v4864
    %5894 = vmatprep.subr.bf16.mxu0 %v4858
    %5895 = vmatpush1.bf16.msra.mxu0 %v4857
    %5896 = vmatprep.subr.bf16.mxu0 %v4963
    %5897 = vmatpush2.bf16.msra.mxu0 %v4962
    %5898 = vmatprep.subr.bf16.mxu0 %v4956
    %5899 = vmatpush2.bf16.msra.mxu0 %v4955
    %5900 = vmatprep.subr.bf16.mxu0 %v4949
    %5901 = vmatpush2.bf16.msra.mxu0 %v4948
    %5902 = vmatprep.subr.bf16.mxu0 %v4942
    %5903 = vmatpush2.bf16.msra.mxu0 %v4941
    %5904 = vmatprep.subr.bf16.mxu0 %v4935
    %5905 = vmatpush2.bf16.msra.mxu0 %v4934
    %5906 = vmatprep.subr.bf16.mxu0 %v4928
    %5907 = vmatpush2.bf16.msra.mxu0 %v4927
    %5908 = vmatprep.subr.bf16.mxu0 %v4921
    %5909 = vmatpush2.bf16.msra.mxu0 %v4920
    %5910 = vmatprep.subr.bf16.mxu0 %v4914
    %5911 = vmatpush2.bf16.msra.mxu0 %v4913
    %5912 = vmatprep.mubr.bf16.mxu0 %v2817
    %5913 = vmatmul.mubr.bf16.gmra.mxu0 %v2816
    %v5914 = vpop.f32.mrf.mxu0
    %v5915 = vadd.f32 %v5874, %v5914
    %v5916 = vpop.f32.mrf.mxu0
    %v5917 = vadd.f32 %v5876, %v5916
    %v5918 = vpop.f32.mrf.mxu0
    %v5919 = vpop.f32.mrf.mxu0
    %5920 = vdwg.mxu0
    %5921 = vmatprep.subr.bf16.mxu0 %v5019
    %5922 = vmatpush1.bf16.msra.mxu0 %v5018
    %5923 = vmatprep.subr.bf16.mxu0 %v5012
    %5924 = vmatpush1.bf16.msra.mxu0 %v5011
    %5925 = vmatprep.subr.bf16.mxu0 %v5005
    %5926 = vmatpush1.bf16.msra.mxu0 %v5004
    %5927 = vmatprep.subr.bf16.mxu0 %v4998
    %5928 = vmatpush1.bf16.msra.mxu0 %v4997
    %5929 = vmatprep.subr.bf16.mxu0 %v4991
    %5930 = vmatpush1.bf16.msra.mxu0 %v4990
    %5931 = vmatprep.subr.bf16.mxu0 %v4984
    %5932 = vmatpush1.bf16.msra.mxu0 %v4983
    %5933 = vmatprep.subr.bf16.mxu0 %v4977
    %5934 = vmatpush1.bf16.msra.mxu0 %v4976
    %5935 = vmatprep.subr.bf16.mxu0 %v4970
    %5936 = vmatpush1.bf16.msra.mxu0 %v4969
    %5937 = vmatprep.subr.bf16.mxu0 %v5075
    %5938 = vmatpush2.bf16.msra.mxu0 %v5074
    %5939 = vmatprep.subr.bf16.mxu0 %v5068
    %5940 = vmatpush2.bf16.msra.mxu0 %v5067
    %5941 = vmatprep.subr.bf16.mxu0 %v5061
    %5942 = vmatpush2.bf16.msra.mxu0 %v5060
    %5943 = vmatprep.subr.bf16.mxu0 %v5054
    %5944 = vmatpush2.bf16.msra.mxu0 %v5053
    %5945 = vmatprep.subr.bf16.mxu0 %v5047
    %5946 = vmatpush2.bf16.msra.mxu0 %v5046
    %5947 = vmatprep.subr.bf16.mxu0 %v5040
    %5948 = vmatpush2.bf16.msra.mxu0 %v5039
    %5949 = vmatprep.subr.bf16.mxu0 %v5033
    %5950 = vmatpush2.bf16.msra.mxu0 %v5032
    %5951 = vmatprep.subr.bf16.mxu0 %v5026
    %5952 = vmatpush2.bf16.msra.mxu0 %v5025
    %5953 = vmatprep.mubr.bf16.mxu0 %v2819
    %5954 = vmatmul.mubr.bf16.gmra.mxu0 %v2818
    %v5955 = vpop.f32.mrf.mxu0
    %v5956 = vadd.f32 %v5915, %v5955
    %v5957 = vpop.f32.mrf.mxu0
    %v5958 = vadd.f32 %v5917, %v5957
    %v5959 = vpop.f32.mrf.mxu0
    %v5960 = vpop.f32.mrf.mxu0
    %5961 = vdwg.mxu0
    %5962 = vmatprep.subr.bf16.mxu0 %v5131
    %5963 = vmatpush1.bf16.msra.mxu0 %v5130
    %5964 = vmatprep.subr.bf16.mxu0 %v5124
    %5965 = vmatpush1.bf16.msra.mxu0 %v5123
    %5966 = vmatprep.subr.bf16.mxu0 %v5117
    %5967 = vmatpush1.bf16.msra.mxu0 %v5116
    %5968 = vmatprep.subr.bf16.mxu0 %v5110
    %5969 = vmatpush1.bf16.msra.mxu0 %v5109
    %5970 = vmatprep.subr.bf16.mxu0 %v5103
    %5971 = vmatpush1.bf16.msra.mxu0 %v5102
    %5972 = vmatprep.subr.bf16.mxu0 %v5096
    %5973 = vmatpush1.bf16.msra.mxu0 %v5095
    %5974 = vmatprep.subr.bf16.mxu0 %v5089
    %5975 = vmatpush1.bf16.msra.mxu0 %v5088
    %5976 = vmatprep.subr.bf16.mxu0 %v5082
    %5977 = vmatpush1.bf16.msra.mxu0 %v5081
    %5978 = vmatprep.subr.bf16.mxu0 %v5187
    %5979 = vmatpush2.bf16.msra.mxu0 %v5186
    %5980 = vmatprep.subr.bf16.mxu0 %v5180
    %5981 = vmatpush2.bf16.msra.mxu0 %v5179
    %5982 = vmatprep.subr.bf16.mxu0 %v5173
    %5983 = vmatpush2.bf16.msra.mxu0 %v5172
    %5984 = vmatprep.subr.bf16.mxu0 %v5166
    %5985 = vmatpush2.bf16.msra.mxu0 %v5165
    %5986 = vmatprep.subr.bf16.mxu0 %v5159
    %5987 = vmatpush2.bf16.msra.mxu0 %v5158
    %5988 = vmatprep.subr.bf16.mxu0 %v5152
    %5989 = vmatpush2.bf16.msra.mxu0 %v5151
    %5990 = vmatprep.subr.bf16.mxu0 %v5145
    %5991 = vmatpush2.bf16.msra.mxu0 %v5144
    %5992 = vmatprep.subr.bf16.mxu0 %v5138
    %5993 = vmatpush2.bf16.msra.mxu0 %v5137
    %5994 = vmatprep.mubr.bf16.mxu0 %v2821
    %5995 = vmatmul.mubr.bf16.gmra.mxu0 %v2820
    %v5996 = vpop.f32.mrf.mxu0
    %v5997 = vadd.f32 %v5956, %v5996
    %v5998 = vpop.f32.mrf.mxu0
    %v5999 = vadd.f32 %v5958, %v5998
    %v6000 = vpop.f32.mrf.mxu0
    %v6001 = vpop.f32.mrf.mxu0
    %6002 = vdwg.mxu0
    %6003 = vmatprep.subr.bf16.mxu0 %v4797
    %6004 = vmatpush1.bf16.msra.mxu0 %v4796
    %6005 = vmatprep.subr.bf16.mxu0 %v4790
    %6006 = vmatpush1.bf16.msra.mxu0 %v4789
    %6007 = vmatprep.subr.bf16.mxu0 %v4783
    %6008 = vmatpush1.bf16.msra.mxu0 %v4782
    %6009 = vmatprep.subr.bf16.mxu0 %v4776
    %6010 = vmatpush1.bf16.msra.mxu0 %v4775
    %6011 = vmatprep.subr.bf16.mxu0 %v4769
    %6012 = vmatpush1.bf16.msra.mxu0 %v4768
    %6013 = vmatprep.subr.bf16.mxu0 %v4762
    %6014 = vmatpush1.bf16.msra.mxu0 %v4761
    %6015 = vmatprep.subr.bf16.mxu0 %v4755
    %6016 = vmatpush1.bf16.msra.mxu0 %v4754
    %6017 = vmatprep.subr.bf16.mxu0 %v4748
    %6018 = vmatpush1.bf16.msra.mxu0 %v4747
    %6019 = vmatprep.subr.bf16.mxu0 %v4853
    %6020 = vmatpush2.bf16.msra.mxu0 %v4852
    %6021 = vmatprep.subr.bf16.mxu0 %v4846
    %6022 = vmatpush2.bf16.msra.mxu0 %v4845
    %6023 = vmatprep.subr.bf16.mxu0 %v4839
    %6024 = vmatpush2.bf16.msra.mxu0 %v4838
    %6025 = vmatprep.subr.bf16.mxu0 %v4832
    %6026 = vmatpush2.bf16.msra.mxu0 %v4831
    %6027 = vmatprep.subr.bf16.mxu0 %v4825
    %6028 = vmatpush2.bf16.msra.mxu0 %v4824
    %6029 = vmatprep.subr.bf16.mxu0 %v4818
    %6030 = vmatpush2.bf16.msra.mxu0 %v4817
    %6031 = vmatprep.subr.bf16.mxu0 %v4811
    %6032 = vmatpush2.bf16.msra.mxu0 %v4810
    %6033 = vmatprep.subr.bf16.mxu0 %v4804
    %6034 = vmatpush2.bf16.msra.mxu0 %v4803
    %6035 = vmatprep.mubr.bf16.mxu0 %v2815
    %6036 = vmatmul.mubr.bf16.gmra.mxu0 %v2814
    %v6037 = vpop.f32.mrf.mxu0
    %v6038 = vadd.f32 %v5659, %v6037
    %v6039 = vpop.f32.mrf.mxu0
    %v6040 = vadd.f32 %v5663, %v6039
    %v6041 = vpop.f32.mrf.mxu0
    %v6042 = vpop.f32.mrf.mxu0
    %6043 = vdwg.mxu0
    %6044 = vmatprep.subr.bf16.mxu0 %v4909
    %6045 = vmatpush1.bf16.msra.mxu0 %v4908
    %6046 = vmatprep.subr.bf16.mxu0 %v4902
    %6047 = vmatpush1.bf16.msra.mxu0 %v4901
    %6048 = vmatprep.subr.bf16.mxu0 %v4895
    %6049 = vmatpush1.bf16.msra.mxu0 %v4894
    %6050 = vmatprep.subr.bf16.mxu0 %v4888
    %6051 = vmatpush1.bf16.msra.mxu0 %v4887
    %6052 = vmatprep.subr.bf16.mxu0 %v4881
    %6053 = vmatpush1.bf16.msra.mxu0 %v4880
    %6054 = vmatprep.subr.bf16.mxu0 %v4874
    %6055 = vmatpush1.bf16.msra.mxu0 %v4873
    %6056 = vmatprep.subr.bf16.mxu0 %v4867
    %6057 = vmatpush1.bf16.msra.mxu0 %v4866
    %6058 = vmatprep.subr.bf16.mxu0 %v4860
    %6059 = vmatpush1.bf16.msra.mxu0 %v4859
    %6060 = vmatprep.subr.bf16.mxu0 %v4965
    %6061 = vmatpush2.bf16.msra.mxu0 %v4964
    %6062 = vmatprep.subr.bf16.mxu0 %v4958
    %6063 = vmatpush2.bf16.msra.mxu0 %v4957
    %6064 = vmatprep.subr.bf16.mxu0 %v4951
    %6065 = vmatpush2.bf16.msra.mxu0 %v4950
    %6066 = vmatprep.subr.bf16.mxu0 %v4944
    %6067 = vmatpush2.bf16.msra.mxu0 %v4943
    %6068 = vmatprep.subr.bf16.mxu0 %v4937
    %6069 = vmatpush2.bf16.msra.mxu0 %v4936
    %6070 = vmatprep.subr.bf16.mxu0 %v4930
    %6071 = vmatpush2.bf16.msra.mxu0 %v4929
    %6072 = vmatprep.subr.bf16.mxu0 %v4923
    %6073 = vmatpush2.bf16.msra.mxu0 %v4922
    %6074 = vmatprep.subr.bf16.mxu0 %v4916
    %6075 = vmatpush2.bf16.msra.mxu0 %v4915
    %6076 = vmatprep.mubr.bf16.mxu0 %v2817
    %6077 = vmatmul.mubr.bf16.gmra.mxu0 %v2816
    %v6078 = vpop.f32.mrf.mxu0
    %v6079 = vadd.f32 %v6038, %v6078
    %v6080 = vpop.f32.mrf.mxu0
    %v6081 = vadd.f32 %v6040, %v6080
    %v6082 = vpop.f32.mrf.mxu0
    %v6083 = vpop.f32.mrf.mxu0
    %6084 = vdwg.mxu0
    %6085 = vmatprep.subr.bf16.mxu0 %v5021
    %6086 = vmatpush1.bf16.msra.mxu0 %v5020
    %6087 = vmatprep.subr.bf16.mxu0 %v5014
    %6088 = vmatpush1.bf16.msra.mxu0 %v5013
    %6089 = vmatprep.subr.bf16.mxu0 %v5007
    %6090 = vmatpush1.bf16.msra.mxu0 %v5006
    %6091 = vmatprep.subr.bf16.mxu0 %v5000
    %6092 = vmatpush1.bf16.msra.mxu0 %v4999
    %6093 = vmatprep.subr.bf16.mxu0 %v4993
    %6094 = vmatpush1.bf16.msra.mxu0 %v4992
    %6095 = vmatprep.subr.bf16.mxu0 %v4986
    %6096 = vmatpush1.bf16.msra.mxu0 %v4985
    %6097 = vmatprep.subr.bf16.mxu0 %v4979
    %6098 = vmatpush1.bf16.msra.mxu0 %v4978
    %6099 = vmatprep.subr.bf16.mxu0 %v4972
    %6100 = vmatpush1.bf16.msra.mxu0 %v4971
    %6101 = vmatprep.subr.bf16.mxu0 %v5077
    %6102 = vmatpush2.bf16.msra.mxu0 %v5076
    %6103 = vmatprep.subr.bf16.mxu0 %v5070
    %6104 = vmatpush2.bf16.msra.mxu0 %v5069
    %6105 = vmatprep.subr.bf16.mxu0 %v5063
    %6106 = vmatpush2.bf16.msra.mxu0 %v5062
    %6107 = vmatprep.subr.bf16.mxu0 %v5056
    %6108 = vmatpush2.bf16.msra.mxu0 %v5055
    %6109 = vmatprep.subr.bf16.mxu0 %v5049
    %6110 = vmatpush2.bf16.msra.mxu0 %v5048
    %6111 = vmatprep.subr.bf16.mxu0 %v5042
    %6112 = vmatpush2.bf16.msra.mxu0 %v5041
    %6113 = vmatprep.subr.bf16.mxu0 %v5035
    %6114 = vmatpush2.bf16.msra.mxu0 %v5034
    %6115 = vmatprep.subr.bf16.mxu0 %v5028
    %6116 = vmatpush2.bf16.msra.mxu0 %v5027
    %6117 = vmatprep.mubr.bf16.mxu0 %v2819
    %6118 = vmatmul.mubr.bf16.gmra.mxu0 %v2818
    %v6119 = vpop.f32.mrf.mxu0
    %v6120 = vadd.f32 %v6079, %v6119
    %v6121 = vpop.f32.mrf.mxu0
    %v6122 = vadd.f32 %v6081, %v6121
    %v6123 = vpop.f32.mrf.mxu0
    %v6124 = vpop.f32.mrf.mxu0
    %6125 = vdwg.mxu0
    %6126 = vmatprep.subr.bf16.mxu0 %v5133
    %6127 = vmatpush1.bf16.msra.mxu0 %v5132
    %6128 = vmatprep.subr.bf16.mxu0 %v5126
    %6129 = vmatpush1.bf16.msra.mxu0 %v5125
    %6130 = vmatprep.subr.bf16.mxu0 %v5119
    %6131 = vmatpush1.bf16.msra.mxu0 %v5118
    %6132 = vmatprep.subr.bf16.mxu0 %v5112
    %6133 = vmatpush1.bf16.msra.mxu0 %v5111
    %6134 = vmatprep.subr.bf16.mxu0 %v5105
    %6135 = vmatpush1.bf16.msra.mxu0 %v5104
    %6136 = vmatprep.subr.bf16.mxu0 %v5098
    %6137 = vmatpush1.bf16.msra.mxu0 %v5097
    %6138 = vmatprep.subr.bf16.mxu0 %v5091
    %6139 = vmatpush1.bf16.msra.mxu0 %v5090
    %6140 = vmatprep.subr.bf16.mxu0 %v5084
    %6141 = vmatpush1.bf16.msra.mxu0 %v5083
    %6142 = vmatprep.subr.bf16.mxu0 %v5189
    %6143 = vmatpush2.bf16.msra.mxu0 %v5188
    %6144 = vmatprep.subr.bf16.mxu0 %v5182
    %6145 = vmatpush2.bf16.msra.mxu0 %v5181
    %6146 = vmatprep.subr.bf16.mxu0 %v5175
    %6147 = vmatpush2.bf16.msra.mxu0 %v5174
    %6148 = vmatprep.subr.bf16.mxu0 %v5168
    %6149 = vmatpush2.bf16.msra.mxu0 %v5167
    %6150 = vmatprep.subr.bf16.mxu0 %v5161
    %6151 = vmatpush2.bf16.msra.mxu0 %v5160
    %6152 = vmatprep.subr.bf16.mxu0 %v5154
    %6153 = vmatpush2.bf16.msra.mxu0 %v5153
    %6154 = vmatprep.subr.bf16.mxu0 %v5147
    %6155 = vmatpush2.bf16.msra.mxu0 %v5146
    %6156 = vmatprep.subr.bf16.mxu0 %v5140
    %6157 = vmatpush2.bf16.msra.mxu0 %v5139
    %6158 = vmatprep.mubr.bf16.mxu0 %v2821
    %6159 = vmatmul.mubr.bf16.gmra.mxu0 %v2820
    %v6160 = vpop.f32.mrf.mxu0
    %v6161 = vadd.f32 %v6120, %v6160
    %v6162 = vpop.f32.mrf.mxu0
    %v6163 = vadd.f32 %v6122, %v6162
    %v6164 = vpop.f32.mrf.mxu0
    %v6165 = vpop.f32.mrf.mxu0
    %6166 = vdwg.mxu0
    %6167 = vmatprep.subr.bf16.mxu0 0
    %6168 = vmatpush1.bf16.msra.mxu0 %v4798
    %6169 = vmatprep.subr.bf16.mxu0 0
    %6170 = vmatpush1.bf16.msra.mxu0 %v4791
    %6171 = vmatprep.subr.bf16.mxu0 0
    %6172 = vmatpush1.bf16.msra.mxu0 %v4784
    %6173 = vmatprep.subr.bf16.mxu0 0
    %6174 = vmatpush1.bf16.msra.mxu0 %v4777
    %6175 = vmatprep.subr.bf16.mxu0 0
    %6176 = vmatpush1.bf16.msra.mxu0 %v4770
    %6177 = vmatprep.subr.bf16.mxu0 0
    %6178 = vmatpush1.bf16.msra.mxu0 %v4763
    %6179 = vmatprep.subr.bf16.mxu0 0
    %6180 = vmatpush1.bf16.msra.mxu0 %v4756
    %6181 = vmatprep.subr.bf16.mxu0 0
    %6182 = vmatpush1.bf16.msra.mxu0 %v4749
    %6183 = vmatprep.subr.bf16.mxu0 0
    %6184 = vmatpush2.bf16.msra.mxu0 %v4854
    %6185 = vmatprep.subr.bf16.mxu0 0
    %6186 = vmatpush2.bf16.msra.mxu0 %v4847
    %6187 = vmatprep.subr.bf16.mxu0 0
    %6188 = vmatpush2.bf16.msra.mxu0 %v4840
    %6189 = vmatprep.subr.bf16.mxu0 0
    %6190 = vmatpush2.bf16.msra.mxu0 %v4833
    %6191 = vmatprep.subr.bf16.mxu0 0
    %6192 = vmatpush2.bf16.msra.mxu0 %v4826
    %6193 = vmatprep.subr.bf16.mxu0 0
    %6194 = vmatpush2.bf16.msra.mxu0 %v4819
    %6195 = vmatprep.subr.bf16.mxu0 0
    %6196 = vmatpush2.bf16.msra.mxu0 %v4812
    %6197 = vmatprep.subr.bf16.mxu0 0
    %6198 = vmatpush2.bf16.msra.mxu0 %v4805
    %6199 = vmatprep.mubr.bf16.mxu0 %v2815
    %6200 = vmatmul.mubr.bf16.gmra.mxu0 %v2814
    %v6201 = vpop.f32.mrf.mxu0
    %v6202 = vadd.f32 %v5667, %v6201
    %v6203 = vpop.f32.mrf.mxu0
    %v6204 = vpop.f32.mrf.mxu0
    %v6205 = vpop.f32.mrf.mxu0
    %6206 = vdwg.mxu0
    %6207 = vmatprep.subr.bf16.mxu0 0
    %6208 = vmatpush1.bf16.msra.mxu0 %v4910
    %6209 = vmatprep.subr.bf16.mxu0 0
    %6210 = vmatpush1.bf16.msra.mxu0 %v4903
    %6211 = vmatprep.subr.bf16.mxu0 0
    %6212 = vmatpush1.bf16.msra.mxu0 %v4896
    %6213 = vmatprep.subr.bf16.mxu0 0
    %6214 = vmatpush1.bf16.msra.mxu0 %v4889
    %6215 = vmatprep.subr.bf16.mxu0 0
    %6216 = vmatpush1.bf16.msra.mxu0 %v4882
    %6217 = vmatprep.subr.bf16.mxu0 0
    %6218 = vmatpush1.bf16.msra.mxu0 %v4875
    %6219 = vmatprep.subr.bf16.mxu0 0
    %6220 = vmatpush1.bf16.msra.mxu0 %v4868
    %6221 = vmatprep.subr.bf16.mxu0 0
    %6222 = vmatpush1.bf16.msra.mxu0 %v4861
    %6223 = vmatprep.subr.bf16.mxu0 0
    %6224 = vmatpush2.bf16.msra.mxu0 %v4966
    %6225 = vmatprep.subr.bf16.mxu0 0
    %6226 = vmatpush2.bf16.msra.mxu0 %v4959
    %6227 = vmatprep.subr.bf16.mxu0 0
    %6228 = vmatpush2.bf16.msra.mxu0 %v4952
    %6229 = vmatprep.subr.bf16.mxu0 0
    %6230 = vmatpush2.bf16.msra.mxu0 %v4945
    %6231 = vmatprep.subr.bf16.mxu0 0
    %6232 = vmatpush2.bf16.msra.mxu0 %v4938
    %6233 = vmatprep.subr.bf16.mxu0 0
    %6234 = vmatpush2.bf16.msra.mxu0 %v4931
    %6235 = vmatprep.subr.bf16.mxu0 0
    %6236 = vmatpush2.bf16.msra.mxu0 %v4924
    %6237 = vmatprep.subr.bf16.mxu0 0
    %6238 = vmatpush2.bf16.msra.mxu0 %v4917
    %6239 = vmatprep.mubr.bf16.mxu0 %v2817
    %6240 = vmatmul.mubr.bf16.gmra.mxu0 %v2816
    %v6241 = vpop.f32.mrf.mxu0
    %v6242 = vadd.f32 %v6202, %v6241
    %v6243 = vpop.f32.mrf.mxu0
    %v6244 = vpop.f32.mrf.mxu0
    %v6245 = vpop.f32.mrf.mxu0
    %6246 = vdwg.mxu0
    %6247 = vmatprep.subr.bf16.mxu0 0
    %6248 = vmatpush1.bf16.msra.mxu0 %v5022
    %6249 = vmatprep.subr.bf16.mxu0 0
    %6250 = vmatpush1.bf16.msra.mxu0 %v5015
    %6251 = vmatprep.subr.bf16.mxu0 0
    %6252 = vmatpush1.bf16.msra.mxu0 %v5008
    %6253 = vmatprep.subr.bf16.mxu0 0
    %6254 = vmatpush1.bf16.msra.mxu0 %v5001
    %6255 = vmatprep.subr.bf16.mxu0 0
    %6256 = vmatpush1.bf16.msra.mxu0 %v4994
    %6257 = vmatprep.subr.bf16.mxu0 0
    %6258 = vmatpush1.bf16.msra.mxu0 %v4987
    %6259 = vmatprep.subr.bf16.mxu0 0
    %6260 = vmatpush1.bf16.msra.mxu0 %v4980
    %6261 = vmatprep.subr.bf16.mxu0 0
    %6262 = vmatpush1.bf16.msra.mxu0 %v4973
    %6263 = vmatprep.subr.bf16.mxu0 0
    %6264 = vmatpush2.bf16.msra.mxu0 %v5078
    %6265 = vmatprep.subr.bf16.mxu0 0
    %6266 = vmatpush2.bf16.msra.mxu0 %v5071
    %6267 = vmatprep.subr.bf16.mxu0 0
    %6268 = vmatpush2.bf16.msra.mxu0 %v5064
    %6269 = vmatprep.subr.bf16.mxu0 0
    %6270 = vmatpush2.bf16.msra.mxu0 %v5057
    %6271 = vmatprep.subr.bf16.mxu0 0
    %6272 = vmatpush2.bf16.msra.mxu0 %v5050
    %6273 = vmatprep.subr.bf16.mxu0 0
    %6274 = vmatpush2.bf16.msra.mxu0 %v5043
    %6275 = vmatprep.subr.bf16.mxu0 0
    %6276 = vmatpush2.bf16.msra.mxu0 %v5036
    %6277 = vmatprep.subr.bf16.mxu0 0
    %6278 = vmatpush2.bf16.msra.mxu0 %v5029
    %6279 = vmatprep.mubr.bf16.mxu0 %v2819
    %6280 = vmatmul.mubr.bf16.gmra.mxu0 %v2818
    %v6281 = vpop.f32.mrf.mxu0
    %v6282 = vadd.f32 %v6242, %v6281
    %v6283 = vpop.f32.mrf.mxu0
    %v6284 = vpop.f32.mrf.mxu0
    %v6285 = vpop.f32.mrf.mxu0
    %6286 = vdwg.mxu0
    %6287 = vmatprep.subr.bf16.mxu0 0
    %6288 = vmatpush1.bf16.msra.mxu0 %v5134
    %6289 = vmatprep.subr.bf16.mxu0 0
    %6290 = vmatpush1.bf16.msra.mxu0 %v5127
    %6291 = vmatprep.subr.bf16.mxu0 0
    %6292 = vmatpush1.bf16.msra.mxu0 %v5120
    %6293 = vmatprep.subr.bf16.mxu0 0
    %6294 = vmatpush1.bf16.msra.mxu0 %v5113
    %6295 = vmatprep.subr.bf16.mxu0 0
    %6296 = vmatpush1.bf16.msra.mxu0 %v5106
    %6297 = vmatprep.subr.bf16.mxu0 0
    %6298 = vmatpush1.bf16.msra.mxu0 %v5099
    %6299 = vmatprep.subr.bf16.mxu0 0
    %6300 = vmatpush1.bf16.msra.mxu0 %v5092
    %6301 = vmatprep.subr.bf16.mxu0 0
    %6302 = vmatpush1.bf16.msra.mxu0 %v5085
    %6303 = vmatprep.subr.bf16.mxu0 0
    %6304 = vmatpush2.bf16.msra.mxu0 %v5190
    %6305 = vmatprep.subr.bf16.mxu0 0
    %6306 = vmatpush2.bf16.msra.mxu0 %v5183
    %6307 = vmatprep.subr.bf16.mxu0 0
    %6308 = vmatpush2.bf16.msra.mxu0 %v5176
    %6309 = vmatprep.subr.bf16.mxu0 0
    %6310 = vmatpush2.bf16.msra.mxu0 %v5169
    %6311 = vmatprep.subr.bf16.mxu0 0
    %6312 = vmatpush2.bf16.msra.mxu0 %v5162
    %6313 = vmatprep.subr.bf16.mxu0 0
    %6314 = vmatpush2.bf16.msra.mxu0 %v5155
    %6315 = vmatprep.subr.bf16.mxu0 0
    %6316 = vmatpush2.bf16.msra.mxu0 %v5148
    %6317 = vmatprep.subr.bf16.mxu0 0
    %6318 = vmatpush2.bf16.msra.mxu0 %v5141
    %6319 = vmatprep.mubr.bf16.mxu0 %v2821
    %6320 = vmatmul.mubr.bf16.gmra.mxu0 %v2820
    %v6321 = vpop.f32.mrf.mxu0
    %v6322 = vadd.f32 %v6282, %v6321
    %v6323 = vpop.f32.mrf.mxu0
    %v6324 = vpop.f32.mrf.mxu0
    %v6325 = vpop.f32.mrf.mxu0
    %6326 = vdwg.mxu0
    %v6327 = vxor.u32 %v5833, 2147483648
    %v6328 = vxor.u32 %v5835, 2147483648
    %v6329 = vxor.u32 %v5997, 2147483648
    %v6330 = vxor.u32 %v5999, 2147483648
    %v6331 = vxor.u32 %v6161, 2147483648
    %v6332 = vxor.u32 %v6163, 2147483648
    %v6333 = vxor.u32 %v6322, 2147483648
    %v6334 = vmul.f32 %v6327, 1.442695
    %v6335 = vpow.pop %v6334
    %v6336 = vmul.f32 %v6328, 1.442695
    %v6337 = vpow.pop %v6336
    %v6338 = vmul.f32 %v6329, 1.442695
    %v6339 = vpow.pop %v6338
    %v6340 = vmul.f32 %v6330, 1.442695
    %v6341 = vpow.pop %v6340
    %v6342 = vmul.f32 %v6331, 1.442695
    %v6343 = vpow.pop %v6342
    %v6344 = vmul.f32 %v6332, 1.442695
    %v6345 = vpow.pop %v6344
    %v6346 = vmul.f32 %v6333, 1.442695
    %v6347 = vpow.pop %v6346
    %v6348 = vadd.f32 %v6335, 1.0
    %v6349 = vadd.f32 %v6337, 1.0
    %v6350 = vadd.f32 %v6339, 1.0
    %v6351 = vadd.f32 %v6341, 1.0
    %v6352 = vadd.f32 %v6343, 1.0
    %v6353 = vadd.f32 %v6345, 1.0
    %v6354 = vadd.f32 %v6347, 1.0
    %v6355 = vrcp.pop %v6348
    %v6356 = vmul.f32 1.0, %v6355
    %v6357 = vrcp.pop %v6349
    %v6358 = vmul.f32 1.0, %v6357
    %v6359 = vrcp.pop %v6350
    %v6360 = vmul.f32 1.0, %v6359
    %v6361 = vrcp.pop %v6351
    %v6362 = vmul.f32 1.0, %v6361
    %v6363 = vrcp.pop %v6352
    %v6364 = vmul.f32 1.0, %v6363
    %v6365 = vrcp.pop %v6353
    %v6366 = vmul.f32 1.0, %v6365
    %v6367 = vrcp.pop %v6354
    %v6368 = vmul.f32 1.0, %v6367
    %v6376 = vcombine.low %v6356, %v6358
    %v6377 = vcombine.low %v6360, %v6362
    %v6378 = vcombine.low %v6364, %v6366
    %v6380 = vunpack.c.l.s4 1966171168
    %v6381 = vunpack.c.0.s8 %v6380
    %v6382 = vlaneseq
    %v6383 = vshrl.u32 %v6382, 7
    %v6384 = vsub.s32 %v6381, %v6383
    %v6385 = vrot.slane %v6376, %v6384
    %v6387 = vunpack.c.l.s4 1966171168
    %v6388 = vunpack.c.0.s8 %v6387
    %v6389 = vlaneseq
    %v6390 = vshrl.u32 %v6389, 7
    %v6391 = vsub.s32 %v6388, %v6390
    %v6392 = vrot.slane %v6377, %v6391
    %v6394 = vunpack.c.l.s4 1966171168
    %v6395 = vunpack.c.0.s8 %v6394
    %v6396 = vlaneseq
    %v6397 = vshrl.u32 %v6396, 7
    %v6398 = vsub.s32 %v6395, %v6397
    %v6399 = vrot.slane %v6378, %v6398
    %v6401 = vunpack.c.l.s4 1966171168
    %v6402 = vunpack.c.0.s8 %v6401
    %v6403 = vlaneseq
    %v6404 = vshrl.u32 %v6403, 7
    %v6405 = vsub.s32 %v6402, %v6404
    %v6406 = vrot.slane %v6368, %v6405
    %v6407 = vcombine.low %v6385, %v6392
    %v6408 = vcombine.low %v6399, %v6406
    %v6410 = vunpack.c.l.s4 1966171168
    %v6411 = vunpack.c.0.s8 %v6410
    %v6412 = vlaneseq
    %v6413 = vshrl.u32 %v6412, 7
    %v6414 = vsub.s32 %v6411, %v6413
    %v6415 = vrot.slane %v6407, %v6414
    %v6417 = vunpack.c.l.s4 1966171168
    %v6418 = vunpack.c.0.s8 %v6417
    %v6419 = vlaneseq
    %v6420 = vshrl.u32 %v6419, 7
    %v6421 = vsub.s32 %v6418, %v6420
    %v6422 = vrot.slane %v6408, %v6421
    %v6423 = vcombine.low %v6415, %v6422
    %v6425 = vlaneseq
    %vm6426 = vcmp.ge.s32.totalorder %v6425, 0
    %vm6427 = vcmp.lt.s32.totalorder %v6425, 896
    %vm6428 = vmand %vm6426, %vm6427
    %6429 = vst.msk [vmem:[%s11] sm:$0x7f] %vm6428, %v6423
    // Predicated region
    $region90: #{generator_zero_forward.1} parent=1 // pred_check
      _
    $region91: #{generator_zero_forward.1} parent=1 // pred_check_branch
      %6431 = sbr.rel (0) target = $region93
    $region92: #{generator_zero_forward.1} parent=1 // pred_region
      _
    $region93: #{generator_zero_forward.1} parent=1 // pred_fallthru
      _
    // Predicated region
    $region94: #{generator_zero_forward.1} parent=1 // pred_check
      _
    $region95: #{generator_zero_forward.1} parent=1 // pred_check_branch
      %6433 = sbr.rel (0) target = $region97
    $region96: #{generator_zero_forward.1} parent=1 // pred_region
      _
    $region97: #{generator_zero_forward.1} parent=1 // pred_fallthru
      _
    %6434 = vsyncpa [#allocation3], 1
    %6435 = vsyncpa [#allocation5], 1
    %6436 = vsyncpa [#allocation8], 1
    %6437 = vsyncpa [#allocation11], 1
    %6438 = vsyncpa [#allocation14], 1
    %6439 = vsyncpa [#allocation17], 1

</llo_original>
